<compile_context>
chip_gen: v7x
topology: tpu7x:2x2x1
jax: 0.10.0
libtpu: 0.0.40
codegen_flags: <defaults>
</compile_context>

<pallas_src>
import jax
import jax.numpy as jnp
from jax.experimental import pallas as pl
from jax.experimental.pallas import tpu as pltpu

CHANNELS = 1
IMAGE_SIZE = 28
IN_DIM = CHANNELS * IMAGE_SIZE * IMAGE_SIZE   # 784
IN_DIM_PAD = 896                              # 7 * 128 lanes (zero-padded K)
HIDDEN = (1024, 512, 256)
OUT_DIM = 1
OUT_DIM_PAD = 128                             # lane-dense output slab
LEAK = 0.2


def _discriminator_kernel(x_ref,
                          w1, b1, w2, b2, w3, b3, w4, b4,
                          out_ref):
    """4 matmuls + LeakyReLU(0.2); bf16 in/out, f32 MXU accumulation, VMEM-resident."""

    def linear(x, w_ref, b_ref):
        # bf16 x bf16 inputs -> f32 accumulation on the MXU.
        return jnp.dot(x.astype(jnp.bfloat16), w_ref[...],
                       preferred_element_type=jnp.float32) + b_ref[...]

    def leaky_relu(x):
        # max(x, 0.2*x) == LeakyReLU(0.2); single VPU max, no select needed.
        return jnp.maximum(x, LEAK * x)

    # TODO(synk): training-mode Dropout(0.3) (stochastic mask + 1/(1-p) scale)
    # would use pltpu.prng_seed + pltpu.stateful_bernoulli; eval-mode identity here.
    x = x_ref[...]                          # (bb, 896) bf16, cols >= 784 are zero
    x = leaky_relu(linear(x, w1, b1))       # (bb, 1024) f32
    x = leaky_relu(linear(x, w2, b2))       # (bb, 512)  f32
    x = leaky_relu(linear(x, w3, b3))       # (bb, 256)  f32
    x = linear(x, w4, b4)                   # (bb, 128)  f32 logits, col 0 meaningful
    # bf16 pre-sigmoid logits: halves output writeback; sigmoid applied in wrapper.
    out_ref[...] = x.astype(out_ref.dtype)


def init_discriminator_params(key):
    """PyTorch-default Linear init (U(-1/sqrt(fan_in), +)); weights stored (in, out), f32 master."""
    dims = [IN_DIM, *HIDDEN, OUT_DIM]
    params = []
    keys = jax.random.split(key, 2 * (len(dims) - 1))
    for i in range(len(dims) - 1):
        fan_in, fan_out = dims[i], dims[i + 1]
        bound = 1.0 / float(fan_in) ** 0.5
        w = jax.random.uniform(keys[2 * i], (fan_in, fan_out),
                               minval=-bound, maxval=bound, dtype=jnp.float32)
        b = jax.random.uniform(keys[2 * i + 1], (1, fan_out),
                               minval=-bound, maxval=bound, dtype=jnp.float32)
        params.append({"w": w, "b": b})
    return params


def _round_up(x, m):
    return -(-x // m) * m


def _pad_cols(a, cols):
    return jnp.pad(a, ((0, 0), (0, cols - a.shape[1])))


def _pad_rows(a, rows):
    return jnp.pad(a, ((0, rows - a.shape[0]), (0, 0)))


def _pick_batch_tile(B, block_b):
    """Batch tile: multiple of 16 (bf16 sublane packing), capped at block_b,
    and sized so the grid has >= 2 steps when the batch allows it (v7x 2-TC split)."""
    b16 = _round_up(B, 16)
    bb = _round_up(min(block_b, b16), 16)
    if b16 > 16 and _round_up(B, bb) // bb < 2:
        bb = max(16, _round_up(b16 // 2, 16))
    B_pad = _round_up(B, bb)
    return bb, B_pad


def discriminator_forward(img, params, *, block_b=512):
    B = img.shape[0]
    flat = img.reshape(B, -1).astype(jnp.float32)             # (B, 784), matches img.view(B, -1)

    bb, B_pad = _pick_batch_tile(B, block_b)

    # Fused pad + cast: x streams into the kernel as bf16 (half the input DMA).
    x = jnp.pad(flat.astype(jnp.bfloat16),
                ((0, B_pad - B), (0, IN_DIM_PAD - IN_DIM)))

    # Kernel-side parameter layout: bf16 weights, zero-padded to lane-aligned shapes.
    w1 = _pad_rows(params[0]["w"], IN_DIM_PAD).astype(jnp.bfloat16)   # (896, 1024)
    w2 = params[1]["w"].astype(jnp.bfloat16)                          # (1024, 512)
    w3 = params[2]["w"].astype(jnp.bfloat16)                          # (512, 256)
    w4 = _pad_cols(params[3]["w"], OUT_DIM_PAD).astype(jnp.bfloat16)  # (256, 128)
    b1, b2, b3 = params[0]["b"], params[1]["b"], params[2]["b"]       # f32 (1, N)
    b4 = _pad_cols(params[3]["b"], OUT_DIM_PAD)                       # (1, 128) f32

    flat_args = (w1, b1, w2, b2, w3, b3, w4, b4)

    def resident(shape):
        # Weights/biases: full block, constant block index -> stays VMEM-resident across grid.
        return pl.BlockSpec(shape, lambda i: (0, 0))

    logits_padded = pl.pallas_call(
        _discriminator_kernel,
        out_shape=jax.ShapeDtypeStruct((B_pad, OUT_DIM_PAD), jnp.bfloat16),
        grid_spec=pltpu.PrefetchScalarGridSpec(
            num_scalar_prefetch=0,
            grid=(B_pad // bb,),
            in_specs=[pl.BlockSpec((bb, IN_DIM_PAD), lambda i: (i, 0))]
                     + [resident(a.shape) for a in flat_args],
            out_specs=pl.BlockSpec((bb, OUT_DIM_PAD), lambda i: (i, 0)),
        ),
        compiler_params=pltpu.CompilerParams(
            dimension_semantics=("parallel",),
            vmem_limit_bytes=48 << 20,     # ample; actual footprint ~10-16 MiB at bb=512
        ),
    )(x, *flat_args)

    # Slice to (B, 1) and apply sigmoid in f32 on the real column only.
    logits = logits_padded[:B, :OUT_DIM].astype(jnp.float32)
    return jax.nn.sigmoid(logits)           # (B, 1)


def _reference_forward(img, params):
    """Pure-JAX reference with the same bf16-weight / f32-accumulate numerics."""
    x = img.reshape(img.shape[0], -1).astype(jnp.float32)
    for i, layer in enumerate(params):
        x = jnp.dot(x.astype(jnp.bfloat16), layer["w"].astype(jnp.bfloat16),
                    preferred_element_type=jnp.float32) + layer["b"]
        if i < 3:
            x = jnp.maximum(x, LEAK * x)
    return jax.nn.sigmoid(x)                # (B, 1)


if __name__ == "__main__":
    key = jax.random.PRNGKey(0)
    k_param, k_img = jax.random.split(key)

    params = init_discriminator_params(k_param)

    # Small single-tile batch.
    batch = 8
    img = jax.random.normal(k_img, (batch, CHANNELS, IMAGE_SIZE, IMAGE_SIZE),
                            dtype=jnp.float32)
    out = jax.block_until_ready(discriminator_forward(img, params))
    assert out.shape == (batch, 1), out.shape
    ref = jax.block_until_ready(_reference_forward(img, params))
    assert jnp.allclose(out, ref, atol=1e-3, rtol=1e-3), \
        float(jnp.max(jnp.abs(out - ref)))

    # Batch that exercises padding + a multi-step (2-TC-splittable) grid.
    batch2 = 40
    img2 = jax.random.normal(jax.random.PRNGKey(1),
                             (batch2, CHANNELS, IMAGE_SIZE, IMAGE_SIZE),
                             dtype=jnp.float32)
    out2 = jax.block_until_ready(discriminator_forward(img2, params))
    assert out2.shape == (batch2, 1), out2.shape
    ref2 = jax.block_until_ready(_reference_forward(img2, params))
    assert jnp.allclose(out2, ref2, atol=1e-3, rtol=1e-3), \
        float(jnp.max(jnp.abs(out2 - ref2)))

    print("KERNEL_OK")
</pallas_src>

<mosaic_0001>
module attributes {stable_mosaic.version = 11 : i64} {
  func.func @_discriminator_kernel(%arg0: i32, %arg1: memref<16x896xbf16, #tpu.memory_space<vmem>>, %arg2: memref<896x1024xbf16, #tpu.memory_space<vmem>>, %arg3: memref<1x1024xf32, #tpu.memory_space<vmem>>, %arg4: memref<1024x512xbf16, #tpu.memory_space<vmem>>, %arg5: memref<1x512xf32, #tpu.memory_space<vmem>>, %arg6: memref<512x256xbf16, #tpu.memory_space<vmem>>, %arg7: memref<1x256xf32, #tpu.memory_space<vmem>>, %arg8: memref<256x128xbf16, #tpu.memory_space<vmem>>, %arg9: memref<1x128xf32, #tpu.memory_space<vmem>>, %arg10: memref<16x128xbf16, #tpu.memory_space<vmem>>) attributes {dimension_semantics = [#tpu.dimension_semantics<parallel>], iteration_bounds = array<i64: 1>, scalar_prefetch = 0 : i64, scratch_operands = 0 : i64, tpu.core_type = #tpu.core_type<tc>, window_params = [{transform_indices = @transform_0, window_bounds = array<i64: 16, 896>}, {pipeline_mode = #tpu.pipeline_mode<synchronous>, transform_indices = @transform_1, window_bounds = array<i64: 896, 1024>}, {pipeline_mode = #tpu.pipeline_mode<synchronous>, transform_indices = @transform_2, window_bounds = array<i64: 1, 1024>}, {pipeline_mode = #tpu.pipeline_mode<synchronous>, transform_indices = @transform_3, window_bounds = array<i64: 1024, 512>}, {pipeline_mode = #tpu.pipeline_mode<synchronous>, transform_indices = @transform_4, window_bounds = array<i64: 1, 512>}, {pipeline_mode = #tpu.pipeline_mode<synchronous>, transform_indices = @transform_5, window_bounds = array<i64: 512, 256>}, {pipeline_mode = #tpu.pipeline_mode<synchronous>, transform_indices = @transform_6, window_bounds = array<i64: 1, 256>}, {pipeline_mode = #tpu.pipeline_mode<synchronous>, transform_indices = @transform_7, window_bounds = array<i64: 256, 128>}, {pipeline_mode = #tpu.pipeline_mode<synchronous>, transform_indices = @transform_8, window_bounds = array<i64: 1, 128>}, {transform_indices = @transform_9, window_bounds = array<i64: 16, 128>}]} {
    %c0 = arith.constant 0 : index
    %c0_0 = arith.constant 0 : index
    %0 = vector.load %arg1[%c0, %c0_0] : memref<16x896xbf16, #tpu.memory_space<vmem>>, vector<16x896xbf16>
    %c0_1 = arith.constant 0 : index
    %c0_2 = arith.constant 0 : index
    %1 = vector.load %arg2[%c0_1, %c0_2] : memref<896x1024xbf16, #tpu.memory_space<vmem>>, vector<896x1024xbf16>
    %cst = arith.constant dense<0.000000e+00> : vector<16x1024xf32>
    %2 = tpu.matmul %0, %1, %cst {dimension_numbers = #tpu.dot_dimension_numbers<[1], [0], [0], [1], [0, 0, 1, 1], [], []>} : vector<16x896xbf16>, vector<896x1024xbf16>, vector<16x1024xf32> -> vector<16x1024xf32>
    %c0_3 = arith.constant 0 : index
    %c0_4 = arith.constant 0 : index
    %3 = vector.load %arg3[%c0_3, %c0_4] : memref<1x1024xf32, #tpu.memory_space<vmem>>, vector<1x1024xf32>
    %4 = vector.broadcast %3 : vector<1x1024xf32> to vector<16x1024xf32>
    %5 = arith.addf %2, %4 : vector<16x1024xf32>
    %cst_5 = arith.constant 2.000000e-01 : f32
    %6 = vector.broadcast %cst_5 : f32 to vector<16x1024xf32>
    %7 = arith.mulf %6, %5 : vector<16x1024xf32>
    %8 = arith.maximumf %5, %7 : vector<16x1024xf32>
    %9 = arith.truncf %8 : vector<16x1024xf32> to vector<16x1024xbf16>
    %c0_6 = arith.constant 0 : index
    %c0_7 = arith.constant 0 : index
    %10 = vector.load %arg4[%c0_6, %c0_7] : memref<1024x512xbf16, #tpu.memory_space<vmem>>, vector<1024x512xbf16>
    %cst_8 = arith.constant dense<0.000000e+00> : vector<16x512xf32>
    %11 = tpu.matmul %9, %10, %cst_8 {dimension_numbers = #tpu.dot_dimension_numbers<[1], [0], [0], [1], [0, 0, 1, 1], [], []>} : vector<16x1024xbf16>, vector<1024x512xbf16>, vector<16x512xf32> -> vector<16x512xf32>
    %c0_9 = arith.constant 0 : index
    %c0_10 = arith.constant 0 : index
    %12 = vector.load %arg5[%c0_9, %c0_10] : memref<1x512xf32, #tpu.memory_space<vmem>>, vector<1x512xf32>
    %13 = vector.broadcast %12 : vector<1x512xf32> to vector<16x512xf32>
    %14 = arith.addf %11, %13 : vector<16x512xf32>
    %cst_11 = arith.constant 2.000000e-01 : f32
    %15 = vector.broadcast %cst_11 : f32 to vector<16x512xf32>
    %16 = arith.mulf %15, %14 : vector<16x512xf32>
    %17 = arith.maximumf %14, %16 : vector<16x512xf32>
    %18 = arith.truncf %17 : vector<16x512xf32> to vector<16x512xbf16>
    %c0_12 = arith.constant 0 : index
    %c0_13 = arith.constant 0 : index
    %19 = vector.load %arg6[%c0_12, %c0_13] : memref<512x256xbf16, #tpu.memory_space<vmem>>, vector<512x256xbf16>
    %cst_14 = arith.constant dense<0.000000e+00> : vector<16x256xf32>
    %20 = tpu.matmul %18, %19, %cst_14 {dimension_numbers = #tpu.dot_dimension_numbers<[1], [0], [0], [1], [0, 0, 1, 1], [], []>} : vector<16x512xbf16>, vector<512x256xbf16>, vector<16x256xf32> -> vector<16x256xf32>
    %c0_15 = arith.constant 0 : index
    %c0_16 = arith.constant 0 : index
    %21 = vector.load %arg7[%c0_15, %c0_16] : memref<1x256xf32, #tpu.memory_space<vmem>>, vector<1x256xf32>
    %22 = vector.broadcast %21 : vector<1x256xf32> to vector<16x256xf32>
    %23 = arith.addf %20, %22 : vector<16x256xf32>
    %cst_17 = arith.constant 2.000000e-01 : f32
    %24 = vector.broadcast %cst_17 : f32 to vector<16x256xf32>
    %25 = arith.mulf %24, %23 : vector<16x256xf32>
    %26 = arith.maximumf %23, %25 : vector<16x256xf32>
    %27 = arith.truncf %26 : vector<16x256xf32> to vector<16x256xbf16>
    %c0_18 = arith.constant 0 : index
    %c0_19 = arith.constant 0 : index
    %28 = vector.load %arg8[%c0_18, %c0_19] : memref<256x128xbf16, #tpu.memory_space<vmem>>, vector<256x128xbf16>
    %cst_20 = arith.constant dense<0.000000e+00> : vector<16x128xf32>
    %29 = tpu.matmul %27, %28, %cst_20 {dimension_numbers = #tpu.dot_dimension_numbers<[1], [0], [0], [1], [0, 0, 1, 1], [], []>} : vector<16x256xbf16>, vector<256x128xbf16>, vector<16x128xf32> -> vector<16x128xf32>
    %c0_21 = arith.constant 0 : index
    %c0_22 = arith.constant 0 : index
    %30 = vector.load %arg9[%c0_21, %c0_22] : memref<1x128xf32, #tpu.memory_space<vmem>>, vector<1x128xf32>
    %31 = vector.broadcast %30 : vector<1x128xf32> to vector<16x128xf32>
    %32 = arith.addf %29, %31 : vector<16x128xf32>
    %33 = arith.truncf %32 : vector<16x128xf32> to vector<16x128xbf16>
    %c0_23 = arith.constant 0 : index
    %c0_24 = arith.constant 0 : index
    %34 = vector.load %arg10[%c0_23, %c0_24] : memref<16x128xbf16, #tpu.memory_space<vmem>>, vector<16x128xbf16>
    tpu.vector_store %arg10[%c0_23, %c0_24], %33 {strides = array<i32>} : memref<16x128xbf16, #tpu.memory_space<vmem>>, vector<16x128xbf16>,
    return
  }
  func.func @transform_0(%arg0: i32) -> (i32, i32) {
    %c0_i32 = arith.constant 0 : i32
    %c0_i32_0 = arith.constant 0 : i32
    return %arg0, %c0_i32 : i32, i32
  }
  func.func @transform_1(%arg0: i32) -> (i32, i32) {
    %c0_i32 = arith.constant 0 : i32
    %c0_i32_0 = arith.constant 0 : i32
    %c0_i32_1 = arith.constant 0 : i32
    return %c0_i32, %c0_i32_0 : i32, i32
  }
  func.func @transform_2(%arg0: i32) -> (i32, i32) {
    %c0_i32 = arith.constant 0 : i32
    %c0_i32_0 = arith.constant 0 : i32
    %c0_i32_1 = arith.constant 0 : i32
    return %c0_i32, %c0_i32_0 : i32, i32
  }
  func.func @transform_3(%arg0: i32) -> (i32, i32) {
    %c0_i32 = arith.constant 0 : i32
    %c0_i32_0 = arith.constant 0 : i32
    %c0_i32_1 = arith.constant 0 : i32
    return %c0_i32, %c0_i32_0 : i32, i32
  }
  func.func @transform_4(%arg0: i32) -> (i32, i32) {
    %c0_i32 = arith.constant 0 : i32
    %c0_i32_0 = arith.constant 0 : i32
    %c0_i32_1 = arith.constant 0 : i32
    return %c0_i32, %c0_i32_0 : i32, i32
  }
  func.func @transform_5(%arg0: i32) -> (i32, i32) {
    %c0_i32 = arith.constant 0 : i32
    %c0_i32_0 = arith.constant 0 : i32
    %c0_i32_1 = arith.constant 0 : i32
    return %c0_i32, %c0_i32_0 : i32, i32
  }
  func.func @transform_6(%arg0: i32) -> (i32, i32) {
    %c0_i32 = arith.constant 0 : i32
    %c0_i32_0 = arith.constant 0 : i32
    %c0_i32_1 = arith.constant 0 : i32
    return %c0_i32, %c0_i32_0 : i32, i32
  }
  func.func @transform_7(%arg0: i32) -> (i32, i32) {
    %c0_i32 = arith.constant 0 : i32
    %c0_i32_0 = arith.constant 0 : i32
    %c0_i32_1 = arith.constant 0 : i32
    return %c0_i32, %c0_i32_0 : i32, i32
  }
  func.func @transform_8(%arg0: i32) -> (i32, i32) {
    %c0_i32 = arith.constant 0 : i32
    %c0_i32_0 = arith.constant 0 : i32
    %c0_i32_1 = arith.constant 0 : i32
    return %c0_i32, %c0_i32_0 : i32, i32
  }
  func.func @transform_9(%arg0: i32) -> (i32, i32) {
    %c0_i32 = arith.constant 0 : i32
    %c0_i32_0 = arith.constant 0 : i32
    return %arg0, %c0_i32 : i32, i32
  }
}

</mosaic_0001>

<llo_original>
// kernel: tpu_custom_call.1
$region0: #{tpu_custom_call.1}
  #allocation0 [shape = 'u32[]', space=smem, size = 0x4, offset = 0x4, fixed_abs, tag = 'smem constant byte address 0x4 - core index']
  #allocation1 [shape = 'u32[144,128]{1,0:T(1,128)}', space=vmem, size = 0x12000, scoped, tag = 'internal scratch']
  %s0 = inlined_call_operand.hbm [shape: bf16[16,896], index: 0, kind: input, shape index: {}]
  %s1 = inlined_call_operand.hbm [shape: bf16[896,1024], index: 1, kind: input, shape index: {}]
  %s2 = inlined_call_operand.hbm [shape: f32[1,1024], index: 2, kind: input, shape index: {}]
  %s3 = inlined_call_operand.hbm [shape: bf16[1024,512], index: 3, kind: input, shape index: {}]
  %s4 = inlined_call_operand.hbm [shape: f32[1,512], index: 4, kind: input, shape index: {}]
  %s5 = inlined_call_operand.hbm [shape: bf16[512,256], index: 5, kind: input, shape index: {}]
  %s6 = inlined_call_operand.hbm [shape: f32[1,256], index: 6, kind: input, shape index: {}]
  %s7 = inlined_call_operand.hbm [shape: bf16[256,128], index: 7, kind: input, shape index: {}]
  %s8 = inlined_call_operand.hbm [shape: f32[1,128], index: 8, kind: input, shape index: {}]
  %s9 = inlined_call_operand.hbm [shape: bf16[16,128], index: 9, kind: output, shape index: {}]
  %s10 = sld [smem:[#allocation0]]
  $region82: #{tpu_custom_call.1} parent=0
    _
  %s12 = ssub.s32 1, %s10
  %s13 = scalar_select 0, %s12, %s10
  $region1: #{tpu_custom_call.1} parent=0
    #allocation2 [shape = 'u8[28672]{0}', space=vmem, size = 0x7000, scoped, tag = 'input window, operand 0, single buffered']
    #allocation3 [shape = 's32[1]{0}', space=sflag, size = 0x4, scoped, tag = 'scoped memory for tpu_custom_call.1']
    #allocation4 [shape = 's32[1]{0}', space=sflag, size = 0x4, scoped, tag = 'scoped memory for tpu_custom_call.1']
    #allocation5 [shape = 'u8[1835008]{0}', space=vmem, size = 0x1c0000, scoped, tag = 'input window, operand 1, single buffered']
    #allocation6 [shape = 's32[1]{0}', space=sflag, size = 0x4, scoped, tag = 'scoped memory for tpu_custom_call.1']
    #allocation7 [shape = 'u8[4096]{0}', space=vmem, size = 0x1000, scoped, tag = 'input window, operand 2, single buffered']
    #allocation8 [shape = 'u8[1048576]{0}', space=vmem, size = 0x100000, scoped, tag = 'input window, operand 3, single buffered']
    #allocation9 [shape = 's32[1]{0}', space=sflag, size = 0x4, scoped, tag = 'scoped memory for tpu_custom_call.1']
    #allocation10 [shape = 'u8[2048]{0}', space=vmem, size = 0x800, scoped, tag = 'input window, operand 4, single buffered']
    #allocation11 [shape = 'u8[262144]{0}', space=vmem, size = 0x40000, scoped, tag = 'input window, operand 5, single buffered']
    #allocation12 [shape = 's32[1]{0}', space=sflag, size = 0x4, scoped, tag = 'scoped memory for tpu_custom_call.1']
    #allocation13 [shape = 'u8[1024]{0}', space=vmem, size = 0x400, scoped, tag = 'input window, operand 6, single buffered']
    #allocation14 [shape = 'u8[65536]{0}', space=vmem, size = 0x10000, scoped, tag = 'input window, operand 7, single buffered']
    #allocation15 [shape = 's32[1]{0}', space=sflag, size = 0x4, scoped, tag = 'scoped memory for tpu_custom_call.1']
    #allocation16 [shape = 'u8[512]{0}', space=vmem, size = 0x400, scoped, tag = 'input window, operand 8, single buffered']
    #allocation17 [shape = 'u8[4096]{0}', space=vmem, size = 0x1000, scoped, tag = 'output window, operand 0, single buffered']
    %14 = vsyncpa [#allocation3], 0
    %15 = vsyncpa [#allocation6], 0
    %16 = vsyncpa [#allocation9], 0
    %17 = vsyncpa [#allocation12], 0
    %18 = vsyncpa [#allocation15], 0
    %19 = vsyncpa [#allocation4], 0
    // Predicated region
    $region2: #{tpu_custom_call.1} parent=1 // pred_check
      _
    $region3: #{tpu_custom_call.1} parent=1 // pred_check_branch
      %21 = sbr.rel (0) target = $region5
    $region4: #{tpu_custom_call.1} parent=1 // pred_region
      %s23 = ssub.s32 896, 896
      %24 = vsyncadd [#allocation3], %s23
      %s25 = sshll.u32 [#allocation2], 4
      %s26 = int_to_ptr.vmem [resolvable:$true] %s25
      %31 = dma.hbm_to_vmem [thread:$0]  %s0, 896, %s26, [#allocation3], 448, 448, 28
    $region5: #{tpu_custom_call.1} parent=1 // pred_fallthru
      _
    // Predicated region
    $region6: #{tpu_custom_call.1} parent=1 // pred_check
      _
    $region7: #{tpu_custom_call.1} parent=1 // pred_check_branch
      %33 = sbr.rel (0) target = $region9
    $region8: #{tpu_custom_call.1} parent=1 // pred_region
      %s35 = ssub.s32 57344, 57344
      %36 = vsyncadd [#allocation6], %s35
      %s37 = sshll.u32 [#allocation5], 4
      %s38 = int_to_ptr.vmem [resolvable:$true] %s37
      %43 = dma.hbm_to_vmem [thread:$0]  %s1, 57344, %s38, [#allocation6], 512, 512, 32
    $region9: #{tpu_custom_call.1} parent=1 // pred_fallthru
      _
    // Predicated region
    $region10: #{tpu_custom_call.1} parent=1 // pred_check
      _
    $region11: #{tpu_custom_call.1} parent=1 // pred_check_branch
      %45 = sbr.rel (0) target = $region13
    $region12: #{tpu_custom_call.1} parent=1 // pred_region
      %s47 = ssub.s32 128, 128
      %48 = vsyncadd [#allocation6], %s47
      %s50 = sshll.u32 [#allocation7], 4
      %s51 = int_to_ptr.vmem [resolvable:$true] %s50
      %53 = dma.hbm_to_vmem [thread:$0]  %s2, 128, %s51, [#allocation6]
    $region13: #{tpu_custom_call.1} parent=1 // pred_fallthru
      _
    // Predicated region
    $region14: #{tpu_custom_call.1} parent=1 // pred_check
      _
    $region15: #{tpu_custom_call.1} parent=1 // pred_check_branch
      %55 = sbr.rel (0) target = $region17
    $region16: #{tpu_custom_call.1} parent=1 // pred_region
      %s57 = ssub.s32 32768, 32768
      %58 = vsyncadd [#allocation9], %s57
      %s59 = sshll.u32 [#allocation8], 4
      %s60 = int_to_ptr.vmem [resolvable:$true] %s59
      %65 = dma.hbm_to_vmem [thread:$0]  %s3, 32768, %s60, [#allocation9], 256, 256, 16
    $region17: #{tpu_custom_call.1} parent=1 // pred_fallthru
      _
    // Predicated region
    $region18: #{tpu_custom_call.1} parent=1 // pred_check
      _
    $region19: #{tpu_custom_call.1} parent=1 // pred_check_branch
      %67 = sbr.rel (0) target = $region21
    $region20: #{tpu_custom_call.1} parent=1 // pred_region
      %s69 = ssub.s32 64, 64
      %70 = vsyncadd [#allocation9], %s69
      %s72 = sshll.u32 [#allocation10], 4
      %s73 = int_to_ptr.vmem [resolvable:$true] %s72
      %75 = dma.hbm_to_vmem [thread:$0]  %s4, 64, %s73, [#allocation9]
    $region21: #{tpu_custom_call.1} parent=1 // pred_fallthru
      _
    // Predicated region
    $region22: #{tpu_custom_call.1} parent=1 // pred_check
      _
    $region23: #{tpu_custom_call.1} parent=1 // pred_check_branch
      %77 = sbr.rel (0) target = $region25
    $region24: #{tpu_custom_call.1} parent=1 // pred_region
      %s79 = ssub.s32 8192, 8192
      %80 = vsyncadd [#allocation12], %s79
      %s81 = sshll.u32 [#allocation11], 4
      %s82 = int_to_ptr.vmem [resolvable:$true] %s81
      %87 = dma.hbm_to_vmem [thread:$0]  %s5, 8192, %s82, [#allocation12], 128, 128, 8
    $region25: #{tpu_custom_call.1} parent=1 // pred_fallthru
      _
    // Predicated region
    $region26: #{tpu_custom_call.1} parent=1 // pred_check
      _
    $region27: #{tpu_custom_call.1} parent=1 // pred_check_branch
      %89 = sbr.rel (0) target = $region29
    $region28: #{tpu_custom_call.1} parent=1 // pred_region
      %s91 = ssub.s32 32, 32
      %92 = vsyncadd [#allocation12], %s91
      %s94 = sshll.u32 [#allocation13], 4
      %s95 = int_to_ptr.vmem [resolvable:$true] %s94
      %97 = dma.hbm_to_vmem [thread:$0]  %s6, 32, %s95, [#allocation12]
    $region29: #{tpu_custom_call.1} parent=1 // pred_fallthru
      _
    // Predicated region
    $region30: #{tpu_custom_call.1} parent=1 // pred_check
      _
    $region31: #{tpu_custom_call.1} parent=1 // pred_check_branch
      %99 = sbr.rel (0) target = $region33
    $region32: #{tpu_custom_call.1} parent=1 // pred_region
      %s101 = ssub.s32 2048, 2048
      %102 = vsyncadd [#allocation15], %s101
      %s103 = sshll.u32 [#allocation14], 4
      %s104 = int_to_ptr.vmem [resolvable:$true] %s103
      %109 = dma.hbm_to_vmem [thread:$0]  %s7, 2048, %s104, [#allocation15], 64, 64, 4
    $region33: #{tpu_custom_call.1} parent=1 // pred_fallthru
      _
    // Predicated region
    $region34: #{tpu_custom_call.1} parent=1 // pred_check
      _
    $region35: #{tpu_custom_call.1} parent=1 // pred_check_branch
      %111 = sbr.rel (0) target = $region37
    $region36: #{tpu_custom_call.1} parent=1 // pred_region
      %s113 = ssub.s32 16, 16
      %114 = vsyncadd [#allocation15], %s113
      %s116 = sshll.u32 [#allocation16], 4
      %s117 = int_to_ptr.vmem [resolvable:$true] %s116
      %119 = dma.hbm_to_vmem [thread:$0]  %s8, 16, %s117, [#allocation15]
    $region37: #{tpu_custom_call.1} parent=1 // pred_fallthru
      _
    // Predicated region
    $region38: #{tpu_custom_call.1} parent=1 // pred_check
      _
    $region39: #{tpu_custom_call.1} parent=1 // pred_check_branch
      %121 = sbr.rel (0) target = $region41
    $region40: #{tpu_custom_call.1} parent=1 // pred_region
      %122 = dma.done [#allocation3], 896
    $region41: #{tpu_custom_call.1} parent=1 // pred_fallthru
      _
    // Predicated region
    $region42: #{tpu_custom_call.1} parent=1 // pred_check
      _
    $region43: #{tpu_custom_call.1} parent=1 // pred_check_branch
      %124 = sbr.rel (0) target = $region45
    $region44: #{tpu_custom_call.1} parent=1 // pred_region
      %125 = dma.done [#allocation6], 57344
    $region45: #{tpu_custom_call.1} parent=1 // pred_fallthru
      _
    // Predicated region
    $region46: #{tpu_custom_call.1} parent=1 // pred_check
      _
    $region47: #{tpu_custom_call.1} parent=1 // pred_check_branch
      %127 = sbr.rel (0) target = $region49
    $region48: #{tpu_custom_call.1} parent=1 // pred_region
      %128 = dma.done [#allocation6], 128
    $region49: #{tpu_custom_call.1} parent=1 // pred_fallthru
      _
    // Predicated region
    $region50: #{tpu_custom_call.1} parent=1 // pred_check
      _
    $region51: #{tpu_custom_call.1} parent=1 // pred_check_branch
      %130 = sbr.rel (0) target = $region53
    $region52: #{tpu_custom_call.1} parent=1 // pred_region
      %131 = dma.done [#allocation9], 32768
    $region53: #{tpu_custom_call.1} parent=1 // pred_fallthru
      _
    // Predicated region
    $region54: #{tpu_custom_call.1} parent=1 // pred_check
      _
    $region55: #{tpu_custom_call.1} parent=1 // pred_check_branch
      %133 = sbr.rel (0) target = $region57
    $region56: #{tpu_custom_call.1} parent=1 // pred_region
      %134 = dma.done [#allocation9], 64
    $region57: #{tpu_custom_call.1} parent=1 // pred_fallthru
      _
    // Predicated region
    $region58: #{tpu_custom_call.1} parent=1 // pred_check
      _
    $region59: #{tpu_custom_call.1} parent=1 // pred_check_branch
      %136 = sbr.rel (0) target = $region61
    $region60: #{tpu_custom_call.1} parent=1 // pred_region
      %137 = dma.done [#allocation12], 8192
    $region61: #{tpu_custom_call.1} parent=1 // pred_fallthru
      _
    // Predicated region
    $region62: #{tpu_custom_call.1} parent=1 // pred_check
      _
    $region63: #{tpu_custom_call.1} parent=1 // pred_check_branch
      %139 = sbr.rel (0) target = $region65
    $region64: #{tpu_custom_call.1} parent=1 // pred_region
      %140 = dma.done [#allocation12], 32
    $region65: #{tpu_custom_call.1} parent=1 // pred_fallthru
      _
    // Predicated region
    $region66: #{tpu_custom_call.1} parent=1 // pred_check
      _
    $region67: #{tpu_custom_call.1} parent=1 // pred_check_branch
      %142 = sbr.rel (0) target = $region69
    $region68: #{tpu_custom_call.1} parent=1 // pred_region
      %143 = dma.done [#allocation15], 2048
    $region69: #{tpu_custom_call.1} parent=1 // pred_fallthru
      _
    // Predicated region
    $region70: #{tpu_custom_call.1} parent=1 // pred_check
      _
    $region71: #{tpu_custom_call.1} parent=1 // pred_check_branch
      %145 = sbr.rel (0) target = $region73
    $region72: #{tpu_custom_call.1} parent=1 // pred_region
      %146 = dma.done [#allocation15], 16
    $region73: #{tpu_custom_call.1} parent=1 // pred_fallthru
      _
    %v148 = vld [vmem:[#allocation2] sm:$0xff]
    %v149 = vld [vmem:[#allocation2 + $0x8] sm:$0xff]
    %v150 = vld [vmem:[#allocation2 + $0x10] sm:$0xff]
    %v151 = vld [vmem:[#allocation2 + $0x18] sm:$0xf]
    %v152 = vld [vmem:[#allocation2 + $0x1c] sm:$0xff]
    %v153 = vld [vmem:[#allocation2 + $0x24] sm:$0xff]
    %v154 = vld [vmem:[#allocation2 + $0x2c] sm:$0xff]
    %v155 = vld [vmem:[#allocation2 + $0x34] sm:$0xf]
    %v156 = vld [vmem:[#allocation5] sm:$0xff]
    %v157 = vld [vmem:[#allocation5 + $0x8] sm:$0xff]
    %v158 = vld [vmem:[#allocation5 + $0x10] sm:$0xff]
    %v159 = vld [vmem:[#allocation5 + $0x18] sm:$0xff]
    %v160 = vld [vmem:[#allocation5 + $0x20] sm:$0xff]
    %v161 = vld [vmem:[#allocation5 + $0x28] sm:$0xff]
    %v162 = vld [vmem:[#allocation5 + $0x30] sm:$0xff]
    %v163 = vld [vmem:[#allocation5 + $0x38] sm:$0xff]
    %v164 = vld [vmem:[#allocation5 + $0x40] sm:$0xff]
    %v165 = vld [vmem:[#allocation5 + $0x48] sm:$0xff]
    %v166 = vld [vmem:[#allocation5 + $0x50] sm:$0xff]
    %v167 = vld [vmem:[#allocation5 + $0x58] sm:$0xff]
    %v168 = vld [vmem:[#allocation5 + $0x60] sm:$0xff]
    %v169 = vld [vmem:[#allocation5 + $0x68] sm:$0xff]
    %v170 = vld [vmem:[#allocation5 + $0x70] sm:$0xff]
    %v171 = vld [vmem:[#allocation5 + $0x78] sm:$0xff]
    %v172 = vld [vmem:[#allocation5 + $0x80] sm:$0xff]
    %v173 = vld [vmem:[#allocation5 + $0x88] sm:$0xff]
    %v174 = vld [vmem:[#allocation5 + $0x90] sm:$0xff]
    %v175 = vld [vmem:[#allocation5 + $0x98] sm:$0xff]
    %v176 = vld [vmem:[#allocation5 + $0xa0] sm:$0xff]
    %v177 = vld [vmem:[#allocation5 + $0xa8] sm:$0xff]
    %v178 = vld [vmem:[#allocation5 + $0xb0] sm:$0xff]
    %v179 = vld [vmem:[#allocation5 + $0xb8] sm:$0xff]
    %v180 = vld [vmem:[#allocation5 + $0xc0] sm:$0xff]
    %v181 = vld [vmem:[#allocation5 + $0xc8] sm:$0xff]
    %v182 = vld [vmem:[#allocation5 + $0xd0] sm:$0xff]
    %v183 = vld [vmem:[#allocation5 + $0xd8] sm:$0xff]
    %v184 = vld [vmem:[#allocation5 + $0xe0] sm:$0xff]
    %v185 = vld [vmem:[#allocation5 + $0xe8] sm:$0xff]
    %v186 = vld [vmem:[#allocation5 + $0xf0] sm:$0xff]
    %v187 = vld [vmem:[#allocation5 + $0xf8] sm:$0xff]
    %v188 = vld [vmem:[#allocation5 + $0x100] sm:$0xff]
    %v189 = vld [vmem:[#allocation5 + $0x108] sm:$0xff]
    %v190 = vld [vmem:[#allocation5 + $0x110] sm:$0xff]
    %v191 = vld [vmem:[#allocation5 + $0x118] sm:$0xff]
    %v192 = vld [vmem:[#allocation5 + $0x120] sm:$0xff]
    %v193 = vld [vmem:[#allocation5 + $0x128] sm:$0xff]
    %v194 = vld [vmem:[#allocation5 + $0x130] sm:$0xff]
    %v195 = vld [vmem:[#allocation5 + $0x138] sm:$0xff]
    %v196 = vld [vmem:[#allocation5 + $0x140] sm:$0xff]
    %v197 = vld [vmem:[#allocation5 + $0x148] sm:$0xff]
    %v198 = vld [vmem:[#allocation5 + $0x150] sm:$0xff]
    %v199 = vld [vmem:[#allocation5 + $0x158] sm:$0xff]
    %v200 = vld [vmem:[#allocation5 + $0x160] sm:$0xff]
    %v201 = vld [vmem:[#allocation5 + $0x168] sm:$0xff]
    %v202 = vld [vmem:[#allocation5 + $0x170] sm:$0xff]
    %v203 = vld [vmem:[#allocation5 + $0x178] sm:$0xff]
    %v204 = vld [vmem:[#allocation5 + $0x180] sm:$0xff]
    %v205 = vld [vmem:[#allocation5 + $0x188] sm:$0xff]
    %v206 = vld [vmem:[#allocation5 + $0x190] sm:$0xff]
    %v207 = vld [vmem:[#allocation5 + $0x198] sm:$0xff]
    %v208 = vld [vmem:[#allocation5 + $0x1a0] sm:$0xff]
    %v209 = vld [vmem:[#allocation5 + $0x1a8] sm:$0xff]
    %v210 = vld [vmem:[#allocation5 + $0x1b0] sm:$0xff]
    %v211 = vld [vmem:[#allocation5 + $0x1b8] sm:$0xff]
    %v212 = vld [vmem:[#allocation5 + $0x1c0] sm:$0xff]
    %v213 = vld [vmem:[#allocation5 + $0x1c8] sm:$0xff]
    %v214 = vld [vmem:[#allocation5 + $0x1d0] sm:$0xff]
    %v215 = vld [vmem:[#allocation5 + $0x1d8] sm:$0xff]
    %v216 = vld [vmem:[#allocation5 + $0x1e0] sm:$0xff]
    %v217 = vld [vmem:[#allocation5 + $0x1e8] sm:$0xff]
    %v218 = vld [vmem:[#allocation5 + $0x1f0] sm:$0xff]
    %v219 = vld [vmem:[#allocation5 + $0x1f8] sm:$0xff]
    %v220 = vld [vmem:[#allocation5 + $0x200] sm:$0xff]
    %v221 = vld [vmem:[#allocation5 + $0x208] sm:$0xff]
    %v222 = vld [vmem:[#allocation5 + $0x210] sm:$0xff]
    %v223 = vld [vmem:[#allocation5 + $0x218] sm:$0xff]
    %v224 = vld [vmem:[#allocation5 + $0x220] sm:$0xff]
    %v225 = vld [vmem:[#allocation5 + $0x228] sm:$0xff]
    %v226 = vld [vmem:[#allocation5 + $0x230] sm:$0xff]
    %v227 = vld [vmem:[#allocation5 + $0x238] sm:$0xff]
    %v228 = vld [vmem:[#allocation5 + $0x240] sm:$0xff]
    %v229 = vld [vmem:[#allocation5 + $0x248] sm:$0xff]
    %v230 = vld [vmem:[#allocation5 + $0x250] sm:$0xff]
    %v231 = vld [vmem:[#allocation5 + $0x258] sm:$0xff]
    %v232 = vld [vmem:[#allocation5 + $0x260] sm:$0xff]
    %v233 = vld [vmem:[#allocation5 + $0x268] sm:$0xff]
    %v234 = vld [vmem:[#allocation5 + $0x270] sm:$0xff]
    %v235 = vld [vmem:[#allocation5 + $0x278] sm:$0xff]
    %v236 = vld [vmem:[#allocation5 + $0x280] sm:$0xff]
    %v237 = vld [vmem:[#allocation5 + $0x288] sm:$0xff]
    %v238 = vld [vmem:[#allocation5 + $0x290] sm:$0xff]
    %v239 = vld [vmem:[#allocation5 + $0x298] sm:$0xff]
    %v240 = vld [vmem:[#allocation5 + $0x2a0] sm:$0xff]
    %v241 = vld [vmem:[#allocation5 + $0x2a8] sm:$0xff]
    %v242 = vld [vmem:[#allocation5 + $0x2b0] sm:$0xff]
    %v243 = vld [vmem:[#allocation5 + $0x2b8] sm:$0xff]
    %v244 = vld [vmem:[#allocation5 + $0x2c0] sm:$0xff]
    %v245 = vld [vmem:[#allocation5 + $0x2c8] sm:$0xff]
    %v246 = vld [vmem:[#allocation5 + $0x2d0] sm:$0xff]
    %v247 = vld [vmem:[#allocation5 + $0x2d8] sm:$0xff]
    %v248 = vld [vmem:[#allocation5 + $0x2e0] sm:$0xff]
    %v249 = vld [vmem:[#allocation5 + $0x2e8] sm:$0xff]
    %v250 = vld [vmem:[#allocation5 + $0x2f0] sm:$0xff]
    %v251 = vld [vmem:[#allocation5 + $0x2f8] sm:$0xff]
    %v252 = vld [vmem:[#allocation5 + $0x300] sm:$0xff]
    %v253 = vld [vmem:[#allocation5 + $0x308] sm:$0xff]
    %v254 = vld [vmem:[#allocation5 + $0x310] sm:$0xff]
    %v255 = vld [vmem:[#allocation5 + $0x318] sm:$0xff]
    %v256 = vld [vmem:[#allocation5 + $0x320] sm:$0xff]
    %v257 = vld [vmem:[#allocation5 + $0x328] sm:$0xff]
    %v258 = vld [vmem:[#allocation5 + $0x330] sm:$0xff]
    %v259 = vld [vmem:[#allocation5 + $0x338] sm:$0xff]
    %v260 = vld [vmem:[#allocation5 + $0x340] sm:$0xff]
    %v261 = vld [vmem:[#allocation5 + $0x348] sm:$0xff]
    %v262 = vld [vmem:[#allocation5 + $0x350] sm:$0xff]
    %v263 = vld [vmem:[#allocation5 + $0x358] sm:$0xff]
    %v264 = vld [vmem:[#allocation5 + $0x360] sm:$0xff]
    %v265 = vld [vmem:[#allocation5 + $0x368] sm:$0xff]
    %v266 = vld [vmem:[#allocation5 + $0x370] sm:$0xff]
    %v267 = vld [vmem:[#allocation5 + $0x378] sm:$0xff]
    %v268 = vld [vmem:[#allocation5 + $0x380] sm:$0xff]
    %v269 = vld [vmem:[#allocation5 + $0x388] sm:$0xff]
    %v270 = vld [vmem:[#allocation5 + $0x390] sm:$0xff]
    %v271 = vld [vmem:[#allocation5 + $0x398] sm:$0xff]
    %v272 = vld [vmem:[#allocation5 + $0x3a0] sm:$0xff]
    %v273 = vld [vmem:[#allocation5 + $0x3a8] sm:$0xff]
    %v274 = vld [vmem:[#allocation5 + $0x3b0] sm:$0xff]
    %v275 = vld [vmem:[#allocation5 + $0x3b8] sm:$0xff]
    %v276 = vld [vmem:[#allocation5 + $0x3c0] sm:$0xff]
    %v277 = vld [vmem:[#allocation5 + $0x3c8] sm:$0xff]
    %v278 = vld [vmem:[#allocation5 + $0x3d0] sm:$0xff]
    %v279 = vld [vmem:[#allocation5 + $0x3d8] sm:$0xff]
    %v280 = vld [vmem:[#allocation5 + $0x3e0] sm:$0xff]
    %v281 = vld [vmem:[#allocation5 + $0x3e8] sm:$0xff]
    %v282 = vld [vmem:[#allocation5 + $0x3f0] sm:$0xff]
    %v283 = vld [vmem:[#allocation5 + $0x3f8] sm:$0xff]
    %v284 = vld [vmem:[#allocation5 + $0x400] sm:$0xff]
    %v285 = vld [vmem:[#allocation5 + $0x408] sm:$0xff]
    %v286 = vld [vmem:[#allocation5 + $0x410] sm:$0xff]
    %v287 = vld [vmem:[#allocation5 + $0x418] sm:$0xff]
    %v288 = vld [vmem:[#allocation5 + $0x420] sm:$0xff]
    %v289 = vld [vmem:[#allocation5 + $0x428] sm:$0xff]
    %v290 = vld [vmem:[#allocation5 + $0x430] sm:$0xff]
    %v291 = vld [vmem:[#allocation5 + $0x438] sm:$0xff]
    %v292 = vld [vmem:[#allocation5 + $0x440] sm:$0xff]
    %v293 = vld [vmem:[#allocation5 + $0x448] sm:$0xff]
    %v294 = vld [vmem:[#allocation5 + $0x450] sm:$0xff]
    %v295 = vld [vmem:[#allocation5 + $0x458] sm:$0xff]
    %v296 = vld [vmem:[#allocation5 + $0x460] sm:$0xff]
    %v297 = vld [vmem:[#allocation5 + $0x468] sm:$0xff]
    %v298 = vld [vmem:[#allocation5 + $0x470] sm:$0xff]
    %v299 = vld [vmem:[#allocation5 + $0x478] sm:$0xff]
    %v300 = vld [vmem:[#allocation5 + $0x480] sm:$0xff]
    %v301 = vld [vmem:[#allocation5 + $0x488] sm:$0xff]
    %v302 = vld [vmem:[#allocation5 + $0x490] sm:$0xff]
    %v303 = vld [vmem:[#allocation5 + $0x498] sm:$0xff]
    %v304 = vld [vmem:[#allocation5 + $0x4a0] sm:$0xff]
    %v305 = vld [vmem:[#allocation5 + $0x4a8] sm:$0xff]
    %v306 = vld [vmem:[#allocation5 + $0x4b0] sm:$0xff]
    %v307 = vld [vmem:[#allocation5 + $0x4b8] sm:$0xff]
    %v308 = vld [vmem:[#allocation5 + $0x4c0] sm:$0xff]
    %v309 = vld [vmem:[#allocation5 + $0x4c8] sm:$0xff]
    %v310 = vld [vmem:[#allocation5 + $0x4d0] sm:$0xff]
    %v311 = vld [vmem:[#allocation5 + $0x4d8] sm:$0xff]
    %v312 = vld [vmem:[#allocation5 + $0x4e0] sm:$0xff]
    %v313 = vld [vmem:[#allocation5 + $0x4e8] sm:$0xff]
    %v314 = vld [vmem:[#allocation5 + $0x4f0] sm:$0xff]
    %v315 = vld [vmem:[#allocation5 + $0x4f8] sm:$0xff]
    %v316 = vld [vmem:[#allocation5 + $0x500] sm:$0xff]
    %v317 = vld [vmem:[#allocation5 + $0x508] sm:$0xff]
    %v318 = vld [vmem:[#allocation5 + $0x510] sm:$0xff]
    %v319 = vld [vmem:[#allocation5 + $0x518] sm:$0xff]
    %v320 = vld [vmem:[#allocation5 + $0x520] sm:$0xff]
    %v321 = vld [vmem:[#allocation5 + $0x528] sm:$0xff]
    %v322 = vld [vmem:[#allocation5 + $0x530] sm:$0xff]
    %v323 = vld [vmem:[#allocation5 + $0x538] sm:$0xff]
    %v324 = vld [vmem:[#allocation5 + $0x540] sm:$0xff]
    %v325 = vld [vmem:[#allocation5 + $0x548] sm:$0xff]
    %v326 = vld [vmem:[#allocation5 + $0x550] sm:$0xff]
    %v327 = vld [vmem:[#allocation5 + $0x558] sm:$0xff]
    %v328 = vld [vmem:[#allocation5 + $0x560] sm:$0xff]
    %v329 = vld [vmem:[#allocation5 + $0x568] sm:$0xff]
    %v330 = vld [vmem:[#allocation5 + $0x570] sm:$0xff]
    %v331 = vld [vmem:[#allocation5 + $0x578] sm:$0xff]
    %v332 = vld [vmem:[#allocation5 + $0x580] sm:$0xff]
    %v333 = vld [vmem:[#allocation5 + $0x588] sm:$0xff]
    %v334 = vld [vmem:[#allocation5 + $0x590] sm:$0xff]
    %v335 = vld [vmem:[#allocation5 + $0x598] sm:$0xff]
    %v336 = vld [vmem:[#allocation5 + $0x5a0] sm:$0xff]
    %v337 = vld [vmem:[#allocation5 + $0x5a8] sm:$0xff]
    %v338 = vld [vmem:[#allocation5 + $0x5b0] sm:$0xff]
    %v339 = vld [vmem:[#allocation5 + $0x5b8] sm:$0xff]
    %v340 = vld [vmem:[#allocation5 + $0x5c0] sm:$0xff]
    %v341 = vld [vmem:[#allocation5 + $0x5c8] sm:$0xff]
    %v342 = vld [vmem:[#allocation5 + $0x5d0] sm:$0xff]
    %v343 = vld [vmem:[#allocation5 + $0x5d8] sm:$0xff]
    %v344 = vld [vmem:[#allocation5 + $0x5e0] sm:$0xff]
    %v345 = vld [vmem:[#allocation5 + $0x5e8] sm:$0xff]
    %v346 = vld [vmem:[#allocation5 + $0x5f0] sm:$0xff]
    %v347 = vld [vmem:[#allocation5 + $0x5f8] sm:$0xff]
    %v348 = vld [vmem:[#allocation5 + $0x600] sm:$0xff]
    %v349 = vld [vmem:[#allocation5 + $0x608] sm:$0xff]
    %v350 = vld [vmem:[#allocation5 + $0x610] sm:$0xff]
    %v351 = vld [vmem:[#allocation5 + $0x618] sm:$0xff]
    %v352 = vld [vmem:[#allocation5 + $0x620] sm:$0xff]
    %v353 = vld [vmem:[#allocation5 + $0x628] sm:$0xff]
    %v354 = vld [vmem:[#allocation5 + $0x630] sm:$0xff]
    %v355 = vld [vmem:[#allocation5 + $0x638] sm:$0xff]
    %v356 = vld [vmem:[#allocation5 + $0x640] sm:$0xff]
    %v357 = vld [vmem:[#allocation5 + $0x648] sm:$0xff]
    %v358 = vld [vmem:[#allocation5 + $0x650] sm:$0xff]
    %v359 = vld [vmem:[#allocation5 + $0x658] sm:$0xff]
    %v360 = vld [vmem:[#allocation5 + $0x660] sm:$0xff]
    %v361 = vld [vmem:[#allocation5 + $0x668] sm:$0xff]
    %v362 = vld [vmem:[#allocation5 + $0x670] sm:$0xff]
    %v363 = vld [vmem:[#allocation5 + $0x678] sm:$0xff]
    %v364 = vld [vmem:[#allocation5 + $0x680] sm:$0xff]
    %v365 = vld [vmem:[#allocation5 + $0x688] sm:$0xff]
    %v366 = vld [vmem:[#allocation5 + $0x690] sm:$0xff]
    %v367 = vld [vmem:[#allocation5 + $0x698] sm:$0xff]
    %v368 = vld [vmem:[#allocation5 + $0x6a0] sm:$0xff]
    %v369 = vld [vmem:[#allocation5 + $0x6a8] sm:$0xff]
    %v370 = vld [vmem:[#allocation5 + $0x6b0] sm:$0xff]
    %v371 = vld [vmem:[#allocation5 + $0x6b8] sm:$0xff]
    %v372 = vld [vmem:[#allocation5 + $0x6c0] sm:$0xff]
    %v373 = vld [vmem:[#allocation5 + $0x6c8] sm:$0xff]
    %v374 = vld [vmem:[#allocation5 + $0x6d0] sm:$0xff]
    %v375 = vld [vmem:[#allocation5 + $0x6d8] sm:$0xff]
    %v376 = vld [vmem:[#allocation5 + $0x6e0] sm:$0xff]
    %v377 = vld [vmem:[#allocation5 + $0x6e8] sm:$0xff]
    %v378 = vld [vmem:[#allocation5 + $0x6f0] sm:$0xff]
    %v379 = vld [vmem:[#allocation5 + $0x6f8] sm:$0xff]
    %v380 = vld [vmem:[#allocation5 + $0x700] sm:$0xff]
    %v381 = vld [vmem:[#allocation5 + $0x708] sm:$0xff]
    %v382 = vld [vmem:[#allocation5 + $0x710] sm:$0xff]
    %v383 = vld [vmem:[#allocation5 + $0x718] sm:$0xff]
    %v384 = vld [vmem:[#allocation5 + $0x720] sm:$0xff]
    %v385 = vld [vmem:[#allocation5 + $0x728] sm:$0xff]
    %v386 = vld [vmem:[#allocation5 + $0x730] sm:$0xff]
    %v387 = vld [vmem:[#allocation5 + $0x738] sm:$0xff]
    %v388 = vld [vmem:[#allocation5 + $0x740] sm:$0xff]
    %v389 = vld [vmem:[#allocation5 + $0x748] sm:$0xff]
    %v390 = vld [vmem:[#allocation5 + $0x750] sm:$0xff]
    %v391 = vld [vmem:[#allocation5 + $0x758] sm:$0xff]
    %v392 = vld [vmem:[#allocation5 + $0x760] sm:$0xff]
    %v393 = vld [vmem:[#allocation5 + $0x768] sm:$0xff]
    %v394 = vld [vmem:[#allocation5 + $0x770] sm:$0xff]
    %v395 = vld [vmem:[#allocation5 + $0x778] sm:$0xff]
    %v396 = vld [vmem:[#allocation5 + $0x780] sm:$0xff]
    %v397 = vld [vmem:[#allocation5 + $0x788] sm:$0xff]
    %v398 = vld [vmem:[#allocation5 + $0x790] sm:$0xff]
    %v399 = vld [vmem:[#allocation5 + $0x798] sm:$0xff]
    %v400 = vld [vmem:[#allocation5 + $0x7a0] sm:$0xff]
    %v401 = vld [vmem:[#allocation5 + $0x7a8] sm:$0xff]
    %v402 = vld [vmem:[#allocation5 + $0x7b0] sm:$0xff]
    %v403 = vld [vmem:[#allocation5 + $0x7b8] sm:$0xff]
    %v404 = vld [vmem:[#allocation5 + $0x7c0] sm:$0xff]
    %v405 = vld [vmem:[#allocation5 + $0x7c8] sm:$0xff]
    %v406 = vld [vmem:[#allocation5 + $0x7d0] sm:$0xff]
    %v407 = vld [vmem:[#allocation5 + $0x7d8] sm:$0xff]
    %v408 = vld [vmem:[#allocation5 + $0x7e0] sm:$0xff]
    %v409 = vld [vmem:[#allocation5 + $0x7e8] sm:$0xff]
    %v410 = vld [vmem:[#allocation5 + $0x7f0] sm:$0xff]
    %v411 = vld [vmem:[#allocation5 + $0x7f8] sm:$0xff]
    %v412 = vld [vmem:[#allocation5 + $0x800] sm:$0xff]
    %v413 = vld [vmem:[#allocation5 + $0x808] sm:$0xff]
    %v414 = vld [vmem:[#allocation5 + $0x810] sm:$0xff]
    %v415 = vld [vmem:[#allocation5 + $0x818] sm:$0xff]
    %v416 = vld [vmem:[#allocation5 + $0x820] sm:$0xff]
    %v417 = vld [vmem:[#allocation5 + $0x828] sm:$0xff]
    %v418 = vld [vmem:[#allocation5 + $0x830] sm:$0xff]
    %v419 = vld [vmem:[#allocation5 + $0x838] sm:$0xff]
    %v420 = vld [vmem:[#allocation5 + $0x840] sm:$0xff]
    %v421 = vld [vmem:[#allocation5 + $0x848] sm:$0xff]
    %v422 = vld [vmem:[#allocation5 + $0x850] sm:$0xff]
    %v423 = vld [vmem:[#allocation5 + $0x858] sm:$0xff]
    %v424 = vld [vmem:[#allocation5 + $0x860] sm:$0xff]
    %v425 = vld [vmem:[#allocation5 + $0x868] sm:$0xff]
    %v426 = vld [vmem:[#allocation5 + $0x870] sm:$0xff]
    %v427 = vld [vmem:[#allocation5 + $0x878] sm:$0xff]
    %v428 = vld [vmem:[#allocation5 + $0x880] sm:$0xff]
    %v429 = vld [vmem:[#allocation5 + $0x888] sm:$0xff]
    %v430 = vld [vmem:[#allocation5 + $0x890] sm:$0xff]
    %v431 = vld [vmem:[#allocation5 + $0x898] sm:$0xff]
    %v432 = vld [vmem:[#allocation5 + $0x8a0] sm:$0xff]
    %v433 = vld [vmem:[#allocation5 + $0x8a8] sm:$0xff]
    %v434 = vld [vmem:[#allocation5 + $0x8b0] sm:$0xff]
    %v435 = vld [vmem:[#allocation5 + $0x8b8] sm:$0xff]
    %v436 = vld [vmem:[#allocation5 + $0x8c0] sm:$0xff]
    %v437 = vld [vmem:[#allocation5 + $0x8c8] sm:$0xff]
    %v438 = vld [vmem:[#allocation5 + $0x8d0] sm:$0xff]
    %v439 = vld [vmem:[#allocation5 + $0x8d8] sm:$0xff]
    %v440 = vld [vmem:[#allocation5 + $0x8e0] sm:$0xff]
    %v441 = vld [vmem:[#allocation5 + $0x8e8] sm:$0xff]
    %v442 = vld [vmem:[#allocation5 + $0x8f0] sm:$0xff]
    %v443 = vld [vmem:[#allocation5 + $0x8f8] sm:$0xff]
    %v444 = vld [vmem:[#allocation5 + $0x900] sm:$0xff]
    %v445 = vld [vmem:[#allocation5 + $0x908] sm:$0xff]
    %v446 = vld [vmem:[#allocation5 + $0x910] sm:$0xff]
    %v447 = vld [vmem:[#allocation5 + $0x918] sm:$0xff]
    %v448 = vld [vmem:[#allocation5 + $0x920] sm:$0xff]
    %v449 = vld [vmem:[#allocation5 + $0x928] sm:$0xff]
    %v450 = vld [vmem:[#allocation5 + $0x930] sm:$0xff]
    %v451 = vld [vmem:[#allocation5 + $0x938] sm:$0xff]
    %v452 = vld [vmem:[#allocation5 + $0x940] sm:$0xff]
    %v453 = vld [vmem:[#allocation5 + $0x948] sm:$0xff]
    %v454 = vld [vmem:[#allocation5 + $0x950] sm:$0xff]
    %v455 = vld [vmem:[#allocation5 + $0x958] sm:$0xff]
    %v456 = vld [vmem:[#allocation5 + $0x960] sm:$0xff]
    %v457 = vld [vmem:[#allocation5 + $0x968] sm:$0xff]
    %v458 = vld [vmem:[#allocation5 + $0x970] sm:$0xff]
    %v459 = vld [vmem:[#allocation5 + $0x978] sm:$0xff]
    %v460 = vld [vmem:[#allocation5 + $0x980] sm:$0xff]
    %v461 = vld [vmem:[#allocation5 + $0x988] sm:$0xff]
    %v462 = vld [vmem:[#allocation5 + $0x990] sm:$0xff]
    %v463 = vld [vmem:[#allocation5 + $0x998] sm:$0xff]
    %v464 = vld [vmem:[#allocation5 + $0x9a0] sm:$0xff]
    %v465 = vld [vmem:[#allocation5 + $0x9a8] sm:$0xff]
    %v466 = vld [vmem:[#allocation5 + $0x9b0] sm:$0xff]
    %v467 = vld [vmem:[#allocation5 + $0x9b8] sm:$0xff]
    %v468 = vld [vmem:[#allocation5 + $0x9c0] sm:$0xff]
    %v469 = vld [vmem:[#allocation5 + $0x9c8] sm:$0xff]
    %v470 = vld [vmem:[#allocation5 + $0x9d0] sm:$0xff]
    %v471 = vld [vmem:[#allocation5 + $0x9d8] sm:$0xff]
    %v472 = vld [vmem:[#allocation5 + $0x9e0] sm:$0xff]
    %v473 = vld [vmem:[#allocation5 + $0x9e8] sm:$0xff]
    %v474 = vld [vmem:[#allocation5 + $0x9f0] sm:$0xff]
    %v475 = vld [vmem:[#allocation5 + $0x9f8] sm:$0xff]
    %v476 = vld [vmem:[#allocation5 + $0xa00] sm:$0xff]
    %v477 = vld [vmem:[#allocation5 + $0xa08] sm:$0xff]
    %v478 = vld [vmem:[#allocation5 + $0xa10] sm:$0xff]
    %v479 = vld [vmem:[#allocation5 + $0xa18] sm:$0xff]
    %v480 = vld [vmem:[#allocation5 + $0xa20] sm:$0xff]
    %v481 = vld [vmem:[#allocation5 + $0xa28] sm:$0xff]
    %v482 = vld [vmem:[#allocation5 + $0xa30] sm:$0xff]
    %v483 = vld [vmem:[#allocation5 + $0xa38] sm:$0xff]
    %v484 = vld [vmem:[#allocation5 + $0xa40] sm:$0xff]
    %v485 = vld [vmem:[#allocation5 + $0xa48] sm:$0xff]
    %v486 = vld [vmem:[#allocation5 + $0xa50] sm:$0xff]
    %v487 = vld [vmem:[#allocation5 + $0xa58] sm:$0xff]
    %v488 = vld [vmem:[#allocation5 + $0xa60] sm:$0xff]
    %v489 = vld [vmem:[#allocation5 + $0xa68] sm:$0xff]
    %v490 = vld [vmem:[#allocation5 + $0xa70] sm:$0xff]
    %v491 = vld [vmem:[#allocation5 + $0xa78] sm:$0xff]
    %v492 = vld [vmem:[#allocation5 + $0xa80] sm:$0xff]
    %v493 = vld [vmem:[#allocation5 + $0xa88] sm:$0xff]
    %v494 = vld [vmem:[#allocation5 + $0xa90] sm:$0xff]
    %v495 = vld [vmem:[#allocation5 + $0xa98] sm:$0xff]
    %v496 = vld [vmem:[#allocation5 + $0xaa0] sm:$0xff]
    %v497 = vld [vmem:[#allocation5 + $0xaa8] sm:$0xff]
    %v498 = vld [vmem:[#allocation5 + $0xab0] sm:$0xff]
    %v499 = vld [vmem:[#allocation5 + $0xab8] sm:$0xff]
    %v500 = vld [vmem:[#allocation5 + $0xac0] sm:$0xff]
    %v501 = vld [vmem:[#allocation5 + $0xac8] sm:$0xff]
    %v502 = vld [vmem:[#allocation5 + $0xad0] sm:$0xff]
    %v503 = vld [vmem:[#allocation5 + $0xad8] sm:$0xff]
    %v504 = vld [vmem:[#allocation5 + $0xae0] sm:$0xff]
    %v505 = vld [vmem:[#allocation5 + $0xae8] sm:$0xff]
    %v506 = vld [vmem:[#allocation5 + $0xaf0] sm:$0xff]
    %v507 = vld [vmem:[#allocation5 + $0xaf8] sm:$0xff]
    %v508 = vld [vmem:[#allocation5 + $0xb00] sm:$0xff]
    %v509 = vld [vmem:[#allocation5 + $0xb08] sm:$0xff]
    %v510 = vld [vmem:[#allocation5 + $0xb10] sm:$0xff]
    %v511 = vld [vmem:[#allocation5 + $0xb18] sm:$0xff]
    %v512 = vld [vmem:[#allocation5 + $0xb20] sm:$0xff]
    %v513 = vld [vmem:[#allocation5 + $0xb28] sm:$0xff]
    %v514 = vld [vmem:[#allocation5 + $0xb30] sm:$0xff]
    %v515 = vld [vmem:[#allocation5 + $0xb38] sm:$0xff]
    %v516 = vld [vmem:[#allocation5 + $0xb40] sm:$0xff]
    %v517 = vld [vmem:[#allocation5 + $0xb48] sm:$0xff]
    %v518 = vld [vmem:[#allocation5 + $0xb50] sm:$0xff]
    %v519 = vld [vmem:[#allocation5 + $0xb58] sm:$0xff]
    %v520 = vld [vmem:[#allocation5 + $0xb60] sm:$0xff]
    %v521 = vld [vmem:[#allocation5 + $0xb68] sm:$0xff]
    %v522 = vld [vmem:[#allocation5 + $0xb70] sm:$0xff]
    %v523 = vld [vmem:[#allocation5 + $0xb78] sm:$0xff]
    %v524 = vld [vmem:[#allocation5 + $0xb80] sm:$0xff]
    %v525 = vld [vmem:[#allocation5 + $0xb88] sm:$0xff]
    %v526 = vld [vmem:[#allocation5 + $0xb90] sm:$0xff]
    %v527 = vld [vmem:[#allocation5 + $0xb98] sm:$0xff]
    %v528 = vld [vmem:[#allocation5 + $0xba0] sm:$0xff]
    %v529 = vld [vmem:[#allocation5 + $0xba8] sm:$0xff]
    %v530 = vld [vmem:[#allocation5 + $0xbb0] sm:$0xff]
    %v531 = vld [vmem:[#allocation5 + $0xbb8] sm:$0xff]
    %v532 = vld [vmem:[#allocation5 + $0xbc0] sm:$0xff]
    %v533 = vld [vmem:[#allocation5 + $0xbc8] sm:$0xff]
    %v534 = vld [vmem:[#allocation5 + $0xbd0] sm:$0xff]
    %v535 = vld [vmem:[#allocation5 + $0xbd8] sm:$0xff]
    %v536 = vld [vmem:[#allocation5 + $0xbe0] sm:$0xff]
    %v537 = vld [vmem:[#allocation5 + $0xbe8] sm:$0xff]
    %v538 = vld [vmem:[#allocation5 + $0xbf0] sm:$0xff]
    %v539 = vld [vmem:[#allocation5 + $0xbf8] sm:$0xff]
    %v540 = vld [vmem:[#allocation5 + $0xc00] sm:$0xff]
    %v541 = vld [vmem:[#allocation5 + $0xc08] sm:$0xff]
    %v542 = vld [vmem:[#allocation5 + $0xc10] sm:$0xff]
    %v543 = vld [vmem:[#allocation5 + $0xc18] sm:$0xff]
    %v544 = vld [vmem:[#allocation5 + $0xc20] sm:$0xff]
    %v545 = vld [vmem:[#allocation5 + $0xc28] sm:$0xff]
    %v546 = vld [vmem:[#allocation5 + $0xc30] sm:$0xff]
    %v547 = vld [vmem:[#allocation5 + $0xc38] sm:$0xff]
    %v548 = vld [vmem:[#allocation5 + $0xc40] sm:$0xff]
    %v549 = vld [vmem:[#allocation5 + $0xc48] sm:$0xff]
    %v550 = vld [vmem:[#allocation5 + $0xc50] sm:$0xff]
    %v551 = vld [vmem:[#allocation5 + $0xc58] sm:$0xff]
    %v552 = vld [vmem:[#allocation5 + $0xc60] sm:$0xff]
    %v553 = vld [vmem:[#allocation5 + $0xc68] sm:$0xff]
    %v554 = vld [vmem:[#allocation5 + $0xc70] sm:$0xff]
    %v555 = vld [vmem:[#allocation5 + $0xc78] sm:$0xff]
    %v556 = vld [vmem:[#allocation5 + $0xc80] sm:$0xff]
    %v557 = vld [vmem:[#allocation5 + $0xc88] sm:$0xff]
    %v558 = vld [vmem:[#allocation5 + $0xc90] sm:$0xff]
    %v559 = vld [vmem:[#allocation5 + $0xc98] sm:$0xff]
    %v560 = vld [vmem:[#allocation5 + $0xca0] sm:$0xff]
    %v561 = vld [vmem:[#allocation5 + $0xca8] sm:$0xff]
    %v562 = vld [vmem:[#allocation5 + $0xcb0] sm:$0xff]
    %v563 = vld [vmem:[#allocation5 + $0xcb8] sm:$0xff]
    %v564 = vld [vmem:[#allocation5 + $0xcc0] sm:$0xff]
    %v565 = vld [vmem:[#allocation5 + $0xcc8] sm:$0xff]
    %v566 = vld [vmem:[#allocation5 + $0xcd0] sm:$0xff]
    %v567 = vld [vmem:[#allocation5 + $0xcd8] sm:$0xff]
    %v568 = vld [vmem:[#allocation5 + $0xce0] sm:$0xff]
    %v569 = vld [vmem:[#allocation5 + $0xce8] sm:$0xff]
    %v570 = vld [vmem:[#allocation5 + $0xcf0] sm:$0xff]
    %v571 = vld [vmem:[#allocation5 + $0xcf8] sm:$0xff]
    %v572 = vld [vmem:[#allocation5 + $0xd00] sm:$0xff]
    %v573 = vld [vmem:[#allocation5 + $0xd08] sm:$0xff]
    %v574 = vld [vmem:[#allocation5 + $0xd10] sm:$0xff]
    %v575 = vld [vmem:[#allocation5 + $0xd18] sm:$0xff]
    %v576 = vld [vmem:[#allocation5 + $0xd20] sm:$0xff]
    %v577 = vld [vmem:[#allocation5 + $0xd28] sm:$0xff]
    %v578 = vld [vmem:[#allocation5 + $0xd30] sm:$0xff]
    %v579 = vld [vmem:[#allocation5 + $0xd38] sm:$0xff]
    %v580 = vld [vmem:[#allocation5 + $0xd40] sm:$0xff]
    %v581 = vld [vmem:[#allocation5 + $0xd48] sm:$0xff]
    %v582 = vld [vmem:[#allocation5 + $0xd50] sm:$0xff]
    %v583 = vld [vmem:[#allocation5 + $0xd58] sm:$0xff]
    %v584 = vld [vmem:[#allocation5 + $0xd60] sm:$0xff]
    %v585 = vld [vmem:[#allocation5 + $0xd68] sm:$0xff]
    %v586 = vld [vmem:[#allocation5 + $0xd70] sm:$0xff]
    %v587 = vld [vmem:[#allocation5 + $0xd78] sm:$0xff]
    %v588 = vld [vmem:[#allocation5 + $0xd80] sm:$0xff]
    %v589 = vld [vmem:[#allocation5 + $0xd88] sm:$0xff]
    %v590 = vld [vmem:[#allocation5 + $0xd90] sm:$0xff]
    %v591 = vld [vmem:[#allocation5 + $0xd98] sm:$0xff]
    %v592 = vld [vmem:[#allocation5 + $0xda0] sm:$0xff]
    %v593 = vld [vmem:[#allocation5 + $0xda8] sm:$0xff]
    %v594 = vld [vmem:[#allocation5 + $0xdb0] sm:$0xff]
    %v595 = vld [vmem:[#allocation5 + $0xdb8] sm:$0xff]
    %v596 = vld [vmem:[#allocation5 + $0xdc0] sm:$0xff]
    %v597 = vld [vmem:[#allocation5 + $0xdc8] sm:$0xff]
    %v598 = vld [vmem:[#allocation5 + $0xdd0] sm:$0xff]
    %v599 = vld [vmem:[#allocation5 + $0xdd8] sm:$0xff]
    %v600 = vld [vmem:[#allocation5 + $0xde0] sm:$0xff]
    %v601 = vld [vmem:[#allocation5 + $0xde8] sm:$0xff]
    %v602 = vld [vmem:[#allocation5 + $0xdf0] sm:$0xff]
    %v603 = vld [vmem:[#allocation5 + $0xdf8] sm:$0xff]
    %v604 = vld [vmem:[#allocation7] sm:$0xff]
    %v606 = vlaneseq
    %v607 = vshrl.u32 %v606, 7
    %v608 = vsub.s32 0, %v607
    %v609 = vrot.slane %v604, %v608
    %v610 = vlaneseq
    %v611 = vshrl.u32 %v610, 7
    %v612 = vsub.s32 1, %v611
    %v613 = vrot.slane %v604, %v612
    %v614 = vlaneseq
    %v615 = vshrl.u32 %v614, 7
    %v616 = vsub.s32 2, %v615
    %v617 = vrot.slane %v604, %v616
    %v618 = vlaneseq
    %v619 = vshrl.u32 %v618, 7
    %v620 = vsub.s32 3, %v619
    %v621 = vrot.slane %v604, %v620
    %v622 = vlaneseq
    %v623 = vshrl.u32 %v622, 7
    %v624 = vsub.s32 4, %v623
    %v625 = vrot.slane %v604, %v624
    %v626 = vlaneseq
    %v627 = vshrl.u32 %v626, 7
    %v628 = vsub.s32 5, %v627
    %v629 = vrot.slane %v604, %v628
    %v630 = vlaneseq
    %v631 = vshrl.u32 %v630, 7
    %v632 = vsub.s32 6, %v631
    %v633 = vrot.slane %v604, %v632
    %v634 = vlaneseq
    %v635 = vshrl.u32 %v634, 7
    %v636 = vsub.s32 7, %v635
    %v637 = vrot.slane %v604, %v636
    %v654 = vunpack.c.l.b16 %v148
    %v655 = vunpack.c.h.b16 %v148
    %v656 = vunpack.c.l.b16 %v149
    %v657 = vunpack.c.h.b16 %v149
    %v658 = vunpack.c.l.b16 %v150
    %v659 = vunpack.c.h.b16 %v150
    %v660 = vunpack.c.l.b16 %v151
    %v661 = vunpack.c.l.b16 %v152
    %v662 = vunpack.c.h.b16 %v152
    %v663 = vunpack.c.l.b16 %v153
    %v664 = vunpack.c.h.b16 %v153
    %v665 = vunpack.c.l.b16 %v154
    %v666 = vunpack.c.h.b16 %v154
    %v667 = vunpack.c.l.b16 %v155
    %v668 = vpack.c.b16 %v661, %v654
    %v669 = vpack.c.b16 %v662, %v655
    %v670 = vpack.c.b16 %v663, %v656
    %v671 = vpack.c.b16 %v664, %v657
    %v672 = vpack.c.b16 %v665, %v658
    %v673 = vpack.c.b16 %v666, %v659
    %v674 = vpack.c.b16 %v667, %v660
    %v1130 = vunpack.c.l.b16 %v156
    %v1131 = vunpack.c.h.b16 %v156
    %v1132 = vunpack.c.l.b16 %v157
    %v1133 = vunpack.c.h.b16 %v157
    %v1134 = vunpack.c.l.b16 %v158
    %v1135 = vunpack.c.h.b16 %v158
    %v1136 = vunpack.c.l.b16 %v159
    %v1137 = vunpack.c.h.b16 %v159
    %v1138 = vunpack.c.l.b16 %v160
    %v1139 = vunpack.c.h.b16 %v160
    %v1140 = vunpack.c.l.b16 %v161
    %v1141 = vunpack.c.h.b16 %v161
    %v1142 = vunpack.c.l.b16 %v162
    %v1143 = vunpack.c.h.b16 %v162
    %v1144 = vunpack.c.l.b16 %v163
    %v1145 = vunpack.c.h.b16 %v163
    %v1146 = vunpack.c.l.b16 %v164
    %v1147 = vunpack.c.h.b16 %v164
    %v1148 = vunpack.c.l.b16 %v165
    %v1149 = vunpack.c.h.b16 %v165
    %v1150 = vunpack.c.l.b16 %v166
    %v1151 = vunpack.c.h.b16 %v166
    %v1152 = vunpack.c.l.b16 %v167
    %v1153 = vunpack.c.h.b16 %v167
    %v1154 = vunpack.c.l.b16 %v168
    %v1155 = vunpack.c.h.b16 %v168
    %v1156 = vunpack.c.l.b16 %v169
    %v1157 = vunpack.c.h.b16 %v169
    %v1158 = vunpack.c.l.b16 %v170
    %v1159 = vunpack.c.h.b16 %v170
    %v1160 = vunpack.c.l.b16 %v171
    %v1161 = vunpack.c.h.b16 %v171
    %v1162 = vunpack.c.l.b16 %v172
    %v1163 = vunpack.c.h.b16 %v172
    %v1164 = vunpack.c.l.b16 %v173
    %v1165 = vunpack.c.h.b16 %v173
    %v1166 = vunpack.c.l.b16 %v174
    %v1167 = vunpack.c.h.b16 %v174
    %v1168 = vunpack.c.l.b16 %v175
    %v1169 = vunpack.c.h.b16 %v175
    %v1170 = vunpack.c.l.b16 %v176
    %v1171 = vunpack.c.h.b16 %v176
    %v1172 = vunpack.c.l.b16 %v177
    %v1173 = vunpack.c.h.b16 %v177
    %v1174 = vunpack.c.l.b16 %v178
    %v1175 = vunpack.c.h.b16 %v178
    %v1176 = vunpack.c.l.b16 %v179
    %v1177 = vunpack.c.h.b16 %v179
    %v1178 = vunpack.c.l.b16 %v180
    %v1179 = vunpack.c.h.b16 %v180
    %v1180 = vunpack.c.l.b16 %v181
    %v1181 = vunpack.c.h.b16 %v181
    %v1182 = vunpack.c.l.b16 %v182
    %v1183 = vunpack.c.h.b16 %v182
    %v1184 = vunpack.c.l.b16 %v183
    %v1185 = vunpack.c.h.b16 %v183
    %v1186 = vunpack.c.l.b16 %v184
    %v1187 = vunpack.c.h.b16 %v184
    %v1188 = vunpack.c.l.b16 %v185
    %v1189 = vunpack.c.h.b16 %v185
    %v1190 = vunpack.c.l.b16 %v186
    %v1191 = vunpack.c.h.b16 %v186
    %v1192 = vunpack.c.l.b16 %v187
    %v1193 = vunpack.c.h.b16 %v187
    %v1194 = vunpack.c.l.b16 %v188
    %v1195 = vunpack.c.h.b16 %v188
    %v1196 = vunpack.c.l.b16 %v189
    %v1197 = vunpack.c.h.b16 %v189
    %v1198 = vunpack.c.l.b16 %v190
    %v1199 = vunpack.c.h.b16 %v190
    %v1200 = vunpack.c.l.b16 %v191
    %v1201 = vunpack.c.h.b16 %v191
    %v1202 = vunpack.c.l.b16 %v192
    %v1203 = vunpack.c.h.b16 %v192
    %v1204 = vunpack.c.l.b16 %v193
    %v1205 = vunpack.c.h.b16 %v193
    %v1206 = vunpack.c.l.b16 %v194
    %v1207 = vunpack.c.h.b16 %v194
    %v1208 = vunpack.c.l.b16 %v195
    %v1209 = vunpack.c.h.b16 %v195
    %v1210 = vunpack.c.l.b16 %v196
    %v1211 = vunpack.c.h.b16 %v196
    %v1212 = vunpack.c.l.b16 %v197
    %v1213 = vunpack.c.h.b16 %v197
    %v1214 = vunpack.c.l.b16 %v198
    %v1215 = vunpack.c.h.b16 %v198
    %v1216 = vunpack.c.l.b16 %v199
    %v1217 = vunpack.c.h.b16 %v199
    %v1218 = vunpack.c.l.b16 %v200
    %v1219 = vunpack.c.h.b16 %v200
    %v1220 = vunpack.c.l.b16 %v201
    %v1221 = vunpack.c.h.b16 %v201
    %v1222 = vunpack.c.l.b16 %v202
    %v1223 = vunpack.c.h.b16 %v202
    %v1224 = vunpack.c.l.b16 %v203
    %v1225 = vunpack.c.h.b16 %v203
    %v1226 = vunpack.c.l.b16 %v204
    %v1227 = vunpack.c.h.b16 %v204
    %v1228 = vunpack.c.l.b16 %v205
    %v1229 = vunpack.c.h.b16 %v205
    %v1230 = vunpack.c.l.b16 %v206
    %v1231 = vunpack.c.h.b16 %v206
    %v1232 = vunpack.c.l.b16 %v207
    %v1233 = vunpack.c.h.b16 %v207
    %v1234 = vunpack.c.l.b16 %v208
    %v1235 = vunpack.c.h.b16 %v208
    %v1236 = vunpack.c.l.b16 %v209
    %v1237 = vunpack.c.h.b16 %v209
    %v1238 = vunpack.c.l.b16 %v210
    %v1239 = vunpack.c.h.b16 %v210
    %v1240 = vunpack.c.l.b16 %v211
    %v1241 = vunpack.c.h.b16 %v211
    %v1242 = vunpack.c.l.b16 %v212
    %v1243 = vunpack.c.h.b16 %v212
    %v1244 = vunpack.c.l.b16 %v213
    %v1245 = vunpack.c.h.b16 %v213
    %v1246 = vunpack.c.l.b16 %v214
    %v1247 = vunpack.c.h.b16 %v214
    %v1248 = vunpack.c.l.b16 %v215
    %v1249 = vunpack.c.h.b16 %v215
    %v1250 = vunpack.c.l.b16 %v216
    %v1251 = vunpack.c.h.b16 %v216
    %v1252 = vunpack.c.l.b16 %v217
    %v1253 = vunpack.c.h.b16 %v217
    %v1254 = vunpack.c.l.b16 %v218
    %v1255 = vunpack.c.h.b16 %v218
    %v1256 = vunpack.c.l.b16 %v219
    %v1257 = vunpack.c.h.b16 %v219
    %v1258 = vunpack.c.l.b16 %v220
    %v1259 = vunpack.c.h.b16 %v220
    %v1260 = vunpack.c.l.b16 %v221
    %v1261 = vunpack.c.h.b16 %v221
    %v1262 = vunpack.c.l.b16 %v222
    %v1263 = vunpack.c.h.b16 %v222
    %v1264 = vunpack.c.l.b16 %v223
    %v1265 = vunpack.c.h.b16 %v223
    %v1266 = vunpack.c.l.b16 %v224
    %v1267 = vunpack.c.h.b16 %v224
    %v1268 = vunpack.c.l.b16 %v225
    %v1269 = vunpack.c.h.b16 %v225
    %v1270 = vunpack.c.l.b16 %v226
    %v1271 = vunpack.c.h.b16 %v226
    %v1272 = vunpack.c.l.b16 %v227
    %v1273 = vunpack.c.h.b16 %v227
    %v1274 = vunpack.c.l.b16 %v228
    %v1275 = vunpack.c.h.b16 %v228
    %v1276 = vunpack.c.l.b16 %v229
    %v1277 = vunpack.c.h.b16 %v229
    %v1278 = vunpack.c.l.b16 %v230
    %v1279 = vunpack.c.h.b16 %v230
    %v1280 = vunpack.c.l.b16 %v231
    %v1281 = vunpack.c.h.b16 %v231
    %v1282 = vunpack.c.l.b16 %v232
    %v1283 = vunpack.c.h.b16 %v232
    %v1284 = vunpack.c.l.b16 %v233
    %v1285 = vunpack.c.h.b16 %v233
    %v1286 = vunpack.c.l.b16 %v234
    %v1287 = vunpack.c.h.b16 %v234
    %v1288 = vunpack.c.l.b16 %v235
    %v1289 = vunpack.c.h.b16 %v235
    %v1290 = vunpack.c.l.b16 %v236
    %v1291 = vunpack.c.h.b16 %v236
    %v1292 = vunpack.c.l.b16 %v237
    %v1293 = vunpack.c.h.b16 %v237
    %v1294 = vunpack.c.l.b16 %v238
    %v1295 = vunpack.c.h.b16 %v238
    %v1296 = vunpack.c.l.b16 %v239
    %v1297 = vunpack.c.h.b16 %v239
    %v1298 = vunpack.c.l.b16 %v240
    %v1299 = vunpack.c.h.b16 %v240
    %v1300 = vunpack.c.l.b16 %v241
    %v1301 = vunpack.c.h.b16 %v241
    %v1302 = vunpack.c.l.b16 %v242
    %v1303 = vunpack.c.h.b16 %v242
    %v1304 = vunpack.c.l.b16 %v243
    %v1305 = vunpack.c.h.b16 %v243
    %v1306 = vunpack.c.l.b16 %v244
    %v1307 = vunpack.c.h.b16 %v244
    %v1308 = vunpack.c.l.b16 %v245
    %v1309 = vunpack.c.h.b16 %v245
    %v1310 = vunpack.c.l.b16 %v246
    %v1311 = vunpack.c.h.b16 %v246
    %v1312 = vunpack.c.l.b16 %v247
    %v1313 = vunpack.c.h.b16 %v247
    %v1314 = vunpack.c.l.b16 %v248
    %v1315 = vunpack.c.h.b16 %v248
    %v1316 = vunpack.c.l.b16 %v249
    %v1317 = vunpack.c.h.b16 %v249
    %v1318 = vunpack.c.l.b16 %v250
    %v1319 = vunpack.c.h.b16 %v250
    %v1320 = vunpack.c.l.b16 %v251
    %v1321 = vunpack.c.h.b16 %v251
    %v1322 = vunpack.c.l.b16 %v252
    %v1323 = vunpack.c.h.b16 %v252
    %v1324 = vunpack.c.l.b16 %v253
    %v1325 = vunpack.c.h.b16 %v253
    %v1326 = vunpack.c.l.b16 %v254
    %v1327 = vunpack.c.h.b16 %v254
    %v1328 = vunpack.c.l.b16 %v255
    %v1329 = vunpack.c.h.b16 %v255
    %v1330 = vunpack.c.l.b16 %v256
    %v1331 = vunpack.c.h.b16 %v256
    %v1332 = vunpack.c.l.b16 %v257
    %v1333 = vunpack.c.h.b16 %v257
    %v1334 = vunpack.c.l.b16 %v258
    %v1335 = vunpack.c.h.b16 %v258
    %v1336 = vunpack.c.l.b16 %v259
    %v1337 = vunpack.c.h.b16 %v259
    %v1338 = vunpack.c.l.b16 %v260
    %v1339 = vunpack.c.h.b16 %v260
    %v1340 = vunpack.c.l.b16 %v261
    %v1341 = vunpack.c.h.b16 %v261
    %v1342 = vunpack.c.l.b16 %v262
    %v1343 = vunpack.c.h.b16 %v262
    %v1344 = vunpack.c.l.b16 %v263
    %v1345 = vunpack.c.h.b16 %v263
    %v1346 = vunpack.c.l.b16 %v264
    %v1347 = vunpack.c.h.b16 %v264
    %v1348 = vunpack.c.l.b16 %v265
    %v1349 = vunpack.c.h.b16 %v265
    %v1350 = vunpack.c.l.b16 %v266
    %v1351 = vunpack.c.h.b16 %v266
    %v1352 = vunpack.c.l.b16 %v267
    %v1353 = vunpack.c.h.b16 %v267
    %v1354 = vunpack.c.l.b16 %v268
    %v1355 = vunpack.c.h.b16 %v268
    %v1356 = vunpack.c.l.b16 %v269
    %v1357 = vunpack.c.h.b16 %v269
    %v1358 = vunpack.c.l.b16 %v270
    %v1359 = vunpack.c.h.b16 %v270
    %v1360 = vunpack.c.l.b16 %v271
    %v1361 = vunpack.c.h.b16 %v271
    %v1362 = vunpack.c.l.b16 %v272
    %v1363 = vunpack.c.h.b16 %v272
    %v1364 = vunpack.c.l.b16 %v273
    %v1365 = vunpack.c.h.b16 %v273
    %v1366 = vunpack.c.l.b16 %v274
    %v1367 = vunpack.c.h.b16 %v274
    %v1368 = vunpack.c.l.b16 %v275
    %v1369 = vunpack.c.h.b16 %v275
    %v1370 = vunpack.c.l.b16 %v276
    %v1371 = vunpack.c.h.b16 %v276
    %v1372 = vunpack.c.l.b16 %v277
    %v1373 = vunpack.c.h.b16 %v277
    %v1374 = vunpack.c.l.b16 %v278
    %v1375 = vunpack.c.h.b16 %v278
    %v1376 = vunpack.c.l.b16 %v279
    %v1377 = vunpack.c.h.b16 %v279
    %v1378 = vunpack.c.l.b16 %v280
    %v1379 = vunpack.c.h.b16 %v280
    %v1380 = vunpack.c.l.b16 %v281
    %v1381 = vunpack.c.h.b16 %v281
    %v1382 = vunpack.c.l.b16 %v282
    %v1383 = vunpack.c.h.b16 %v282
    %v1384 = vunpack.c.l.b16 %v283
    %v1385 = vunpack.c.h.b16 %v283
    %v1386 = vunpack.c.l.b16 %v284
    %v1387 = vunpack.c.h.b16 %v284
    %v1388 = vunpack.c.l.b16 %v285
    %v1389 = vunpack.c.h.b16 %v285
    %v1390 = vunpack.c.l.b16 %v286
    %v1391 = vunpack.c.h.b16 %v286
    %v1392 = vunpack.c.l.b16 %v287
    %v1393 = vunpack.c.h.b16 %v287
    %v1394 = vunpack.c.l.b16 %v288
    %v1395 = vunpack.c.h.b16 %v288
    %v1396 = vunpack.c.l.b16 %v289
    %v1397 = vunpack.c.h.b16 %v289
    %v1398 = vunpack.c.l.b16 %v290
    %v1399 = vunpack.c.h.b16 %v290
    %v1400 = vunpack.c.l.b16 %v291
    %v1401 = vunpack.c.h.b16 %v291
    %v1402 = vunpack.c.l.b16 %v292
    %v1403 = vunpack.c.h.b16 %v292
    %v1404 = vunpack.c.l.b16 %v293
    %v1405 = vunpack.c.h.b16 %v293
    %v1406 = vunpack.c.l.b16 %v294
    %v1407 = vunpack.c.h.b16 %v294
    %v1408 = vunpack.c.l.b16 %v295
    %v1409 = vunpack.c.h.b16 %v295
    %v1410 = vunpack.c.l.b16 %v296
    %v1411 = vunpack.c.h.b16 %v296
    %v1412 = vunpack.c.l.b16 %v297
    %v1413 = vunpack.c.h.b16 %v297
    %v1414 = vunpack.c.l.b16 %v298
    %v1415 = vunpack.c.h.b16 %v298
    %v1416 = vunpack.c.l.b16 %v299
    %v1417 = vunpack.c.h.b16 %v299
    %v1418 = vunpack.c.l.b16 %v300
    %v1419 = vunpack.c.h.b16 %v300
    %v1420 = vunpack.c.l.b16 %v301
    %v1421 = vunpack.c.h.b16 %v301
    %v1422 = vunpack.c.l.b16 %v302
    %v1423 = vunpack.c.h.b16 %v302
    %v1424 = vunpack.c.l.b16 %v303
    %v1425 = vunpack.c.h.b16 %v303
    %v1426 = vunpack.c.l.b16 %v304
    %v1427 = vunpack.c.h.b16 %v304
    %v1428 = vunpack.c.l.b16 %v305
    %v1429 = vunpack.c.h.b16 %v305
    %v1430 = vunpack.c.l.b16 %v306
    %v1431 = vunpack.c.h.b16 %v306
    %v1432 = vunpack.c.l.b16 %v307
    %v1433 = vunpack.c.h.b16 %v307
    %v1434 = vunpack.c.l.b16 %v308
    %v1435 = vunpack.c.h.b16 %v308
    %v1436 = vunpack.c.l.b16 %v309
    %v1437 = vunpack.c.h.b16 %v309
    %v1438 = vunpack.c.l.b16 %v310
    %v1439 = vunpack.c.h.b16 %v310
    %v1440 = vunpack.c.l.b16 %v311
    %v1441 = vunpack.c.h.b16 %v311
    %v1442 = vunpack.c.l.b16 %v312
    %v1443 = vunpack.c.h.b16 %v312
    %v1444 = vunpack.c.l.b16 %v313
    %v1445 = vunpack.c.h.b16 %v313
    %v1446 = vunpack.c.l.b16 %v314
    %v1447 = vunpack.c.h.b16 %v314
    %v1448 = vunpack.c.l.b16 %v315
    %v1449 = vunpack.c.h.b16 %v315
    %v1450 = vunpack.c.l.b16 %v316
    %v1451 = vunpack.c.h.b16 %v316
    %v1452 = vunpack.c.l.b16 %v317
    %v1453 = vunpack.c.h.b16 %v317
    %v1454 = vunpack.c.l.b16 %v318
    %v1455 = vunpack.c.h.b16 %v318
    %v1456 = vunpack.c.l.b16 %v319
    %v1457 = vunpack.c.h.b16 %v319
    %v1458 = vunpack.c.l.b16 %v320
    %v1459 = vunpack.c.h.b16 %v320
    %v1460 = vunpack.c.l.b16 %v321
    %v1461 = vunpack.c.h.b16 %v321
    %v1462 = vunpack.c.l.b16 %v322
    %v1463 = vunpack.c.h.b16 %v322
    %v1464 = vunpack.c.l.b16 %v323
    %v1465 = vunpack.c.h.b16 %v323
    %v1466 = vunpack.c.l.b16 %v324
    %v1467 = vunpack.c.h.b16 %v324
    %v1468 = vunpack.c.l.b16 %v325
    %v1469 = vunpack.c.h.b16 %v325
    %v1470 = vunpack.c.l.b16 %v326
    %v1471 = vunpack.c.h.b16 %v326
    %v1472 = vunpack.c.l.b16 %v327
    %v1473 = vunpack.c.h.b16 %v327
    %v1474 = vunpack.c.l.b16 %v328
    %v1475 = vunpack.c.h.b16 %v328
    %v1476 = vunpack.c.l.b16 %v329
    %v1477 = vunpack.c.h.b16 %v329
    %v1478 = vunpack.c.l.b16 %v330
    %v1479 = vunpack.c.h.b16 %v330
    %v1480 = vunpack.c.l.b16 %v331
    %v1481 = vunpack.c.h.b16 %v331
    %v1482 = vunpack.c.l.b16 %v332
    %v1483 = vunpack.c.h.b16 %v332
    %v1484 = vunpack.c.l.b16 %v333
    %v1485 = vunpack.c.h.b16 %v333
    %v1486 = vunpack.c.l.b16 %v334
    %v1487 = vunpack.c.h.b16 %v334
    %v1488 = vunpack.c.l.b16 %v335
    %v1489 = vunpack.c.h.b16 %v335
    %v1490 = vunpack.c.l.b16 %v336
    %v1491 = vunpack.c.h.b16 %v336
    %v1492 = vunpack.c.l.b16 %v337
    %v1493 = vunpack.c.h.b16 %v337
    %v1494 = vunpack.c.l.b16 %v338
    %v1495 = vunpack.c.h.b16 %v338
    %v1496 = vunpack.c.l.b16 %v339
    %v1497 = vunpack.c.h.b16 %v339
    %v1498 = vunpack.c.l.b16 %v340
    %v1499 = vunpack.c.h.b16 %v340
    %v1500 = vunpack.c.l.b16 %v341
    %v1501 = vunpack.c.h.b16 %v341
    %v1502 = vunpack.c.l.b16 %v342
    %v1503 = vunpack.c.h.b16 %v342
    %v1504 = vunpack.c.l.b16 %v343
    %v1505 = vunpack.c.h.b16 %v343
    %v1506 = vunpack.c.l.b16 %v344
    %v1507 = vunpack.c.h.b16 %v344
    %v1508 = vunpack.c.l.b16 %v345
    %v1509 = vunpack.c.h.b16 %v345
    %v1510 = vunpack.c.l.b16 %v346
    %v1511 = vunpack.c.h.b16 %v346
    %v1512 = vunpack.c.l.b16 %v347
    %v1513 = vunpack.c.h.b16 %v347
    %v1514 = vunpack.c.l.b16 %v348
    %v1515 = vunpack.c.h.b16 %v348
    %v1516 = vunpack.c.l.b16 %v349
    %v1517 = vunpack.c.h.b16 %v349
    %v1518 = vunpack.c.l.b16 %v350
    %v1519 = vunpack.c.h.b16 %v350
    %v1520 = vunpack.c.l.b16 %v351
    %v1521 = vunpack.c.h.b16 %v351
    %v1522 = vunpack.c.l.b16 %v352
    %v1523 = vunpack.c.h.b16 %v352
    %v1524 = vunpack.c.l.b16 %v353
    %v1525 = vunpack.c.h.b16 %v353
    %v1526 = vunpack.c.l.b16 %v354
    %v1527 = vunpack.c.h.b16 %v354
    %v1528 = vunpack.c.l.b16 %v355
    %v1529 = vunpack.c.h.b16 %v355
    %v1530 = vunpack.c.l.b16 %v356
    %v1531 = vunpack.c.h.b16 %v356
    %v1532 = vunpack.c.l.b16 %v357
    %v1533 = vunpack.c.h.b16 %v357
    %v1534 = vunpack.c.l.b16 %v358
    %v1535 = vunpack.c.h.b16 %v358
    %v1536 = vunpack.c.l.b16 %v359
    %v1537 = vunpack.c.h.b16 %v359
    %v1538 = vunpack.c.l.b16 %v360
    %v1539 = vunpack.c.h.b16 %v360
    %v1540 = vunpack.c.l.b16 %v361
    %v1541 = vunpack.c.h.b16 %v361
    %v1542 = vunpack.c.l.b16 %v362
    %v1543 = vunpack.c.h.b16 %v362
    %v1544 = vunpack.c.l.b16 %v363
    %v1545 = vunpack.c.h.b16 %v363
    %v1546 = vunpack.c.l.b16 %v364
    %v1547 = vunpack.c.h.b16 %v364
    %v1548 = vunpack.c.l.b16 %v365
    %v1549 = vunpack.c.h.b16 %v365
    %v1550 = vunpack.c.l.b16 %v366
    %v1551 = vunpack.c.h.b16 %v366
    %v1552 = vunpack.c.l.b16 %v367
    %v1553 = vunpack.c.h.b16 %v367
    %v1554 = vunpack.c.l.b16 %v368
    %v1555 = vunpack.c.h.b16 %v368
    %v1556 = vunpack.c.l.b16 %v369
    %v1557 = vunpack.c.h.b16 %v369
    %v1558 = vunpack.c.l.b16 %v370
    %v1559 = vunpack.c.h.b16 %v370
    %v1560 = vunpack.c.l.b16 %v371
    %v1561 = vunpack.c.h.b16 %v371
    %v1562 = vunpack.c.l.b16 %v372
    %v1563 = vunpack.c.h.b16 %v372
    %v1564 = vunpack.c.l.b16 %v373
    %v1565 = vunpack.c.h.b16 %v373
    %v1566 = vunpack.c.l.b16 %v374
    %v1567 = vunpack.c.h.b16 %v374
    %v1568 = vunpack.c.l.b16 %v375
    %v1569 = vunpack.c.h.b16 %v375
    %v1570 = vunpack.c.l.b16 %v376
    %v1571 = vunpack.c.h.b16 %v376
    %v1572 = vunpack.c.l.b16 %v377
    %v1573 = vunpack.c.h.b16 %v377
    %v1574 = vunpack.c.l.b16 %v378
    %v1575 = vunpack.c.h.b16 %v378
    %v1576 = vunpack.c.l.b16 %v379
    %v1577 = vunpack.c.h.b16 %v379
    %v1578 = vunpack.c.l.b16 %v380
    %v1579 = vunpack.c.h.b16 %v380
    %v1580 = vunpack.c.l.b16 %v381
    %v1581 = vunpack.c.h.b16 %v381
    %v1582 = vunpack.c.l.b16 %v382
    %v1583 = vunpack.c.h.b16 %v382
    %v1584 = vunpack.c.l.b16 %v383
    %v1585 = vunpack.c.h.b16 %v383
    %v1586 = vunpack.c.l.b16 %v384
    %v1587 = vunpack.c.h.b16 %v384
    %v1588 = vunpack.c.l.b16 %v385
    %v1589 = vunpack.c.h.b16 %v385
    %v1590 = vunpack.c.l.b16 %v386
    %v1591 = vunpack.c.h.b16 %v386
    %v1592 = vunpack.c.l.b16 %v387
    %v1593 = vunpack.c.h.b16 %v387
    %v1594 = vunpack.c.l.b16 %v388
    %v1595 = vunpack.c.h.b16 %v388
    %v1596 = vunpack.c.l.b16 %v389
    %v1597 = vunpack.c.h.b16 %v389
    %v1598 = vunpack.c.l.b16 %v390
    %v1599 = vunpack.c.h.b16 %v390
    %v1600 = vunpack.c.l.b16 %v391
    %v1601 = vunpack.c.h.b16 %v391
    %v1602 = vunpack.c.l.b16 %v392
    %v1603 = vunpack.c.h.b16 %v392
    %v1604 = vunpack.c.l.b16 %v393
    %v1605 = vunpack.c.h.b16 %v393
    %v1606 = vunpack.c.l.b16 %v394
    %v1607 = vunpack.c.h.b16 %v394
    %v1608 = vunpack.c.l.b16 %v395
    %v1609 = vunpack.c.h.b16 %v395
    %v1610 = vunpack.c.l.b16 %v396
    %v1611 = vunpack.c.h.b16 %v396
    %v1612 = vunpack.c.l.b16 %v397
    %v1613 = vunpack.c.h.b16 %v397
    %v1614 = vunpack.c.l.b16 %v398
    %v1615 = vunpack.c.h.b16 %v398
    %v1616 = vunpack.c.l.b16 %v399
    %v1617 = vunpack.c.h.b16 %v399
    %v1618 = vunpack.c.l.b16 %v400
    %v1619 = vunpack.c.h.b16 %v400
    %v1620 = vunpack.c.l.b16 %v401
    %v1621 = vunpack.c.h.b16 %v401
    %v1622 = vunpack.c.l.b16 %v402
    %v1623 = vunpack.c.h.b16 %v402
    %v1624 = vunpack.c.l.b16 %v403
    %v1625 = vunpack.c.h.b16 %v403
    %v1626 = vunpack.c.l.b16 %v404
    %v1627 = vunpack.c.h.b16 %v404
    %v1628 = vunpack.c.l.b16 %v405
    %v1629 = vunpack.c.h.b16 %v405
    %v1630 = vunpack.c.l.b16 %v406
    %v1631 = vunpack.c.h.b16 %v406
    %v1632 = vunpack.c.l.b16 %v407
    %v1633 = vunpack.c.h.b16 %v407
    %v1634 = vunpack.c.l.b16 %v408
    %v1635 = vunpack.c.h.b16 %v408
    %v1636 = vunpack.c.l.b16 %v409
    %v1637 = vunpack.c.h.b16 %v409
    %v1638 = vunpack.c.l.b16 %v410
    %v1639 = vunpack.c.h.b16 %v410
    %v1640 = vunpack.c.l.b16 %v411
    %v1641 = vunpack.c.h.b16 %v411
    %v1642 = vunpack.c.l.b16 %v412
    %v1643 = vunpack.c.h.b16 %v412
    %v1644 = vunpack.c.l.b16 %v413
    %v1645 = vunpack.c.h.b16 %v413
    %v1646 = vunpack.c.l.b16 %v414
    %v1647 = vunpack.c.h.b16 %v414
    %v1648 = vunpack.c.l.b16 %v415
    %v1649 = vunpack.c.h.b16 %v415
    %v1650 = vunpack.c.l.b16 %v416
    %v1651 = vunpack.c.h.b16 %v416
    %v1652 = vunpack.c.l.b16 %v417
    %v1653 = vunpack.c.h.b16 %v417
    %v1654 = vunpack.c.l.b16 %v418
    %v1655 = vunpack.c.h.b16 %v418
    %v1656 = vunpack.c.l.b16 %v419
    %v1657 = vunpack.c.h.b16 %v419
    %v1658 = vunpack.c.l.b16 %v420
    %v1659 = vunpack.c.h.b16 %v420
    %v1660 = vunpack.c.l.b16 %v421
    %v1661 = vunpack.c.h.b16 %v421
    %v1662 = vunpack.c.l.b16 %v422
    %v1663 = vunpack.c.h.b16 %v422
    %v1664 = vunpack.c.l.b16 %v423
    %v1665 = vunpack.c.h.b16 %v423
    %v1666 = vunpack.c.l.b16 %v424
    %v1667 = vunpack.c.h.b16 %v424
    %v1668 = vunpack.c.l.b16 %v425
    %v1669 = vunpack.c.h.b16 %v425
    %v1670 = vunpack.c.l.b16 %v426
    %v1671 = vunpack.c.h.b16 %v426
    %v1672 = vunpack.c.l.b16 %v427
    %v1673 = vunpack.c.h.b16 %v427
    %v1674 = vunpack.c.l.b16 %v428
    %v1675 = vunpack.c.h.b16 %v428
    %v1676 = vunpack.c.l.b16 %v429
    %v1677 = vunpack.c.h.b16 %v429
    %v1678 = vunpack.c.l.b16 %v430
    %v1679 = vunpack.c.h.b16 %v430
    %v1680 = vunpack.c.l.b16 %v431
    %v1681 = vunpack.c.h.b16 %v431
    %v1682 = vunpack.c.l.b16 %v432
    %v1683 = vunpack.c.h.b16 %v432
    %v1684 = vunpack.c.l.b16 %v433
    %v1685 = vunpack.c.h.b16 %v433
    %v1686 = vunpack.c.l.b16 %v434
    %v1687 = vunpack.c.h.b16 %v434
    %v1688 = vunpack.c.l.b16 %v435
    %v1689 = vunpack.c.h.b16 %v435
    %v1690 = vunpack.c.l.b16 %v436
    %v1691 = vunpack.c.h.b16 %v436
    %v1692 = vunpack.c.l.b16 %v437
    %v1693 = vunpack.c.h.b16 %v437
    %v1694 = vunpack.c.l.b16 %v438
    %v1695 = vunpack.c.h.b16 %v438
    %v1696 = vunpack.c.l.b16 %v439
    %v1697 = vunpack.c.h.b16 %v439
    %v1698 = vunpack.c.l.b16 %v440
    %v1699 = vunpack.c.h.b16 %v440
    %v1700 = vunpack.c.l.b16 %v441
    %v1701 = vunpack.c.h.b16 %v441
    %v1702 = vunpack.c.l.b16 %v442
    %v1703 = vunpack.c.h.b16 %v442
    %v1704 = vunpack.c.l.b16 %v443
    %v1705 = vunpack.c.h.b16 %v443
    %v1706 = vunpack.c.l.b16 %v444
    %v1707 = vunpack.c.h.b16 %v444
    %v1708 = vunpack.c.l.b16 %v445
    %v1709 = vunpack.c.h.b16 %v445
    %v1710 = vunpack.c.l.b16 %v446
    %v1711 = vunpack.c.h.b16 %v446
    %v1712 = vunpack.c.l.b16 %v447
    %v1713 = vunpack.c.h.b16 %v447
    %v1714 = vunpack.c.l.b16 %v448
    %v1715 = vunpack.c.h.b16 %v448
    %v1716 = vunpack.c.l.b16 %v449
    %v1717 = vunpack.c.h.b16 %v449
    %v1718 = vunpack.c.l.b16 %v450
    %v1719 = vunpack.c.h.b16 %v450
    %v1720 = vunpack.c.l.b16 %v451
    %v1721 = vunpack.c.h.b16 %v451
    %v1722 = vunpack.c.l.b16 %v452
    %v1723 = vunpack.c.h.b16 %v452
    %v1724 = vunpack.c.l.b16 %v453
    %v1725 = vunpack.c.h.b16 %v453
    %v1726 = vunpack.c.l.b16 %v454
    %v1727 = vunpack.c.h.b16 %v454
    %v1728 = vunpack.c.l.b16 %v455
    %v1729 = vunpack.c.h.b16 %v455
    %v1730 = vunpack.c.l.b16 %v456
    %v1731 = vunpack.c.h.b16 %v456
    %v1732 = vunpack.c.l.b16 %v457
    %v1733 = vunpack.c.h.b16 %v457
    %v1734 = vunpack.c.l.b16 %v458
    %v1735 = vunpack.c.h.b16 %v458
    %v1736 = vunpack.c.l.b16 %v459
    %v1737 = vunpack.c.h.b16 %v459
    %v1738 = vunpack.c.l.b16 %v460
    %v1739 = vunpack.c.h.b16 %v460
    %v1740 = vunpack.c.l.b16 %v461
    %v1741 = vunpack.c.h.b16 %v461
    %v1742 = vunpack.c.l.b16 %v462
    %v1743 = vunpack.c.h.b16 %v462
    %v1744 = vunpack.c.l.b16 %v463
    %v1745 = vunpack.c.h.b16 %v463
    %v1746 = vunpack.c.l.b16 %v464
    %v1747 = vunpack.c.h.b16 %v464
    %v1748 = vunpack.c.l.b16 %v465
    %v1749 = vunpack.c.h.b16 %v465
    %v1750 = vunpack.c.l.b16 %v466
    %v1751 = vunpack.c.h.b16 %v466
    %v1752 = vunpack.c.l.b16 %v467
    %v1753 = vunpack.c.h.b16 %v467
    %v1754 = vunpack.c.l.b16 %v468
    %v1755 = vunpack.c.h.b16 %v468
    %v1756 = vunpack.c.l.b16 %v469
    %v1757 = vunpack.c.h.b16 %v469
    %v1758 = vunpack.c.l.b16 %v470
    %v1759 = vunpack.c.h.b16 %v470
    %v1760 = vunpack.c.l.b16 %v471
    %v1761 = vunpack.c.h.b16 %v471
    %v1762 = vunpack.c.l.b16 %v472
    %v1763 = vunpack.c.h.b16 %v472
    %v1764 = vunpack.c.l.b16 %v473
    %v1765 = vunpack.c.h.b16 %v473
    %v1766 = vunpack.c.l.b16 %v474
    %v1767 = vunpack.c.h.b16 %v474
    %v1768 = vunpack.c.l.b16 %v475
    %v1769 = vunpack.c.h.b16 %v475
    %v1770 = vunpack.c.l.b16 %v476
    %v1771 = vunpack.c.h.b16 %v476
    %v1772 = vunpack.c.l.b16 %v477
    %v1773 = vunpack.c.h.b16 %v477
    %v1774 = vunpack.c.l.b16 %v478
    %v1775 = vunpack.c.h.b16 %v478
    %v1776 = vunpack.c.l.b16 %v479
    %v1777 = vunpack.c.h.b16 %v479
    %v1778 = vunpack.c.l.b16 %v480
    %v1779 = vunpack.c.h.b16 %v480
    %v1780 = vunpack.c.l.b16 %v481
    %v1781 = vunpack.c.h.b16 %v481
    %v1782 = vunpack.c.l.b16 %v482
    %v1783 = vunpack.c.h.b16 %v482
    %v1784 = vunpack.c.l.b16 %v483
    %v1785 = vunpack.c.h.b16 %v483
    %v1786 = vunpack.c.l.b16 %v484
    %v1787 = vunpack.c.h.b16 %v484
    %v1788 = vunpack.c.l.b16 %v485
    %v1789 = vunpack.c.h.b16 %v485
    %v1790 = vunpack.c.l.b16 %v486
    %v1791 = vunpack.c.h.b16 %v486
    %v1792 = vunpack.c.l.b16 %v487
    %v1793 = vunpack.c.h.b16 %v487
    %v1794 = vunpack.c.l.b16 %v488
    %v1795 = vunpack.c.h.b16 %v488
    %v1796 = vunpack.c.l.b16 %v489
    %v1797 = vunpack.c.h.b16 %v489
    %v1798 = vunpack.c.l.b16 %v490
    %v1799 = vunpack.c.h.b16 %v490
    %v1800 = vunpack.c.l.b16 %v491
    %v1801 = vunpack.c.h.b16 %v491
    %v1802 = vunpack.c.l.b16 %v492
    %v1803 = vunpack.c.h.b16 %v492
    %v1804 = vunpack.c.l.b16 %v493
    %v1805 = vunpack.c.h.b16 %v493
    %v1806 = vunpack.c.l.b16 %v494
    %v1807 = vunpack.c.h.b16 %v494
    %v1808 = vunpack.c.l.b16 %v495
    %v1809 = vunpack.c.h.b16 %v495
    %v1810 = vunpack.c.l.b16 %v496
    %v1811 = vunpack.c.h.b16 %v496
    %v1812 = vunpack.c.l.b16 %v497
    %v1813 = vunpack.c.h.b16 %v497
    %v1814 = vunpack.c.l.b16 %v498
    %v1815 = vunpack.c.h.b16 %v498
    %v1816 = vunpack.c.l.b16 %v499
    %v1817 = vunpack.c.h.b16 %v499
    %v1818 = vunpack.c.l.b16 %v500
    %v1819 = vunpack.c.h.b16 %v500
    %v1820 = vunpack.c.l.b16 %v501
    %v1821 = vunpack.c.h.b16 %v501
    %v1822 = vunpack.c.l.b16 %v502
    %v1823 = vunpack.c.h.b16 %v502
    %v1824 = vunpack.c.l.b16 %v503
    %v1825 = vunpack.c.h.b16 %v503
    %v1826 = vunpack.c.l.b16 %v504
    %v1827 = vunpack.c.h.b16 %v504
    %v1828 = vunpack.c.l.b16 %v505
    %v1829 = vunpack.c.h.b16 %v505
    %v1830 = vunpack.c.l.b16 %v506
    %v1831 = vunpack.c.h.b16 %v506
    %v1832 = vunpack.c.l.b16 %v507
    %v1833 = vunpack.c.h.b16 %v507
    %v1834 = vunpack.c.l.b16 %v508
    %v1835 = vunpack.c.h.b16 %v508
    %v1836 = vunpack.c.l.b16 %v509
    %v1837 = vunpack.c.h.b16 %v509
    %v1838 = vunpack.c.l.b16 %v510
    %v1839 = vunpack.c.h.b16 %v510
    %v1840 = vunpack.c.l.b16 %v511
    %v1841 = vunpack.c.h.b16 %v511
    %v1842 = vunpack.c.l.b16 %v512
    %v1843 = vunpack.c.h.b16 %v512
    %v1844 = vunpack.c.l.b16 %v513
    %v1845 = vunpack.c.h.b16 %v513
    %v1846 = vunpack.c.l.b16 %v514
    %v1847 = vunpack.c.h.b16 %v514
    %v1848 = vunpack.c.l.b16 %v515
    %v1849 = vunpack.c.h.b16 %v515
    %v1850 = vunpack.c.l.b16 %v516
    %v1851 = vunpack.c.h.b16 %v516
    %v1852 = vunpack.c.l.b16 %v517
    %v1853 = vunpack.c.h.b16 %v517
    %v1854 = vunpack.c.l.b16 %v518
    %v1855 = vunpack.c.h.b16 %v518
    %v1856 = vunpack.c.l.b16 %v519
    %v1857 = vunpack.c.h.b16 %v519
    %v1858 = vunpack.c.l.b16 %v520
    %v1859 = vunpack.c.h.b16 %v520
    %v1860 = vunpack.c.l.b16 %v521
    %v1861 = vunpack.c.h.b16 %v521
    %v1862 = vunpack.c.l.b16 %v522
    %v1863 = vunpack.c.h.b16 %v522
    %v1864 = vunpack.c.l.b16 %v523
    %v1865 = vunpack.c.h.b16 %v523
    %v1866 = vunpack.c.l.b16 %v524
    %v1867 = vunpack.c.h.b16 %v524
    %v1868 = vunpack.c.l.b16 %v525
    %v1869 = vunpack.c.h.b16 %v525
    %v1870 = vunpack.c.l.b16 %v526
    %v1871 = vunpack.c.h.b16 %v526
    %v1872 = vunpack.c.l.b16 %v527
    %v1873 = vunpack.c.h.b16 %v527
    %v1874 = vunpack.c.l.b16 %v528
    %v1875 = vunpack.c.h.b16 %v528
    %v1876 = vunpack.c.l.b16 %v529
    %v1877 = vunpack.c.h.b16 %v529
    %v1878 = vunpack.c.l.b16 %v530
    %v1879 = vunpack.c.h.b16 %v530
    %v1880 = vunpack.c.l.b16 %v531
    %v1881 = vunpack.c.h.b16 %v531
    %v1882 = vunpack.c.l.b16 %v532
    %v1883 = vunpack.c.h.b16 %v532
    %v1884 = vunpack.c.l.b16 %v533
    %v1885 = vunpack.c.h.b16 %v533
    %v1886 = vunpack.c.l.b16 %v534
    %v1887 = vunpack.c.h.b16 %v534
    %v1888 = vunpack.c.l.b16 %v535
    %v1889 = vunpack.c.h.b16 %v535
    %v1890 = vunpack.c.l.b16 %v536
    %v1891 = vunpack.c.h.b16 %v536
    %v1892 = vunpack.c.l.b16 %v537
    %v1893 = vunpack.c.h.b16 %v537
    %v1894 = vunpack.c.l.b16 %v538
    %v1895 = vunpack.c.h.b16 %v538
    %v1896 = vunpack.c.l.b16 %v539
    %v1897 = vunpack.c.h.b16 %v539
    %v1898 = vunpack.c.l.b16 %v540
    %v1899 = vunpack.c.h.b16 %v540
    %v1900 = vunpack.c.l.b16 %v541
    %v1901 = vunpack.c.h.b16 %v541
    %v1902 = vunpack.c.l.b16 %v542
    %v1903 = vunpack.c.h.b16 %v542
    %v1904 = vunpack.c.l.b16 %v543
    %v1905 = vunpack.c.h.b16 %v543
    %v1906 = vunpack.c.l.b16 %v544
    %v1907 = vunpack.c.h.b16 %v544
    %v1908 = vunpack.c.l.b16 %v545
    %v1909 = vunpack.c.h.b16 %v545
    %v1910 = vunpack.c.l.b16 %v546
    %v1911 = vunpack.c.h.b16 %v546
    %v1912 = vunpack.c.l.b16 %v547
    %v1913 = vunpack.c.h.b16 %v547
    %v1914 = vunpack.c.l.b16 %v548
    %v1915 = vunpack.c.h.b16 %v548
    %v1916 = vunpack.c.l.b16 %v549
    %v1917 = vunpack.c.h.b16 %v549
    %v1918 = vunpack.c.l.b16 %v550
    %v1919 = vunpack.c.h.b16 %v550
    %v1920 = vunpack.c.l.b16 %v551
    %v1921 = vunpack.c.h.b16 %v551
    %v1922 = vunpack.c.l.b16 %v552
    %v1923 = vunpack.c.h.b16 %v552
    %v1924 = vunpack.c.l.b16 %v553
    %v1925 = vunpack.c.h.b16 %v553
    %v1926 = vunpack.c.l.b16 %v554
    %v1927 = vunpack.c.h.b16 %v554
    %v1928 = vunpack.c.l.b16 %v555
    %v1929 = vunpack.c.h.b16 %v555
    %v1930 = vunpack.c.l.b16 %v556
    %v1931 = vunpack.c.h.b16 %v556
    %v1932 = vunpack.c.l.b16 %v557
    %v1933 = vunpack.c.h.b16 %v557
    %v1934 = vunpack.c.l.b16 %v558
    %v1935 = vunpack.c.h.b16 %v558
    %v1936 = vunpack.c.l.b16 %v559
    %v1937 = vunpack.c.h.b16 %v559
    %v1938 = vunpack.c.l.b16 %v560
    %v1939 = vunpack.c.h.b16 %v560
    %v1940 = vunpack.c.l.b16 %v561
    %v1941 = vunpack.c.h.b16 %v561
    %v1942 = vunpack.c.l.b16 %v562
    %v1943 = vunpack.c.h.b16 %v562
    %v1944 = vunpack.c.l.b16 %v563
    %v1945 = vunpack.c.h.b16 %v563
    %v1946 = vunpack.c.l.b16 %v564
    %v1947 = vunpack.c.h.b16 %v564
    %v1948 = vunpack.c.l.b16 %v565
    %v1949 = vunpack.c.h.b16 %v565
    %v1950 = vunpack.c.l.b16 %v566
    %v1951 = vunpack.c.h.b16 %v566
    %v1952 = vunpack.c.l.b16 %v567
    %v1953 = vunpack.c.h.b16 %v567
    %v1954 = vunpack.c.l.b16 %v568
    %v1955 = vunpack.c.h.b16 %v568
    %v1956 = vunpack.c.l.b16 %v569
    %v1957 = vunpack.c.h.b16 %v569
    %v1958 = vunpack.c.l.b16 %v570
    %v1959 = vunpack.c.h.b16 %v570
    %v1960 = vunpack.c.l.b16 %v571
    %v1961 = vunpack.c.h.b16 %v571
    %v1962 = vunpack.c.l.b16 %v572
    %v1963 = vunpack.c.h.b16 %v572
    %v1964 = vunpack.c.l.b16 %v573
    %v1965 = vunpack.c.h.b16 %v573
    %v1966 = vunpack.c.l.b16 %v574
    %v1967 = vunpack.c.h.b16 %v574
    %v1968 = vunpack.c.l.b16 %v575
    %v1969 = vunpack.c.h.b16 %v575
    %v1970 = vunpack.c.l.b16 %v576
    %v1971 = vunpack.c.h.b16 %v576
    %v1972 = vunpack.c.l.b16 %v577
    %v1973 = vunpack.c.h.b16 %v577
    %v1974 = vunpack.c.l.b16 %v578
    %v1975 = vunpack.c.h.b16 %v578
    %v1976 = vunpack.c.l.b16 %v579
    %v1977 = vunpack.c.h.b16 %v579
    %v1978 = vunpack.c.l.b16 %v580
    %v1979 = vunpack.c.h.b16 %v580
    %v1980 = vunpack.c.l.b16 %v581
    %v1981 = vunpack.c.h.b16 %v581
    %v1982 = vunpack.c.l.b16 %v582
    %v1983 = vunpack.c.h.b16 %v582
    %v1984 = vunpack.c.l.b16 %v583
    %v1985 = vunpack.c.h.b16 %v583
    %v1986 = vunpack.c.l.b16 %v584
    %v1987 = vunpack.c.h.b16 %v584
    %v1988 = vunpack.c.l.b16 %v585
    %v1989 = vunpack.c.h.b16 %v585
    %v1990 = vunpack.c.l.b16 %v586
    %v1991 = vunpack.c.h.b16 %v586
    %v1992 = vunpack.c.l.b16 %v587
    %v1993 = vunpack.c.h.b16 %v587
    %v1994 = vunpack.c.l.b16 %v588
    %v1995 = vunpack.c.h.b16 %v588
    %v1996 = vunpack.c.l.b16 %v589
    %v1997 = vunpack.c.h.b16 %v589
    %v1998 = vunpack.c.l.b16 %v590
    %v1999 = vunpack.c.h.b16 %v590
    %v2000 = vunpack.c.l.b16 %v591
    %v2001 = vunpack.c.h.b16 %v591
    %v2002 = vunpack.c.l.b16 %v592
    %v2003 = vunpack.c.h.b16 %v592
    %v2004 = vunpack.c.l.b16 %v593
    %v2005 = vunpack.c.h.b16 %v593
    %v2006 = vunpack.c.l.b16 %v594
    %v2007 = vunpack.c.h.b16 %v594
    %v2008 = vunpack.c.l.b16 %v595
    %v2009 = vunpack.c.h.b16 %v595
    %v2010 = vunpack.c.l.b16 %v596
    %v2011 = vunpack.c.h.b16 %v596
    %v2012 = vunpack.c.l.b16 %v597
    %v2013 = vunpack.c.h.b16 %v597
    %v2014 = vunpack.c.l.b16 %v598
    %v2015 = vunpack.c.h.b16 %v598
    %v2016 = vunpack.c.l.b16 %v599
    %v2017 = vunpack.c.h.b16 %v599
    %v2018 = vunpack.c.l.b16 %v600
    %v2019 = vunpack.c.h.b16 %v600
    %v2020 = vunpack.c.l.b16 %v601
    %v2021 = vunpack.c.h.b16 %v601
    %v2022 = vunpack.c.l.b16 %v602
    %v2023 = vunpack.c.h.b16 %v602
    %v2024 = vunpack.c.l.b16 %v603
    %v2025 = vunpack.c.h.b16 %v603
    %v2026 = vpack.c.b16 %v1138, %v1130
    %v2027 = vpack.c.b16 %v1139, %v1131
    %v2028 = vpack.c.b16 %v1140, %v1132
    %v2029 = vpack.c.b16 %v1141, %v1133
    %v2030 = vpack.c.b16 %v1142, %v1134
    %v2031 = vpack.c.b16 %v1143, %v1135
    %v2032 = vpack.c.b16 %v1144, %v1136
    %v2033 = vpack.c.b16 %v1145, %v1137
    %v2034 = vpack.c.b16 %v1154, %v1146
    %v2035 = vpack.c.b16 %v1155, %v1147
    %v2036 = vpack.c.b16 %v1156, %v1148
    %v2037 = vpack.c.b16 %v1157, %v1149
    %v2038 = vpack.c.b16 %v1158, %v1150
    %v2039 = vpack.c.b16 %v1159, %v1151
    %v2040 = vpack.c.b16 %v1160, %v1152
    %v2041 = vpack.c.b16 %v1161, %v1153
    %v2042 = vpack.c.b16 %v1170, %v1162
    %v2043 = vpack.c.b16 %v1171, %v1163
    %v2044 = vpack.c.b16 %v1172, %v1164
    %v2045 = vpack.c.b16 %v1173, %v1165
    %v2046 = vpack.c.b16 %v1174, %v1166
    %v2047 = vpack.c.b16 %v1175, %v1167
    %v2048 = vpack.c.b16 %v1176, %v1168
    %v2049 = vpack.c.b16 %v1177, %v1169
    %v2050 = vpack.c.b16 %v1186, %v1178
    %v2051 = vpack.c.b16 %v1187, %v1179
    %v2052 = vpack.c.b16 %v1188, %v1180
    %v2053 = vpack.c.b16 %v1189, %v1181
    %v2054 = vpack.c.b16 %v1190, %v1182
    %v2055 = vpack.c.b16 %v1191, %v1183
    %v2056 = vpack.c.b16 %v1192, %v1184
    %v2057 = vpack.c.b16 %v1193, %v1185
    %v2058 = vpack.c.b16 %v1202, %v1194
    %v2059 = vpack.c.b16 %v1203, %v1195
    %v2060 = vpack.c.b16 %v1204, %v1196
    %v2061 = vpack.c.b16 %v1205, %v1197
    %v2062 = vpack.c.b16 %v1206, %v1198
    %v2063 = vpack.c.b16 %v1207, %v1199
    %v2064 = vpack.c.b16 %v1208, %v1200
    %v2065 = vpack.c.b16 %v1209, %v1201
    %v2066 = vpack.c.b16 %v1218, %v1210
    %v2067 = vpack.c.b16 %v1219, %v1211
    %v2068 = vpack.c.b16 %v1220, %v1212
    %v2069 = vpack.c.b16 %v1221, %v1213
    %v2070 = vpack.c.b16 %v1222, %v1214
    %v2071 = vpack.c.b16 %v1223, %v1215
    %v2072 = vpack.c.b16 %v1224, %v1216
    %v2073 = vpack.c.b16 %v1225, %v1217
    %v2074 = vpack.c.b16 %v1234, %v1226
    %v2075 = vpack.c.b16 %v1235, %v1227
    %v2076 = vpack.c.b16 %v1236, %v1228
    %v2077 = vpack.c.b16 %v1237, %v1229
    %v2078 = vpack.c.b16 %v1238, %v1230
    %v2079 = vpack.c.b16 %v1239, %v1231
    %v2080 = vpack.c.b16 %v1240, %v1232
    %v2081 = vpack.c.b16 %v1241, %v1233
    %v2082 = vpack.c.b16 %v1250, %v1242
    %v2083 = vpack.c.b16 %v1251, %v1243
    %v2084 = vpack.c.b16 %v1252, %v1244
    %v2085 = vpack.c.b16 %v1253, %v1245
    %v2086 = vpack.c.b16 %v1254, %v1246
    %v2087 = vpack.c.b16 %v1255, %v1247
    %v2088 = vpack.c.b16 %v1256, %v1248
    %v2089 = vpack.c.b16 %v1257, %v1249
    %v2090 = vpack.c.b16 %v1266, %v1258
    %v2091 = vpack.c.b16 %v1267, %v1259
    %v2092 = vpack.c.b16 %v1268, %v1260
    %v2093 = vpack.c.b16 %v1269, %v1261
    %v2094 = vpack.c.b16 %v1270, %v1262
    %v2095 = vpack.c.b16 %v1271, %v1263
    %v2096 = vpack.c.b16 %v1272, %v1264
    %v2097 = vpack.c.b16 %v1273, %v1265
    %v2098 = vpack.c.b16 %v1282, %v1274
    %v2099 = vpack.c.b16 %v1283, %v1275
    %v2100 = vpack.c.b16 %v1284, %v1276
    %v2101 = vpack.c.b16 %v1285, %v1277
    %v2102 = vpack.c.b16 %v1286, %v1278
    %v2103 = vpack.c.b16 %v1287, %v1279
    %v2104 = vpack.c.b16 %v1288, %v1280
    %v2105 = vpack.c.b16 %v1289, %v1281
    %v2106 = vpack.c.b16 %v1298, %v1290
    %v2107 = vpack.c.b16 %v1299, %v1291
    %v2108 = vpack.c.b16 %v1300, %v1292
    %v2109 = vpack.c.b16 %v1301, %v1293
    %v2110 = vpack.c.b16 %v1302, %v1294
    %v2111 = vpack.c.b16 %v1303, %v1295
    %v2112 = vpack.c.b16 %v1304, %v1296
    %v2113 = vpack.c.b16 %v1305, %v1297
    %v2114 = vpack.c.b16 %v1314, %v1306
    %v2115 = vpack.c.b16 %v1315, %v1307
    %v2116 = vpack.c.b16 %v1316, %v1308
    %v2117 = vpack.c.b16 %v1317, %v1309
    %v2118 = vpack.c.b16 %v1318, %v1310
    %v2119 = vpack.c.b16 %v1319, %v1311
    %v2120 = vpack.c.b16 %v1320, %v1312
    %v2121 = vpack.c.b16 %v1321, %v1313
    %v2122 = vpack.c.b16 %v1330, %v1322
    %v2123 = vpack.c.b16 %v1331, %v1323
    %v2124 = vpack.c.b16 %v1332, %v1324
    %v2125 = vpack.c.b16 %v1333, %v1325
    %v2126 = vpack.c.b16 %v1334, %v1326
    %v2127 = vpack.c.b16 %v1335, %v1327
    %v2128 = vpack.c.b16 %v1336, %v1328
    %v2129 = vpack.c.b16 %v1337, %v1329
    %v2130 = vpack.c.b16 %v1346, %v1338
    %v2131 = vpack.c.b16 %v1347, %v1339
    %v2132 = vpack.c.b16 %v1348, %v1340
    %v2133 = vpack.c.b16 %v1349, %v1341
    %v2134 = vpack.c.b16 %v1350, %v1342
    %v2135 = vpack.c.b16 %v1351, %v1343
    %v2136 = vpack.c.b16 %v1352, %v1344
    %v2137 = vpack.c.b16 %v1353, %v1345
    %v2138 = vpack.c.b16 %v1362, %v1354
    %v2139 = vpack.c.b16 %v1363, %v1355
    %v2140 = vpack.c.b16 %v1364, %v1356
    %v2141 = vpack.c.b16 %v1365, %v1357
    %v2142 = vpack.c.b16 %v1366, %v1358
    %v2143 = vpack.c.b16 %v1367, %v1359
    %v2144 = vpack.c.b16 %v1368, %v1360
    %v2145 = vpack.c.b16 %v1369, %v1361
    %v2146 = vpack.c.b16 %v1378, %v1370
    %v2147 = vpack.c.b16 %v1379, %v1371
    %v2148 = vpack.c.b16 %v1380, %v1372
    %v2149 = vpack.c.b16 %v1381, %v1373
    %v2150 = vpack.c.b16 %v1382, %v1374
    %v2151 = vpack.c.b16 %v1383, %v1375
    %v2152 = vpack.c.b16 %v1384, %v1376
    %v2153 = vpack.c.b16 %v1385, %v1377
    %v2154 = vpack.c.b16 %v1394, %v1386
    %v2155 = vpack.c.b16 %v1395, %v1387
    %v2156 = vpack.c.b16 %v1396, %v1388
    %v2157 = vpack.c.b16 %v1397, %v1389
    %v2158 = vpack.c.b16 %v1398, %v1390
    %v2159 = vpack.c.b16 %v1399, %v1391
    %v2160 = vpack.c.b16 %v1400, %v1392
    %v2161 = vpack.c.b16 %v1401, %v1393
    %v2162 = vpack.c.b16 %v1410, %v1402
    %v2163 = vpack.c.b16 %v1411, %v1403
    %v2164 = vpack.c.b16 %v1412, %v1404
    %v2165 = vpack.c.b16 %v1413, %v1405
    %v2166 = vpack.c.b16 %v1414, %v1406
    %v2167 = vpack.c.b16 %v1415, %v1407
    %v2168 = vpack.c.b16 %v1416, %v1408
    %v2169 = vpack.c.b16 %v1417, %v1409
    %v2170 = vpack.c.b16 %v1426, %v1418
    %v2171 = vpack.c.b16 %v1427, %v1419
    %v2172 = vpack.c.b16 %v1428, %v1420
    %v2173 = vpack.c.b16 %v1429, %v1421
    %v2174 = vpack.c.b16 %v1430, %v1422
    %v2175 = vpack.c.b16 %v1431, %v1423
    %v2176 = vpack.c.b16 %v1432, %v1424
    %v2177 = vpack.c.b16 %v1433, %v1425
    %v2178 = vpack.c.b16 %v1442, %v1434
    %v2179 = vpack.c.b16 %v1443, %v1435
    %v2180 = vpack.c.b16 %v1444, %v1436
    %v2181 = vpack.c.b16 %v1445, %v1437
    %v2182 = vpack.c.b16 %v1446, %v1438
    %v2183 = vpack.c.b16 %v1447, %v1439
    %v2184 = vpack.c.b16 %v1448, %v1440
    %v2185 = vpack.c.b16 %v1449, %v1441
    %v2186 = vpack.c.b16 %v1458, %v1450
    %v2187 = vpack.c.b16 %v1459, %v1451
    %v2188 = vpack.c.b16 %v1460, %v1452
    %v2189 = vpack.c.b16 %v1461, %v1453
    %v2190 = vpack.c.b16 %v1462, %v1454
    %v2191 = vpack.c.b16 %v1463, %v1455
    %v2192 = vpack.c.b16 %v1464, %v1456
    %v2193 = vpack.c.b16 %v1465, %v1457
    %v2194 = vpack.c.b16 %v1474, %v1466
    %v2195 = vpack.c.b16 %v1475, %v1467
    %v2196 = vpack.c.b16 %v1476, %v1468
    %v2197 = vpack.c.b16 %v1477, %v1469
    %v2198 = vpack.c.b16 %v1478, %v1470
    %v2199 = vpack.c.b16 %v1479, %v1471
    %v2200 = vpack.c.b16 %v1480, %v1472
    %v2201 = vpack.c.b16 %v1481, %v1473
    %v2202 = vpack.c.b16 %v1490, %v1482
    %v2203 = vpack.c.b16 %v1491, %v1483
    %v2204 = vpack.c.b16 %v1492, %v1484
    %v2205 = vpack.c.b16 %v1493, %v1485
    %v2206 = vpack.c.b16 %v1494, %v1486
    %v2207 = vpack.c.b16 %v1495, %v1487
    %v2208 = vpack.c.b16 %v1496, %v1488
    %v2209 = vpack.c.b16 %v1497, %v1489
    %v2210 = vpack.c.b16 %v1506, %v1498
    %v2211 = vpack.c.b16 %v1507, %v1499
    %v2212 = vpack.c.b16 %v1508, %v1500
    %v2213 = vpack.c.b16 %v1509, %v1501
    %v2214 = vpack.c.b16 %v1510, %v1502
    %v2215 = vpack.c.b16 %v1511, %v1503
    %v2216 = vpack.c.b16 %v1512, %v1504
    %v2217 = vpack.c.b16 %v1513, %v1505
    %v2218 = vpack.c.b16 %v1522, %v1514
    %v2219 = vpack.c.b16 %v1523, %v1515
    %v2220 = vpack.c.b16 %v1524, %v1516
    %v2221 = vpack.c.b16 %v1525, %v1517
    %v2222 = vpack.c.b16 %v1526, %v1518
    %v2223 = vpack.c.b16 %v1527, %v1519
    %v2224 = vpack.c.b16 %v1528, %v1520
    %v2225 = vpack.c.b16 %v1529, %v1521
    %v2226 = vpack.c.b16 %v1538, %v1530
    %v2227 = vpack.c.b16 %v1539, %v1531
    %v2228 = vpack.c.b16 %v1540, %v1532
    %v2229 = vpack.c.b16 %v1541, %v1533
    %v2230 = vpack.c.b16 %v1542, %v1534
    %v2231 = vpack.c.b16 %v1543, %v1535
    %v2232 = vpack.c.b16 %v1544, %v1536
    %v2233 = vpack.c.b16 %v1545, %v1537
    %v2234 = vpack.c.b16 %v1554, %v1546
    %v2235 = vpack.c.b16 %v1555, %v1547
    %v2236 = vpack.c.b16 %v1556, %v1548
    %v2237 = vpack.c.b16 %v1557, %v1549
    %v2238 = vpack.c.b16 %v1558, %v1550
    %v2239 = vpack.c.b16 %v1559, %v1551
    %v2240 = vpack.c.b16 %v1560, %v1552
    %v2241 = vpack.c.b16 %v1561, %v1553
    %v2242 = vpack.c.b16 %v1570, %v1562
    %v2243 = vpack.c.b16 %v1571, %v1563
    %v2244 = vpack.c.b16 %v1572, %v1564
    %v2245 = vpack.c.b16 %v1573, %v1565
    %v2246 = vpack.c.b16 %v1574, %v1566
    %v2247 = vpack.c.b16 %v1575, %v1567
    %v2248 = vpack.c.b16 %v1576, %v1568
    %v2249 = vpack.c.b16 %v1577, %v1569
    %v2250 = vpack.c.b16 %v1586, %v1578
    %v2251 = vpack.c.b16 %v1587, %v1579
    %v2252 = vpack.c.b16 %v1588, %v1580
    %v2253 = vpack.c.b16 %v1589, %v1581
    %v2254 = vpack.c.b16 %v1590, %v1582
    %v2255 = vpack.c.b16 %v1591, %v1583
    %v2256 = vpack.c.b16 %v1592, %v1584
    %v2257 = vpack.c.b16 %v1593, %v1585
    %v2258 = vpack.c.b16 %v1602, %v1594
    %v2259 = vpack.c.b16 %v1603, %v1595
    %v2260 = vpack.c.b16 %v1604, %v1596
    %v2261 = vpack.c.b16 %v1605, %v1597
    %v2262 = vpack.c.b16 %v1606, %v1598
    %v2263 = vpack.c.b16 %v1607, %v1599
    %v2264 = vpack.c.b16 %v1608, %v1600
    %v2265 = vpack.c.b16 %v1609, %v1601
    %v2266 = vpack.c.b16 %v1618, %v1610
    %v2267 = vpack.c.b16 %v1619, %v1611
    %v2268 = vpack.c.b16 %v1620, %v1612
    %v2269 = vpack.c.b16 %v1621, %v1613
    %v2270 = vpack.c.b16 %v1622, %v1614
    %v2271 = vpack.c.b16 %v1623, %v1615
    %v2272 = vpack.c.b16 %v1624, %v1616
    %v2273 = vpack.c.b16 %v1625, %v1617
    %v2274 = vpack.c.b16 %v1634, %v1626
    %v2275 = vpack.c.b16 %v1635, %v1627
    %v2276 = vpack.c.b16 %v1636, %v1628
    %v2277 = vpack.c.b16 %v1637, %v1629
    %v2278 = vpack.c.b16 %v1638, %v1630
    %v2279 = vpack.c.b16 %v1639, %v1631
    %v2280 = vpack.c.b16 %v1640, %v1632
    %v2281 = vpack.c.b16 %v1641, %v1633
    %v2282 = vpack.c.b16 %v1650, %v1642
    %v2283 = vpack.c.b16 %v1651, %v1643
    %v2284 = vpack.c.b16 %v1652, %v1644
    %v2285 = vpack.c.b16 %v1653, %v1645
    %v2286 = vpack.c.b16 %v1654, %v1646
    %v2287 = vpack.c.b16 %v1655, %v1647
    %v2288 = vpack.c.b16 %v1656, %v1648
    %v2289 = vpack.c.b16 %v1657, %v1649
    %v2290 = vpack.c.b16 %v1666, %v1658
    %v2291 = vpack.c.b16 %v1667, %v1659
    %v2292 = vpack.c.b16 %v1668, %v1660
    %v2293 = vpack.c.b16 %v1669, %v1661
    %v2294 = vpack.c.b16 %v1670, %v1662
    %v2295 = vpack.c.b16 %v1671, %v1663
    %v2296 = vpack.c.b16 %v1672, %v1664
    %v2297 = vpack.c.b16 %v1673, %v1665
    %v2298 = vpack.c.b16 %v1682, %v1674
    %v2299 = vpack.c.b16 %v1683, %v1675
    %v2300 = vpack.c.b16 %v1684, %v1676
    %v2301 = vpack.c.b16 %v1685, %v1677
    %v2302 = vpack.c.b16 %v1686, %v1678
    %v2303 = vpack.c.b16 %v1687, %v1679
    %v2304 = vpack.c.b16 %v1688, %v1680
    %v2305 = vpack.c.b16 %v1689, %v1681
    %v2306 = vpack.c.b16 %v1698, %v1690
    %v2307 = vpack.c.b16 %v1699, %v1691
    %v2308 = vpack.c.b16 %v1700, %v1692
    %v2309 = vpack.c.b16 %v1701, %v1693
    %v2310 = vpack.c.b16 %v1702, %v1694
    %v2311 = vpack.c.b16 %v1703, %v1695
    %v2312 = vpack.c.b16 %v1704, %v1696
    %v2313 = vpack.c.b16 %v1705, %v1697
    %v2314 = vpack.c.b16 %v1714, %v1706
    %v2315 = vpack.c.b16 %v1715, %v1707
    %v2316 = vpack.c.b16 %v1716, %v1708
    %v2317 = vpack.c.b16 %v1717, %v1709
    %v2318 = vpack.c.b16 %v1718, %v1710
    %v2319 = vpack.c.b16 %v1719, %v1711
    %v2320 = vpack.c.b16 %v1720, %v1712
    %v2321 = vpack.c.b16 %v1721, %v1713
    %v2322 = vpack.c.b16 %v1730, %v1722
    %v2323 = vpack.c.b16 %v1731, %v1723
    %v2324 = vpack.c.b16 %v1732, %v1724
    %v2325 = vpack.c.b16 %v1733, %v1725
    %v2326 = vpack.c.b16 %v1734, %v1726
    %v2327 = vpack.c.b16 %v1735, %v1727
    %v2328 = vpack.c.b16 %v1736, %v1728
    %v2329 = vpack.c.b16 %v1737, %v1729
    %v2330 = vpack.c.b16 %v1746, %v1738
    %v2331 = vpack.c.b16 %v1747, %v1739
    %v2332 = vpack.c.b16 %v1748, %v1740
    %v2333 = vpack.c.b16 %v1749, %v1741
    %v2334 = vpack.c.b16 %v1750, %v1742
    %v2335 = vpack.c.b16 %v1751, %v1743
    %v2336 = vpack.c.b16 %v1752, %v1744
    %v2337 = vpack.c.b16 %v1753, %v1745
    %v2338 = vpack.c.b16 %v1762, %v1754
    %v2339 = vpack.c.b16 %v1763, %v1755
    %v2340 = vpack.c.b16 %v1764, %v1756
    %v2341 = vpack.c.b16 %v1765, %v1757
    %v2342 = vpack.c.b16 %v1766, %v1758
    %v2343 = vpack.c.b16 %v1767, %v1759
    %v2344 = vpack.c.b16 %v1768, %v1760
    %v2345 = vpack.c.b16 %v1769, %v1761
    %v2346 = vpack.c.b16 %v1778, %v1770
    %v2347 = vpack.c.b16 %v1779, %v1771
    %v2348 = vpack.c.b16 %v1780, %v1772
    %v2349 = vpack.c.b16 %v1781, %v1773
    %v2350 = vpack.c.b16 %v1782, %v1774
    %v2351 = vpack.c.b16 %v1783, %v1775
    %v2352 = vpack.c.b16 %v1784, %v1776
    %v2353 = vpack.c.b16 %v1785, %v1777
    %v2354 = vpack.c.b16 %v1794, %v1786
    %v2355 = vpack.c.b16 %v1795, %v1787
    %v2356 = vpack.c.b16 %v1796, %v1788
    %v2357 = vpack.c.b16 %v1797, %v1789
    %v2358 = vpack.c.b16 %v1798, %v1790
    %v2359 = vpack.c.b16 %v1799, %v1791
    %v2360 = vpack.c.b16 %v1800, %v1792
    %v2361 = vpack.c.b16 %v1801, %v1793
    %v2362 = vpack.c.b16 %v1810, %v1802
    %v2363 = vpack.c.b16 %v1811, %v1803
    %v2364 = vpack.c.b16 %v1812, %v1804
    %v2365 = vpack.c.b16 %v1813, %v1805
    %v2366 = vpack.c.b16 %v1814, %v1806
    %v2367 = vpack.c.b16 %v1815, %v1807
    %v2368 = vpack.c.b16 %v1816, %v1808
    %v2369 = vpack.c.b16 %v1817, %v1809
    %v2370 = vpack.c.b16 %v1826, %v1818
    %v2371 = vpack.c.b16 %v1827, %v1819
    %v2372 = vpack.c.b16 %v1828, %v1820
    %v2373 = vpack.c.b16 %v1829, %v1821
    %v2374 = vpack.c.b16 %v1830, %v1822
    %v2375 = vpack.c.b16 %v1831, %v1823
    %v2376 = vpack.c.b16 %v1832, %v1824
    %v2377 = vpack.c.b16 %v1833, %v1825
    %v2378 = vpack.c.b16 %v1842, %v1834
    %v2379 = vpack.c.b16 %v1843, %v1835
    %v2380 = vpack.c.b16 %v1844, %v1836
    %v2381 = vpack.c.b16 %v1845, %v1837
    %v2382 = vpack.c.b16 %v1846, %v1838
    %v2383 = vpack.c.b16 %v1847, %v1839
    %v2384 = vpack.c.b16 %v1848, %v1840
    %v2385 = vpack.c.b16 %v1849, %v1841
    %v2386 = vpack.c.b16 %v1858, %v1850
    %v2387 = vpack.c.b16 %v1859, %v1851
    %v2388 = vpack.c.b16 %v1860, %v1852
    %v2389 = vpack.c.b16 %v1861, %v1853
    %v2390 = vpack.c.b16 %v1862, %v1854
    %v2391 = vpack.c.b16 %v1863, %v1855
    %v2392 = vpack.c.b16 %v1864, %v1856
    %v2393 = vpack.c.b16 %v1865, %v1857
    %v2394 = vpack.c.b16 %v1874, %v1866
    %v2395 = vpack.c.b16 %v1875, %v1867
    %v2396 = vpack.c.b16 %v1876, %v1868
    %v2397 = vpack.c.b16 %v1877, %v1869
    %v2398 = vpack.c.b16 %v1878, %v1870
    %v2399 = vpack.c.b16 %v1879, %v1871
    %v2400 = vpack.c.b16 %v1880, %v1872
    %v2401 = vpack.c.b16 %v1881, %v1873
    %v2402 = vpack.c.b16 %v1890, %v1882
    %v2403 = vpack.c.b16 %v1891, %v1883
    %v2404 = vpack.c.b16 %v1892, %v1884
    %v2405 = vpack.c.b16 %v1893, %v1885
    %v2406 = vpack.c.b16 %v1894, %v1886
    %v2407 = vpack.c.b16 %v1895, %v1887
    %v2408 = vpack.c.b16 %v1896, %v1888
    %v2409 = vpack.c.b16 %v1897, %v1889
    %v2410 = vpack.c.b16 %v1906, %v1898
    %v2411 = vpack.c.b16 %v1907, %v1899
    %v2412 = vpack.c.b16 %v1908, %v1900
    %v2413 = vpack.c.b16 %v1909, %v1901
    %v2414 = vpack.c.b16 %v1910, %v1902
    %v2415 = vpack.c.b16 %v1911, %v1903
    %v2416 = vpack.c.b16 %v1912, %v1904
    %v2417 = vpack.c.b16 %v1913, %v1905
    %v2418 = vpack.c.b16 %v1922, %v1914
    %v2419 = vpack.c.b16 %v1923, %v1915
    %v2420 = vpack.c.b16 %v1924, %v1916
    %v2421 = vpack.c.b16 %v1925, %v1917
    %v2422 = vpack.c.b16 %v1926, %v1918
    %v2423 = vpack.c.b16 %v1927, %v1919
    %v2424 = vpack.c.b16 %v1928, %v1920
    %v2425 = vpack.c.b16 %v1929, %v1921
    %v2426 = vpack.c.b16 %v1938, %v1930
    %v2427 = vpack.c.b16 %v1939, %v1931
    %v2428 = vpack.c.b16 %v1940, %v1932
    %v2429 = vpack.c.b16 %v1941, %v1933
    %v2430 = vpack.c.b16 %v1942, %v1934
    %v2431 = vpack.c.b16 %v1943, %v1935
    %v2432 = vpack.c.b16 %v1944, %v1936
    %v2433 = vpack.c.b16 %v1945, %v1937
    %v2434 = vpack.c.b16 %v1954, %v1946
    %v2435 = vpack.c.b16 %v1955, %v1947
    %v2436 = vpack.c.b16 %v1956, %v1948
    %v2437 = vpack.c.b16 %v1957, %v1949
    %v2438 = vpack.c.b16 %v1958, %v1950
    %v2439 = vpack.c.b16 %v1959, %v1951
    %v2440 = vpack.c.b16 %v1960, %v1952
    %v2441 = vpack.c.b16 %v1961, %v1953
    %v2442 = vpack.c.b16 %v1970, %v1962
    %v2443 = vpack.c.b16 %v1971, %v1963
    %v2444 = vpack.c.b16 %v1972, %v1964
    %v2445 = vpack.c.b16 %v1973, %v1965
    %v2446 = vpack.c.b16 %v1974, %v1966
    %v2447 = vpack.c.b16 %v1975, %v1967
    %v2448 = vpack.c.b16 %v1976, %v1968
    %v2449 = vpack.c.b16 %v1977, %v1969
    %v2450 = vpack.c.b16 %v1986, %v1978
    %v2451 = vpack.c.b16 %v1987, %v1979
    %v2452 = vpack.c.b16 %v1988, %v1980
    %v2453 = vpack.c.b16 %v1989, %v1981
    %v2454 = vpack.c.b16 %v1990, %v1982
    %v2455 = vpack.c.b16 %v1991, %v1983
    %v2456 = vpack.c.b16 %v1992, %v1984
    %v2457 = vpack.c.b16 %v1993, %v1985
    %v2458 = vpack.c.b16 %v2002, %v1994
    %v2459 = vpack.c.b16 %v2003, %v1995
    %v2460 = vpack.c.b16 %v2004, %v1996
    %v2461 = vpack.c.b16 %v2005, %v1997
    %v2462 = vpack.c.b16 %v2006, %v1998
    %v2463 = vpack.c.b16 %v2007, %v1999
    %v2464 = vpack.c.b16 %v2008, %v2000
    %v2465 = vpack.c.b16 %v2009, %v2001
    %v2466 = vpack.c.b16 %v2018, %v2010
    %v2467 = vpack.c.b16 %v2019, %v2011
    %v2468 = vpack.c.b16 %v2020, %v2012
    %v2469 = vpack.c.b16 %v2021, %v2013
    %v2470 = vpack.c.b16 %v2022, %v2014
    %v2471 = vpack.c.b16 %v2023, %v2015
    %v2472 = vpack.c.b16 %v2024, %v2016
    %v2473 = vpack.c.b16 %v2025, %v2017
    %2922 = vmatprep.subr.bf16.mxu0 %v2027
    %2923 = vmatpush1.bf16.msra.mxu0 %v2026
    %2924 = vmatprep.subr.bf16.mxu0 %v2035
    %2925 = vmatpush1.bf16.msra.mxu0 %v2034
    %2926 = vmatprep.subr.bf16.mxu0 %v2043
    %2927 = vmatpush1.bf16.msra.mxu0 %v2042
    %2928 = vmatprep.subr.bf16.mxu0 %v2051
    %2929 = vmatpush1.bf16.msra.mxu0 %v2050
    %2930 = vmatprep.subr.bf16.mxu0 %v2059
    %2931 = vmatpush1.bf16.msra.mxu0 %v2058
    %2932 = vmatprep.subr.bf16.mxu0 %v2067
    %2933 = vmatpush1.bf16.msra.mxu0 %v2066
    %2934 = vmatprep.subr.bf16.mxu0 %v2075
    %2935 = vmatpush1.bf16.msra.mxu0 %v2074
    %2936 = vmatprep.subr.bf16.mxu0 %v2083
    %2937 = vmatpush1.bf16.msra.mxu0 %v2082
    %2938 = vmatprep.subr.bf16.mxu0 %v2091
    %2939 = vmatpush1.bf16.msra.mxu0 %v2090
    %2940 = vmatprep.subr.bf16.mxu0 %v2099
    %2941 = vmatpush1.bf16.msra.mxu0 %v2098
    %2942 = vmatprep.subr.bf16.mxu0 %v2107
    %2943 = vmatpush1.bf16.msra.mxu0 %v2106
    %2944 = vmatprep.subr.bf16.mxu0 %v2115
    %2945 = vmatpush1.bf16.msra.mxu0 %v2114
    %2946 = vmatprep.subr.bf16.mxu0 %v2123
    %2947 = vmatpush1.bf16.msra.mxu0 %v2122
    %2948 = vmatprep.subr.bf16.mxu0 %v2131
    %2949 = vmatpush1.bf16.msra.mxu0 %v2130
    %2950 = vmatprep.subr.bf16.mxu0 %v2139
    %2951 = vmatpush1.bf16.msra.mxu0 %v2138
    %2952 = vmatprep.subr.bf16.mxu0 %v2147
    %2953 = vmatpush1.bf16.msra.mxu0 %v2146
    %2954 = vmatprep.mubr.bf16.mxu0 %v669
    %2955 = vmatmul.mubr.bf16.gmra.mrb[0].mxu0 %v668
    %v2956 = vpop.f32.mrb[0].mxu0
    %v2957 = vadd.f32 %v609, %v2956
    %v2958 = vpop.f32.mrb[0].mxu0
    %v2959 = vadd.f32 %v613, %v2958
    %v2960 = vpop.f32.mrb[0].mxu0
    %v2961 = vadd.f32 %v609, %v2960
    %v2962 = vpop.f32.mrb[0].mxu0
    %v2963 = vadd.f32 %v613, %v2962
    %2964 = vdwg.mxu0
    %2965 = vmatprep.subr.bf16.mxu0 %v2155
    %2966 = vmatpush1.bf16.msra.mxu0 %v2154
    %2967 = vmatprep.subr.bf16.mxu0 %v2163
    %2968 = vmatpush1.bf16.msra.mxu0 %v2162
    %2969 = vmatprep.subr.bf16.mxu0 %v2171
    %2970 = vmatpush1.bf16.msra.mxu0 %v2170
    %2971 = vmatprep.subr.bf16.mxu0 %v2179
    %2972 = vmatpush1.bf16.msra.mxu0 %v2178
    %2973 = vmatprep.subr.bf16.mxu0 %v2187
    %2974 = vmatpush1.bf16.msra.mxu0 %v2186
    %2975 = vmatprep.subr.bf16.mxu0 %v2195
    %2976 = vmatpush1.bf16.msra.mxu0 %v2194
    %2977 = vmatprep.subr.bf16.mxu0 %v2203
    %2978 = vmatpush1.bf16.msra.mxu0 %v2202
    %2979 = vmatprep.subr.bf16.mxu0 %v2211
    %2980 = vmatpush1.bf16.msra.mxu0 %v2210
    %2981 = vmatprep.subr.bf16.mxu0 %v2219
    %2982 = vmatpush1.bf16.msra.mxu0 %v2218
    %2983 = vmatprep.subr.bf16.mxu0 %v2227
    %2984 = vmatpush1.bf16.msra.mxu0 %v2226
    %2985 = vmatprep.subr.bf16.mxu0 %v2235
    %2986 = vmatpush1.bf16.msra.mxu0 %v2234
    %2987 = vmatprep.subr.bf16.mxu0 %v2243
    %2988 = vmatpush1.bf16.msra.mxu0 %v2242
    %2989 = vmatprep.subr.bf16.mxu0 %v2251
    %2990 = vmatpush1.bf16.msra.mxu0 %v2250
    %2991 = vmatprep.subr.bf16.mxu0 %v2259
    %2992 = vmatpush1.bf16.msra.mxu0 %v2258
    %2993 = vmatprep.subr.bf16.mxu0 %v2267
    %2994 = vmatpush1.bf16.msra.mxu0 %v2266
    %2995 = vmatprep.subr.bf16.mxu0 %v2275
    %2996 = vmatpush1.bf16.msra.mxu0 %v2274
    %2997 = vmatprep.mubr.bf16.mxu0 %v671
    %2998 = vmatmul.mubr.bf16.gmra.mrb[0].mxu0 %v670
    %v2999 = vpop.f32.mrb[0].mxu0
    %v3000 = vadd.f32 %v2957, %v2999
    %v3001 = vpop.f32.mrb[0].mxu0
    %v3002 = vadd.f32 %v2959, %v3001
    %v3003 = vpop.f32.mrb[0].mxu0
    %v3004 = vadd.f32 %v2961, %v3003
    %v3005 = vpop.f32.mrb[0].mxu0
    %v3006 = vadd.f32 %v2963, %v3005
    %3007 = vdwg.mxu0
    %3008 = vmatprep.subr.bf16.mxu0 %v2283
    %3009 = vmatpush1.bf16.msra.mxu0 %v2282
    %3010 = vmatprep.subr.bf16.mxu0 %v2291
    %3011 = vmatpush1.bf16.msra.mxu0 %v2290
    %3012 = vmatprep.subr.bf16.mxu0 %v2299
    %3013 = vmatpush1.bf16.msra.mxu0 %v2298
    %3014 = vmatprep.subr.bf16.mxu0 %v2307
    %3015 = vmatpush1.bf16.msra.mxu0 %v2306
    %3016 = vmatprep.subr.bf16.mxu0 %v2315
    %3017 = vmatpush1.bf16.msra.mxu0 %v2314
    %3018 = vmatprep.subr.bf16.mxu0 %v2323
    %3019 = vmatpush1.bf16.msra.mxu0 %v2322
    %3020 = vmatprep.subr.bf16.mxu0 %v2331
    %3021 = vmatpush1.bf16.msra.mxu0 %v2330
    %3022 = vmatprep.subr.bf16.mxu0 %v2339
    %3023 = vmatpush1.bf16.msra.mxu0 %v2338
    %3024 = vmatprep.subr.bf16.mxu0 %v2347
    %3025 = vmatpush1.bf16.msra.mxu0 %v2346
    %3026 = vmatprep.subr.bf16.mxu0 %v2355
    %3027 = vmatpush1.bf16.msra.mxu0 %v2354
    %3028 = vmatprep.subr.bf16.mxu0 %v2363
    %3029 = vmatpush1.bf16.msra.mxu0 %v2362
    %3030 = vmatprep.subr.bf16.mxu0 %v2371
    %3031 = vmatpush1.bf16.msra.mxu0 %v2370
    %3032 = vmatprep.subr.bf16.mxu0 %v2379
    %3033 = vmatpush1.bf16.msra.mxu0 %v2378
    %3034 = vmatprep.subr.bf16.mxu0 %v2387
    %3035 = vmatpush1.bf16.msra.mxu0 %v2386
    %3036 = vmatprep.subr.bf16.mxu0 %v2395
    %3037 = vmatpush1.bf16.msra.mxu0 %v2394
    %3038 = vmatprep.subr.bf16.mxu0 %v2403
    %3039 = vmatpush1.bf16.msra.mxu0 %v2402
    %3040 = vmatprep.mubr.bf16.mxu0 %v673
    %3041 = vmatmul.mubr.bf16.gmra.mrb[0].mxu0 %v672
    %v3042 = vpop.f32.mrb[0].mxu0
    %v3043 = vadd.f32 %v3000, %v3042
    %v3044 = vpop.f32.mrb[0].mxu0
    %v3045 = vadd.f32 %v3002, %v3044
    %v3046 = vpop.f32.mrb[0].mxu0
    %v3047 = vadd.f32 %v3004, %v3046
    %v3048 = vpop.f32.mrb[0].mxu0
    %v3049 = vadd.f32 %v3006, %v3048
    %3050 = vdwg.mxu0
    %3051 = vmatprep.subr.bf16.mxu0 %v2411
    %3052 = vmatpush1.bf16.msra.mxu0 %v2410
    %3053 = vmatprep.subr.bf16.mxu0 %v2419
    %3054 = vmatpush1.bf16.msra.mxu0 %v2418
    %3055 = vmatprep.subr.bf16.mxu0 %v2427
    %3056 = vmatpush1.bf16.msra.mxu0 %v2426
    %3057 = vmatprep.subr.bf16.mxu0 %v2435
    %3058 = vmatpush1.bf16.msra.mxu0 %v2434
    %3059 = vmatprep.subr.bf16.mxu0 %v2443
    %3060 = vmatpush1.bf16.msra.mxu0 %v2442
    %3061 = vmatprep.subr.bf16.mxu0 %v2451
    %3062 = vmatpush1.bf16.msra.mxu0 %v2450
    %3063 = vmatprep.subr.bf16.mxu0 %v2459
    %3064 = vmatpush1.bf16.msra.mxu0 %v2458
    %3065 = vmatprep.subr.bf16.mxu0 %v2467
    %3066 = vmatpush1.bf16.msra.mxu0 %v2466
    %3067 = vmatprep.subr.bf16.mxu0 0
    %3068 = vmatpush1.bf16.msra.mxu0 0
    %3069 = vmatprep.subr.bf16.mxu0 0
    %3070 = vmatpush1.bf16.msra.mxu0 0
    %3071 = vmatprep.subr.bf16.mxu0 0
    %3072 = vmatpush1.bf16.msra.mxu0 0
    %3073 = vmatprep.subr.bf16.mxu0 0
    %3074 = vmatpush1.bf16.msra.mxu0 0
    %3075 = vmatprep.subr.bf16.mxu0 0
    %3076 = vmatpush1.bf16.msra.mxu0 0
    %3077 = vmatprep.subr.bf16.mxu0 0
    %3078 = vmatpush1.bf16.msra.mxu0 0
    %3079 = vmatprep.subr.bf16.mxu0 0
    %3080 = vmatpush1.bf16.msra.mxu0 0
    %3081 = vmatprep.subr.bf16.mxu0 0
    %3082 = vmatpush1.bf16.msra.mxu0 0
    %3083 = vmatprep.mubr.bf16.mxu0 0
    %3084 = vmatmul.mubr.bf16.gmra.mrb[0].mxu0 %v674
    %v3085 = vpop.f32.mrb[0].mxu0
    %v3086 = vadd.f32 %v3043, %v3085
    %v3087 = vpop.f32.mrb[0].mxu0
    %v3088 = vadd.f32 %v3045, %v3087
    %v3089 = vpop.f32.mrb[0].mxu0
    %v3090 = vadd.f32 %v3047, %v3089
    %v3091 = vpop.f32.mrb[0].mxu0
    %v3092 = vadd.f32 %v3049, %v3091
    %3093 = vdwg.mxu0
    %3094 = vmatprep.subr.bf16.mxu0 %v2029
    %3095 = vmatpush1.bf16.msra.mxu0 %v2028
    %3096 = vmatprep.subr.bf16.mxu0 %v2037
    %3097 = vmatpush1.bf16.msra.mxu0 %v2036
    %3098 = vmatprep.subr.bf16.mxu0 %v2045
    %3099 = vmatpush1.bf16.msra.mxu0 %v2044
    %3100 = vmatprep.subr.bf16.mxu0 %v2053
    %3101 = vmatpush1.bf16.msra.mxu0 %v2052
    %3102 = vmatprep.subr.bf16.mxu0 %v2061
    %3103 = vmatpush1.bf16.msra.mxu0 %v2060
    %3104 = vmatprep.subr.bf16.mxu0 %v2069
    %3105 = vmatpush1.bf16.msra.mxu0 %v2068
    %3106 = vmatprep.subr.bf16.mxu0 %v2077
    %3107 = vmatpush1.bf16.msra.mxu0 %v2076
    %3108 = vmatprep.subr.bf16.mxu0 %v2085
    %3109 = vmatpush1.bf16.msra.mxu0 %v2084
    %3110 = vmatprep.subr.bf16.mxu0 %v2093
    %3111 = vmatpush1.bf16.msra.mxu0 %v2092
    %3112 = vmatprep.subr.bf16.mxu0 %v2101
    %3113 = vmatpush1.bf16.msra.mxu0 %v2100
    %3114 = vmatprep.subr.bf16.mxu0 %v2109
    %3115 = vmatpush1.bf16.msra.mxu0 %v2108
    %3116 = vmatprep.subr.bf16.mxu0 %v2117
    %3117 = vmatpush1.bf16.msra.mxu0 %v2116
    %3118 = vmatprep.subr.bf16.mxu0 %v2125
    %3119 = vmatpush1.bf16.msra.mxu0 %v2124
    %3120 = vmatprep.subr.bf16.mxu0 %v2133
    %3121 = vmatpush1.bf16.msra.mxu0 %v2132
    %3122 = vmatprep.subr.bf16.mxu0 %v2141
    %3123 = vmatpush1.bf16.msra.mxu0 %v2140
    %3124 = vmatprep.subr.bf16.mxu0 %v2149
    %3125 = vmatpush1.bf16.msra.mxu0 %v2148
    %3126 = vmatprep.mubr.bf16.mxu0 %v669
    %3127 = vmatmul.mubr.bf16.gmra.mrb[0].mxu0 %v668
    %v3128 = vpop.f32.mrb[0].mxu0
    %v3129 = vadd.f32 %v617, %v3128
    %v3130 = vpop.f32.mrb[0].mxu0
    %v3131 = vadd.f32 %v621, %v3130
    %v3132 = vpop.f32.mrb[0].mxu0
    %v3133 = vadd.f32 %v617, %v3132
    %v3134 = vpop.f32.mrb[0].mxu0
    %v3135 = vadd.f32 %v621, %v3134
    %3136 = vdwg.mxu0
    %3137 = vmatprep.subr.bf16.mxu0 %v2157
    %3138 = vmatpush1.bf16.msra.mxu0 %v2156
    %3139 = vmatprep.subr.bf16.mxu0 %v2165
    %3140 = vmatpush1.bf16.msra.mxu0 %v2164
    %3141 = vmatprep.subr.bf16.mxu0 %v2173
    %3142 = vmatpush1.bf16.msra.mxu0 %v2172
    %3143 = vmatprep.subr.bf16.mxu0 %v2181
    %3144 = vmatpush1.bf16.msra.mxu0 %v2180
    %3145 = vmatprep.subr.bf16.mxu0 %v2189
    %3146 = vmatpush1.bf16.msra.mxu0 %v2188
    %3147 = vmatprep.subr.bf16.mxu0 %v2197
    %3148 = vmatpush1.bf16.msra.mxu0 %v2196
    %3149 = vmatprep.subr.bf16.mxu0 %v2205
    %3150 = vmatpush1.bf16.msra.mxu0 %v2204
    %3151 = vmatprep.subr.bf16.mxu0 %v2213
    %3152 = vmatpush1.bf16.msra.mxu0 %v2212
    %3153 = vmatprep.subr.bf16.mxu0 %v2221
    %3154 = vmatpush1.bf16.msra.mxu0 %v2220
    %3155 = vmatprep.subr.bf16.mxu0 %v2229
    %3156 = vmatpush1.bf16.msra.mxu0 %v2228
    %3157 = vmatprep.subr.bf16.mxu0 %v2237
    %3158 = vmatpush1.bf16.msra.mxu0 %v2236
    %3159 = vmatprep.subr.bf16.mxu0 %v2245
    %3160 = vmatpush1.bf16.msra.mxu0 %v2244
    %3161 = vmatprep.subr.bf16.mxu0 %v2253
    %3162 = vmatpush1.bf16.msra.mxu0 %v2252
    %3163 = vmatprep.subr.bf16.mxu0 %v2261
    %3164 = vmatpush1.bf16.msra.mxu0 %v2260
    %3165 = vmatprep.subr.bf16.mxu0 %v2269
    %3166 = vmatpush1.bf16.msra.mxu0 %v2268
    %3167 = vmatprep.subr.bf16.mxu0 %v2277
    %3168 = vmatpush1.bf16.msra.mxu0 %v2276
    %3169 = vmatprep.mubr.bf16.mxu0 %v671
    %3170 = vmatmul.mubr.bf16.gmra.mrb[0].mxu0 %v670
    %v3171 = vpop.f32.mrb[0].mxu0
    %v3172 = vadd.f32 %v3129, %v3171
    %v3173 = vpop.f32.mrb[0].mxu0
    %v3174 = vadd.f32 %v3131, %v3173
    %v3175 = vpop.f32.mrb[0].mxu0
    %v3176 = vadd.f32 %v3133, %v3175
    %v3177 = vpop.f32.mrb[0].mxu0
    %v3178 = vadd.f32 %v3135, %v3177
    %3179 = vdwg.mxu0
    %3180 = vmatprep.subr.bf16.mxu0 %v2285
    %3181 = vmatpush1.bf16.msra.mxu0 %v2284
    %3182 = vmatprep.subr.bf16.mxu0 %v2293
    %3183 = vmatpush1.bf16.msra.mxu0 %v2292
    %3184 = vmatprep.subr.bf16.mxu0 %v2301
    %3185 = vmatpush1.bf16.msra.mxu0 %v2300
    %3186 = vmatprep.subr.bf16.mxu0 %v2309
    %3187 = vmatpush1.bf16.msra.mxu0 %v2308
    %3188 = vmatprep.subr.bf16.mxu0 %v2317
    %3189 = vmatpush1.bf16.msra.mxu0 %v2316
    %3190 = vmatprep.subr.bf16.mxu0 %v2325
    %3191 = vmatpush1.bf16.msra.mxu0 %v2324
    %3192 = vmatprep.subr.bf16.mxu0 %v2333
    %3193 = vmatpush1.bf16.msra.mxu0 %v2332
    %3194 = vmatprep.subr.bf16.mxu0 %v2341
    %3195 = vmatpush1.bf16.msra.mxu0 %v2340
    %3196 = vmatprep.subr.bf16.mxu0 %v2349
    %3197 = vmatpush1.bf16.msra.mxu0 %v2348
    %3198 = vmatprep.subr.bf16.mxu0 %v2357
    %3199 = vmatpush1.bf16.msra.mxu0 %v2356
    %3200 = vmatprep.subr.bf16.mxu0 %v2365
    %3201 = vmatpush1.bf16.msra.mxu0 %v2364
    %3202 = vmatprep.subr.bf16.mxu0 %v2373
    %3203 = vmatpush1.bf16.msra.mxu0 %v2372
    %3204 = vmatprep.subr.bf16.mxu0 %v2381
    %3205 = vmatpush1.bf16.msra.mxu0 %v2380
    %3206 = vmatprep.subr.bf16.mxu0 %v2389
    %3207 = vmatpush1.bf16.msra.mxu0 %v2388
    %3208 = vmatprep.subr.bf16.mxu0 %v2397
    %3209 = vmatpush1.bf16.msra.mxu0 %v2396
    %3210 = vmatprep.subr.bf16.mxu0 %v2405
    %3211 = vmatpush1.bf16.msra.mxu0 %v2404
    %3212 = vmatprep.mubr.bf16.mxu0 %v673
    %3213 = vmatmul.mubr.bf16.gmra.mrb[0].mxu0 %v672
    %v3214 = vpop.f32.mrb[0].mxu0
    %v3215 = vadd.f32 %v3172, %v3214
    %v3216 = vpop.f32.mrb[0].mxu0
    %v3217 = vadd.f32 %v3174, %v3216
    %v3218 = vpop.f32.mrb[0].mxu0
    %v3219 = vadd.f32 %v3176, %v3218
    %v3220 = vpop.f32.mrb[0].mxu0
    %v3221 = vadd.f32 %v3178, %v3220
    %3222 = vdwg.mxu0
    %3223 = vmatprep.subr.bf16.mxu0 %v2413
    %3224 = vmatpush1.bf16.msra.mxu0 %v2412
    %3225 = vmatprep.subr.bf16.mxu0 %v2421
    %3226 = vmatpush1.bf16.msra.mxu0 %v2420
    %3227 = vmatprep.subr.bf16.mxu0 %v2429
    %3228 = vmatpush1.bf16.msra.mxu0 %v2428
    %3229 = vmatprep.subr.bf16.mxu0 %v2437
    %3230 = vmatpush1.bf16.msra.mxu0 %v2436
    %3231 = vmatprep.subr.bf16.mxu0 %v2445
    %3232 = vmatpush1.bf16.msra.mxu0 %v2444
    %3233 = vmatprep.subr.bf16.mxu0 %v2453
    %3234 = vmatpush1.bf16.msra.mxu0 %v2452
    %3235 = vmatprep.subr.bf16.mxu0 %v2461
    %3236 = vmatpush1.bf16.msra.mxu0 %v2460
    %3237 = vmatprep.subr.bf16.mxu0 %v2469
    %3238 = vmatpush1.bf16.msra.mxu0 %v2468
    %3239 = vmatprep.subr.bf16.mxu0 0
    %3240 = vmatpush1.bf16.msra.mxu0 0
    %3241 = vmatprep.subr.bf16.mxu0 0
    %3242 = vmatpush1.bf16.msra.mxu0 0
    %3243 = vmatprep.subr.bf16.mxu0 0
    %3244 = vmatpush1.bf16.msra.mxu0 0
    %3245 = vmatprep.subr.bf16.mxu0 0
    %3246 = vmatpush1.bf16.msra.mxu0 0
    %3247 = vmatprep.subr.bf16.mxu0 0
    %3248 = vmatpush1.bf16.msra.mxu0 0
    %3249 = vmatprep.subr.bf16.mxu0 0
    %3250 = vmatpush1.bf16.msra.mxu0 0
    %3251 = vmatprep.subr.bf16.mxu0 0
    %3252 = vmatpush1.bf16.msra.mxu0 0
    %3253 = vmatprep.subr.bf16.mxu0 0
    %3254 = vmatpush1.bf16.msra.mxu0 0
    %3255 = vmatprep.mubr.bf16.mxu0 0
    %3256 = vmatmul.mubr.bf16.gmra.mrb[0].mxu0 %v674
    %v3257 = vpop.f32.mrb[0].mxu0
    %v3258 = vadd.f32 %v3215, %v3257
    %v3259 = vpop.f32.mrb[0].mxu0
    %v3260 = vadd.f32 %v3217, %v3259
    %v3261 = vpop.f32.mrb[0].mxu0
    %v3262 = vadd.f32 %v3219, %v3261
    %v3263 = vpop.f32.mrb[0].mxu0
    %v3264 = vadd.f32 %v3221, %v3263
    %3265 = vdwg.mxu0
    %3266 = vmatprep.subr.bf16.mxu0 %v2031
    %3267 = vmatpush1.bf16.msra.mxu0 %v2030
    %3268 = vmatprep.subr.bf16.mxu0 %v2039
    %3269 = vmatpush1.bf16.msra.mxu0 %v2038
    %3270 = vmatprep.subr.bf16.mxu0 %v2047
    %3271 = vmatpush1.bf16.msra.mxu0 %v2046
    %3272 = vmatprep.subr.bf16.mxu0 %v2055
    %3273 = vmatpush1.bf16.msra.mxu0 %v2054
    %3274 = vmatprep.subr.bf16.mxu0 %v2063
    %3275 = vmatpush1.bf16.msra.mxu0 %v2062
    %3276 = vmatprep.subr.bf16.mxu0 %v2071
    %3277 = vmatpush1.bf16.msra.mxu0 %v2070
    %3278 = vmatprep.subr.bf16.mxu0 %v2079
    %3279 = vmatpush1.bf16.msra.mxu0 %v2078
    %3280 = vmatprep.subr.bf16.mxu0 %v2087
    %3281 = vmatpush1.bf16.msra.mxu0 %v2086
    %3282 = vmatprep.subr.bf16.mxu0 %v2095
    %3283 = vmatpush1.bf16.msra.mxu0 %v2094
    %3284 = vmatprep.subr.bf16.mxu0 %v2103
    %3285 = vmatpush1.bf16.msra.mxu0 %v2102
    %3286 = vmatprep.subr.bf16.mxu0 %v2111
    %3287 = vmatpush1.bf16.msra.mxu0 %v2110
    %3288 = vmatprep.subr.bf16.mxu0 %v2119
    %3289 = vmatpush1.bf16.msra.mxu0 %v2118
    %3290 = vmatprep.subr.bf16.mxu0 %v2127
    %3291 = vmatpush1.bf16.msra.mxu0 %v2126
    %3292 = vmatprep.subr.bf16.mxu0 %v2135
    %3293 = vmatpush1.bf16.msra.mxu0 %v2134
    %3294 = vmatprep.subr.bf16.mxu0 %v2143
    %3295 = vmatpush1.bf16.msra.mxu0 %v2142
    %3296 = vmatprep.subr.bf16.mxu0 %v2151
    %3297 = vmatpush1.bf16.msra.mxu0 %v2150
    %3298 = vmatprep.mubr.bf16.mxu0 %v669
    %3299 = vmatmul.mubr.bf16.gmra.mrb[0].mxu0 %v668
    %v3300 = vpop.f32.mrb[0].mxu0
    %v3301 = vadd.f32 %v625, %v3300
    %v3302 = vpop.f32.mrb[0].mxu0
    %v3303 = vadd.f32 %v629, %v3302
    %v3304 = vpop.f32.mrb[0].mxu0
    %v3305 = vadd.f32 %v625, %v3304
    %v3306 = vpop.f32.mrb[0].mxu0
    %v3307 = vadd.f32 %v629, %v3306
    %3308 = vdwg.mxu0
    %3309 = vmatprep.subr.bf16.mxu0 %v2159
    %3310 = vmatpush1.bf16.msra.mxu0 %v2158
    %3311 = vmatprep.subr.bf16.mxu0 %v2167
    %3312 = vmatpush1.bf16.msra.mxu0 %v2166
    %3313 = vmatprep.subr.bf16.mxu0 %v2175
    %3314 = vmatpush1.bf16.msra.mxu0 %v2174
    %3315 = vmatprep.subr.bf16.mxu0 %v2183
    %3316 = vmatpush1.bf16.msra.mxu0 %v2182
    %3317 = vmatprep.subr.bf16.mxu0 %v2191
    %3318 = vmatpush1.bf16.msra.mxu0 %v2190
    %3319 = vmatprep.subr.bf16.mxu0 %v2199
    %3320 = vmatpush1.bf16.msra.mxu0 %v2198
    %3321 = vmatprep.subr.bf16.mxu0 %v2207
    %3322 = vmatpush1.bf16.msra.mxu0 %v2206
    %3323 = vmatprep.subr.bf16.mxu0 %v2215
    %3324 = vmatpush1.bf16.msra.mxu0 %v2214
    %3325 = vmatprep.subr.bf16.mxu0 %v2223
    %3326 = vmatpush1.bf16.msra.mxu0 %v2222
    %3327 = vmatprep.subr.bf16.mxu0 %v2231
    %3328 = vmatpush1.bf16.msra.mxu0 %v2230
    %3329 = vmatprep.subr.bf16.mxu0 %v2239
    %3330 = vmatpush1.bf16.msra.mxu0 %v2238
    %3331 = vmatprep.subr.bf16.mxu0 %v2247
    %3332 = vmatpush1.bf16.msra.mxu0 %v2246
    %3333 = vmatprep.subr.bf16.mxu0 %v2255
    %3334 = vmatpush1.bf16.msra.mxu0 %v2254
    %3335 = vmatprep.subr.bf16.mxu0 %v2263
    %3336 = vmatpush1.bf16.msra.mxu0 %v2262
    %3337 = vmatprep.subr.bf16.mxu0 %v2271
    %3338 = vmatpush1.bf16.msra.mxu0 %v2270
    %3339 = vmatprep.subr.bf16.mxu0 %v2279
    %3340 = vmatpush1.bf16.msra.mxu0 %v2278
    %3341 = vmatprep.mubr.bf16.mxu0 %v671
    %3342 = vmatmul.mubr.bf16.gmra.mrb[0].mxu0 %v670
    %v3343 = vpop.f32.mrb[0].mxu0
    %v3344 = vadd.f32 %v3301, %v3343
    %v3345 = vpop.f32.mrb[0].mxu0
    %v3346 = vadd.f32 %v3303, %v3345
    %v3347 = vpop.f32.mrb[0].mxu0
    %v3348 = vadd.f32 %v3305, %v3347
    %v3349 = vpop.f32.mrb[0].mxu0
    %v3350 = vadd.f32 %v3307, %v3349
    %3351 = vdwg.mxu0
    %3352 = vmatprep.subr.bf16.mxu0 %v2287
    %3353 = vmatpush1.bf16.msra.mxu0 %v2286
    %3354 = vmatprep.subr.bf16.mxu0 %v2295
    %3355 = vmatpush1.bf16.msra.mxu0 %v2294
    %3356 = vmatprep.subr.bf16.mxu0 %v2303
    %3357 = vmatpush1.bf16.msra.mxu0 %v2302
    %3358 = vmatprep.subr.bf16.mxu0 %v2311
    %3359 = vmatpush1.bf16.msra.mxu0 %v2310
    %3360 = vmatprep.subr.bf16.mxu0 %v2319
    %3361 = vmatpush1.bf16.msra.mxu0 %v2318
    %3362 = vmatprep.subr.bf16.mxu0 %v2327
    %3363 = vmatpush1.bf16.msra.mxu0 %v2326
    %3364 = vmatprep.subr.bf16.mxu0 %v2335
    %3365 = vmatpush1.bf16.msra.mxu0 %v2334
    %3366 = vmatprep.subr.bf16.mxu0 %v2343
    %3367 = vmatpush1.bf16.msra.mxu0 %v2342
    %3368 = vmatprep.subr.bf16.mxu0 %v2351
    %3369 = vmatpush1.bf16.msra.mxu0 %v2350
    %3370 = vmatprep.subr.bf16.mxu0 %v2359
    %3371 = vmatpush1.bf16.msra.mxu0 %v2358
    %3372 = vmatprep.subr.bf16.mxu0 %v2367
    %3373 = vmatpush1.bf16.msra.mxu0 %v2366
    %3374 = vmatprep.subr.bf16.mxu0 %v2375
    %3375 = vmatpush1.bf16.msra.mxu0 %v2374
    %3376 = vmatprep.subr.bf16.mxu0 %v2383
    %3377 = vmatpush1.bf16.msra.mxu0 %v2382
    %3378 = vmatprep.subr.bf16.mxu0 %v2391
    %3379 = vmatpush1.bf16.msra.mxu0 %v2390
    %3380 = vmatprep.subr.bf16.mxu0 %v2399
    %3381 = vmatpush1.bf16.msra.mxu0 %v2398
    %3382 = vmatprep.subr.bf16.mxu0 %v2407
    %3383 = vmatpush1.bf16.msra.mxu0 %v2406
    %3384 = vmatprep.mubr.bf16.mxu0 %v673
    %3385 = vmatmul.mubr.bf16.gmra.mrb[0].mxu0 %v672
    %v3386 = vpop.f32.mrb[0].mxu0
    %v3387 = vadd.f32 %v3344, %v3386
    %v3388 = vpop.f32.mrb[0].mxu0
    %v3389 = vadd.f32 %v3346, %v3388
    %v3390 = vpop.f32.mrb[0].mxu0
    %v3391 = vadd.f32 %v3348, %v3390
    %v3392 = vpop.f32.mrb[0].mxu0
    %v3393 = vadd.f32 %v3350, %v3392
    %3394 = vdwg.mxu0
    %3395 = vmatprep.subr.bf16.mxu0 %v2415
    %3396 = vmatpush1.bf16.msra.mxu0 %v2414
    %3397 = vmatprep.subr.bf16.mxu0 %v2423
    %3398 = vmatpush1.bf16.msra.mxu0 %v2422
    %3399 = vmatprep.subr.bf16.mxu0 %v2431
    %3400 = vmatpush1.bf16.msra.mxu0 %v2430
    %3401 = vmatprep.subr.bf16.mxu0 %v2439
    %3402 = vmatpush1.bf16.msra.mxu0 %v2438
    %3403 = vmatprep.subr.bf16.mxu0 %v2447
    %3404 = vmatpush1.bf16.msra.mxu0 %v2446
    %3405 = vmatprep.subr.bf16.mxu0 %v2455
    %3406 = vmatpush1.bf16.msra.mxu0 %v2454
    %3407 = vmatprep.subr.bf16.mxu0 %v2463
    %3408 = vmatpush1.bf16.msra.mxu0 %v2462
    %3409 = vmatprep.subr.bf16.mxu0 %v2471
    %3410 = vmatpush1.bf16.msra.mxu0 %v2470
    %3411 = vmatprep.subr.bf16.mxu0 0
    %3412 = vmatpush1.bf16.msra.mxu0 0
    %3413 = vmatprep.subr.bf16.mxu0 0
    %3414 = vmatpush1.bf16.msra.mxu0 0
    %3415 = vmatprep.subr.bf16.mxu0 0
    %3416 = vmatpush1.bf16.msra.mxu0 0
    %3417 = vmatprep.subr.bf16.mxu0 0
    %3418 = vmatpush1.bf16.msra.mxu0 0
    %3419 = vmatprep.subr.bf16.mxu0 0
    %3420 = vmatpush1.bf16.msra.mxu0 0
    %3421 = vmatprep.subr.bf16.mxu0 0
    %3422 = vmatpush1.bf16.msra.mxu0 0
    %3423 = vmatprep.subr.bf16.mxu0 0
    %3424 = vmatpush1.bf16.msra.mxu0 0
    %3425 = vmatprep.subr.bf16.mxu0 0
    %3426 = vmatpush1.bf16.msra.mxu0 0
    %3427 = vmatprep.mubr.bf16.mxu0 0
    %3428 = vmatmul.mubr.bf16.gmra.mrb[0].mxu0 %v674
    %v3429 = vpop.f32.mrb[0].mxu0
    %v3430 = vadd.f32 %v3387, %v3429
    %v3431 = vpop.f32.mrb[0].mxu0
    %v3432 = vadd.f32 %v3389, %v3431
    %v3433 = vpop.f32.mrb[0].mxu0
    %v3434 = vadd.f32 %v3391, %v3433
    %v3435 = vpop.f32.mrb[0].mxu0
    %v3436 = vadd.f32 %v3393, %v3435
    %3437 = vdwg.mxu0
    %3438 = vmatprep.subr.bf16.mxu0 %v2033
    %3439 = vmatpush1.bf16.msra.mxu0 %v2032
    %3440 = vmatprep.subr.bf16.mxu0 %v2041
    %3441 = vmatpush1.bf16.msra.mxu0 %v2040
    %3442 = vmatprep.subr.bf16.mxu0 %v2049
    %3443 = vmatpush1.bf16.msra.mxu0 %v2048
    %3444 = vmatprep.subr.bf16.mxu0 %v2057
    %3445 = vmatpush1.bf16.msra.mxu0 %v2056
    %3446 = vmatprep.subr.bf16.mxu0 %v2065
    %3447 = vmatpush1.bf16.msra.mxu0 %v2064
    %3448 = vmatprep.subr.bf16.mxu0 %v2073
    %3449 = vmatpush1.bf16.msra.mxu0 %v2072
    %3450 = vmatprep.subr.bf16.mxu0 %v2081
    %3451 = vmatpush1.bf16.msra.mxu0 %v2080
    %3452 = vmatprep.subr.bf16.mxu0 %v2089
    %3453 = vmatpush1.bf16.msra.mxu0 %v2088
    %3454 = vmatprep.subr.bf16.mxu0 %v2097
    %3455 = vmatpush1.bf16.msra.mxu0 %v2096
    %3456 = vmatprep.subr.bf16.mxu0 %v2105
    %3457 = vmatpush1.bf16.msra.mxu0 %v2104
    %3458 = vmatprep.subr.bf16.mxu0 %v2113
    %3459 = vmatpush1.bf16.msra.mxu0 %v2112
    %3460 = vmatprep.subr.bf16.mxu0 %v2121
    %3461 = vmatpush1.bf16.msra.mxu0 %v2120
    %3462 = vmatprep.subr.bf16.mxu0 %v2129
    %3463 = vmatpush1.bf16.msra.mxu0 %v2128
    %3464 = vmatprep.subr.bf16.mxu0 %v2137
    %3465 = vmatpush1.bf16.msra.mxu0 %v2136
    %3466 = vmatprep.subr.bf16.mxu0 %v2145
    %3467 = vmatpush1.bf16.msra.mxu0 %v2144
    %3468 = vmatprep.subr.bf16.mxu0 %v2153
    %3469 = vmatpush1.bf16.msra.mxu0 %v2152
    %3470 = vmatprep.mubr.bf16.mxu0 %v669
    %3471 = vmatmul.mubr.bf16.gmra.mrb[0].mxu0 %v668
    %v3472 = vpop.f32.mrb[0].mxu0
    %v3473 = vadd.f32 %v633, %v3472
    %v3474 = vpop.f32.mrb[0].mxu0
    %v3475 = vadd.f32 %v637, %v3474
    %v3476 = vpop.f32.mrb[0].mxu0
    %v3477 = vadd.f32 %v633, %v3476
    %v3478 = vpop.f32.mrb[0].mxu0
    %v3479 = vadd.f32 %v637, %v3478
    %3480 = vdwg.mxu0
    %3481 = vmatprep.subr.bf16.mxu0 %v2161
    %3482 = vmatpush1.bf16.msra.mxu0 %v2160
    %3483 = vmatprep.subr.bf16.mxu0 %v2169
    %3484 = vmatpush1.bf16.msra.mxu0 %v2168
    %3485 = vmatprep.subr.bf16.mxu0 %v2177
    %3486 = vmatpush1.bf16.msra.mxu0 %v2176
    %3487 = vmatprep.subr.bf16.mxu0 %v2185
    %3488 = vmatpush1.bf16.msra.mxu0 %v2184
    %3489 = vmatprep.subr.bf16.mxu0 %v2193
    %3490 = vmatpush1.bf16.msra.mxu0 %v2192
    %3491 = vmatprep.subr.bf16.mxu0 %v2201
    %3492 = vmatpush1.bf16.msra.mxu0 %v2200
    %3493 = vmatprep.subr.bf16.mxu0 %v2209
    %3494 = vmatpush1.bf16.msra.mxu0 %v2208
    %3495 = vmatprep.subr.bf16.mxu0 %v2217
    %3496 = vmatpush1.bf16.msra.mxu0 %v2216
    %3497 = vmatprep.subr.bf16.mxu0 %v2225
    %3498 = vmatpush1.bf16.msra.mxu0 %v2224
    %3499 = vmatprep.subr.bf16.mxu0 %v2233
    %3500 = vmatpush1.bf16.msra.mxu0 %v2232
    %3501 = vmatprep.subr.bf16.mxu0 %v2241
    %3502 = vmatpush1.bf16.msra.mxu0 %v2240
    %3503 = vmatprep.subr.bf16.mxu0 %v2249
    %3504 = vmatpush1.bf16.msra.mxu0 %v2248
    %3505 = vmatprep.subr.bf16.mxu0 %v2257
    %3506 = vmatpush1.bf16.msra.mxu0 %v2256
    %3507 = vmatprep.subr.bf16.mxu0 %v2265
    %3508 = vmatpush1.bf16.msra.mxu0 %v2264
    %3509 = vmatprep.subr.bf16.mxu0 %v2273
    %3510 = vmatpush1.bf16.msra.mxu0 %v2272
    %3511 = vmatprep.subr.bf16.mxu0 %v2281
    %3512 = vmatpush1.bf16.msra.mxu0 %v2280
    %3513 = vmatprep.mubr.bf16.mxu0 %v671
    %3514 = vmatmul.mubr.bf16.gmra.mrb[0].mxu0 %v670
    %v3515 = vpop.f32.mrb[0].mxu0
    %v3516 = vadd.f32 %v3473, %v3515
    %v3517 = vpop.f32.mrb[0].mxu0
    %v3518 = vadd.f32 %v3475, %v3517
    %v3519 = vpop.f32.mrb[0].mxu0
    %v3520 = vadd.f32 %v3477, %v3519
    %v3521 = vpop.f32.mrb[0].mxu0
    %v3522 = vadd.f32 %v3479, %v3521
    %3523 = vdwg.mxu0
    %3524 = vmatprep.subr.bf16.mxu0 %v2289
    %3525 = vmatpush1.bf16.msra.mxu0 %v2288
    %3526 = vmatprep.subr.bf16.mxu0 %v2297
    %3527 = vmatpush1.bf16.msra.mxu0 %v2296
    %3528 = vmatprep.subr.bf16.mxu0 %v2305
    %3529 = vmatpush1.bf16.msra.mxu0 %v2304
    %3530 = vmatprep.subr.bf16.mxu0 %v2313
    %3531 = vmatpush1.bf16.msra.mxu0 %v2312
    %3532 = vmatprep.subr.bf16.mxu0 %v2321
    %3533 = vmatpush1.bf16.msra.mxu0 %v2320
    %3534 = vmatprep.subr.bf16.mxu0 %v2329
    %3535 = vmatpush1.bf16.msra.mxu0 %v2328
    %3536 = vmatprep.subr.bf16.mxu0 %v2337
    %3537 = vmatpush1.bf16.msra.mxu0 %v2336
    %3538 = vmatprep.subr.bf16.mxu0 %v2345
    %3539 = vmatpush1.bf16.msra.mxu0 %v2344
    %3540 = vmatprep.subr.bf16.mxu0 %v2353
    %3541 = vmatpush1.bf16.msra.mxu0 %v2352
    %3542 = vmatprep.subr.bf16.mxu0 %v2361
    %3543 = vmatpush1.bf16.msra.mxu0 %v2360
    %3544 = vmatprep.subr.bf16.mxu0 %v2369
    %3545 = vmatpush1.bf16.msra.mxu0 %v2368
    %3546 = vmatprep.subr.bf16.mxu0 %v2377
    %3547 = vmatpush1.bf16.msra.mxu0 %v2376
    %3548 = vmatprep.subr.bf16.mxu0 %v2385
    %3549 = vmatpush1.bf16.msra.mxu0 %v2384
    %3550 = vmatprep.subr.bf16.mxu0 %v2393
    %3551 = vmatpush1.bf16.msra.mxu0 %v2392
    %3552 = vmatprep.subr.bf16.mxu0 %v2401
    %3553 = vmatpush1.bf16.msra.mxu0 %v2400
    %3554 = vmatprep.subr.bf16.mxu0 %v2409
    %3555 = vmatpush1.bf16.msra.mxu0 %v2408
    %3556 = vmatprep.mubr.bf16.mxu0 %v673
    %3557 = vmatmul.mubr.bf16.gmra.mrb[0].mxu0 %v672
    %v3558 = vpop.f32.mrb[0].mxu0
    %v3559 = vadd.f32 %v3516, %v3558
    %v3560 = vpop.f32.mrb[0].mxu0
    %v3561 = vadd.f32 %v3518, %v3560
    %v3562 = vpop.f32.mrb[0].mxu0
    %v3563 = vadd.f32 %v3520, %v3562
    %v3564 = vpop.f32.mrb[0].mxu0
    %v3565 = vadd.f32 %v3522, %v3564
    %3566 = vdwg.mxu0
    %3567 = vmatprep.subr.bf16.mxu0 %v2417
    %3568 = vmatpush1.bf16.msra.mxu0 %v2416
    %3569 = vmatprep.subr.bf16.mxu0 %v2425
    %3570 = vmatpush1.bf16.msra.mxu0 %v2424
    %3571 = vmatprep.subr.bf16.mxu0 %v2433
    %3572 = vmatpush1.bf16.msra.mxu0 %v2432
    %3573 = vmatprep.subr.bf16.mxu0 %v2441
    %3574 = vmatpush1.bf16.msra.mxu0 %v2440
    %3575 = vmatprep.subr.bf16.mxu0 %v2449
    %3576 = vmatpush1.bf16.msra.mxu0 %v2448
    %3577 = vmatprep.subr.bf16.mxu0 %v2457
    %3578 = vmatpush1.bf16.msra.mxu0 %v2456
    %3579 = vmatprep.subr.bf16.mxu0 %v2465
    %3580 = vmatpush1.bf16.msra.mxu0 %v2464
    %3581 = vmatprep.subr.bf16.mxu0 %v2473
    %3582 = vmatpush1.bf16.msra.mxu0 %v2472
    %3583 = vmatprep.subr.bf16.mxu0 0
    %3584 = vmatpush1.bf16.msra.mxu0 0
    %3585 = vmatprep.subr.bf16.mxu0 0
    %3586 = vmatpush1.bf16.msra.mxu0 0
    %3587 = vmatprep.subr.bf16.mxu0 0
    %3588 = vmatpush1.bf16.msra.mxu0 0
    %3589 = vmatprep.subr.bf16.mxu0 0
    %3590 = vmatpush1.bf16.msra.mxu0 0
    %3591 = vmatprep.subr.bf16.mxu0 0
    %3592 = vmatpush1.bf16.msra.mxu0 0
    %3593 = vmatprep.subr.bf16.mxu0 0
    %3594 = vmatpush1.bf16.msra.mxu0 0
    %3595 = vmatprep.subr.bf16.mxu0 0
    %3596 = vmatpush1.bf16.msra.mxu0 0
    %3597 = vmatprep.subr.bf16.mxu0 0
    %3598 = vmatpush1.bf16.msra.mxu0 0
    %3599 = vmatprep.mubr.bf16.mxu0 0
    %3600 = vmatmul.mubr.bf16.gmra.mrb[0].mxu0 %v674
    %v3601 = vpop.f32.mrb[0].mxu0
    %v3602 = vadd.f32 %v3559, %v3601
    %v3603 = vpop.f32.mrb[0].mxu0
    %v3604 = vadd.f32 %v3561, %v3603
    %v3605 = vpop.f32.mrb[0].mxu0
    %v3606 = vadd.f32 %v3563, %v3605
    %v3607 = vpop.f32.mrb[0].mxu0
    %v3608 = vadd.f32 %v3565, %v3607
    %3609 = vdwg.mxu0
    %v3610 = vmul.f32 %v3086, 0.2
    %v3611 = vmul.f32 %v3088, 0.2
    %v3612 = vmul.f32 %v3258, 0.2
    %v3613 = vmul.f32 %v3260, 0.2
    %v3614 = vmul.f32 %v3430, 0.2
    %v3615 = vmul.f32 %v3432, 0.2
    %v3616 = vmul.f32 %v3602, 0.2
    %v3617 = vmul.f32 %v3604, 0.2
    %v3618 = vmul.f32 %v3090, 0.2
    %v3619 = vmul.f32 %v3092, 0.2
    %v3620 = vmul.f32 %v3262, 0.2
    %v3621 = vmul.f32 %v3264, 0.2
    %v3622 = vmul.f32 %v3434, 0.2
    %v3623 = vmul.f32 %v3436, 0.2
    %v3624 = vmul.f32 %v3606, 0.2
    %v3625 = vmul.f32 %v3608, 0.2
    %v3626 = vmax.f32 %v3086, %v3610
    %v3627 = vmax.f32 %v3088, %v3611
    %v3628 = vmax.f32 %v3258, %v3612
    %v3629 = vmax.f32 %v3260, %v3613
    %v3630 = vmax.f32 %v3430, %v3614
    %v3631 = vmax.f32 %v3432, %v3615
    %v3632 = vmax.f32 %v3602, %v3616
    %v3633 = vmax.f32 %v3604, %v3617
    %v3634 = vmax.f32 %v3090, %v3618
    %v3635 = vmax.f32 %v3092, %v3619
    %v3636 = vmax.f32 %v3262, %v3620
    %v3637 = vmax.f32 %v3264, %v3621
    %v3638 = vmax.f32 %v3434, %v3622
    %v3639 = vmax.f32 %v3436, %v3623
    %v3640 = vmax.f32 %v3606, %v3624
    %v3641 = vmax.f32 %v3608, %v3625
    %v3642 = vpack.c.bf16 %v3634, %v3626
    %v3643 = vpack.c.bf16 %v3635, %v3627
    %v3644 = vpack.c.bf16 %v3636, %v3628
    %v3645 = vpack.c.bf16 %v3637, %v3629
    %v3646 = vpack.c.bf16 %v3638, %v3630
    %v3647 = vpack.c.bf16 %v3639, %v3631
    %v3648 = vpack.c.bf16 %v3640, %v3632
    %v3649 = vpack.c.bf16 %v3641, %v3633
    %v3650 = vld [vmem:[#allocation8] sm:$0xff]
    %v3651 = vld [vmem:[#allocation8 + $0x8] sm:$0xff]
    %v3652 = vld [vmem:[#allocation8 + $0x10] sm:$0xff]
    %v3653 = vld [vmem:[#allocation8 + $0x18] sm:$0xff]
    %v3654 = vld [vmem:[#allocation8 + $0x20] sm:$0xff]
    %v3655 = vld [vmem:[#allocation8 + $0x28] sm:$0xff]
    %v3656 = vld [vmem:[#allocation8 + $0x30] sm:$0xff]
    %v3657 = vld [vmem:[#allocation8 + $0x38] sm:$0xff]
    %v3658 = vld [vmem:[#allocation8 + $0x40] sm:$0xff]
    %v3659 = vld [vmem:[#allocation8 + $0x48] sm:$0xff]
    %v3660 = vld [vmem:[#allocation8 + $0x50] sm:$0xff]
    %v3661 = vld [vmem:[#allocation8 + $0x58] sm:$0xff]
    %v3662 = vld [vmem:[#allocation8 + $0x60] sm:$0xff]
    %v3663 = vld [vmem:[#allocation8 + $0x68] sm:$0xff]
    %v3664 = vld [vmem:[#allocation8 + $0x70] sm:$0xff]
    %v3665 = vld [vmem:[#allocation8 + $0x78] sm:$0xff]
    %v3666 = vld [vmem:[#allocation8 + $0x80] sm:$0xff]
    %v3667 = vld [vmem:[#allocation8 + $0x88] sm:$0xff]
    %v3668 = vld [vmem:[#allocation8 + $0x90] sm:$0xff]
    %v3669 = vld [vmem:[#allocation8 + $0x98] sm:$0xff]
    %v3670 = vld [vmem:[#allocation8 + $0xa0] sm:$0xff]
    %v3671 = vld [vmem:[#allocation8 + $0xa8] sm:$0xff]
    %v3672 = vld [vmem:[#allocation8 + $0xb0] sm:$0xff]
    %v3673 = vld [vmem:[#allocation8 + $0xb8] sm:$0xff]
    %v3674 = vld [vmem:[#allocation8 + $0xc0] sm:$0xff]
    %v3675 = vld [vmem:[#allocation8 + $0xc8] sm:$0xff]
    %v3676 = vld [vmem:[#allocation8 + $0xd0] sm:$0xff]
    %v3677 = vld [vmem:[#allocation8 + $0xd8] sm:$0xff]
    %v3678 = vld [vmem:[#allocation8 + $0xe0] sm:$0xff]
    %v3679 = vld [vmem:[#allocation8 + $0xe8] sm:$0xff]
    %v3680 = vld [vmem:[#allocation8 + $0xf0] sm:$0xff]
    %v3681 = vld [vmem:[#allocation8 + $0xf8] sm:$0xff]
    %v3682 = vld [vmem:[#allocation8 + $0x100] sm:$0xff]
    %v3683 = vld [vmem:[#allocation8 + $0x108] sm:$0xff]
    %v3684 = vld [vmem:[#allocation8 + $0x110] sm:$0xff]
    %v3685 = vld [vmem:[#allocation8 + $0x118] sm:$0xff]
    %v3686 = vld [vmem:[#allocation8 + $0x120] sm:$0xff]
    %v3687 = vld [vmem:[#allocation8 + $0x128] sm:$0xff]
    %v3688 = vld [vmem:[#allocation8 + $0x130] sm:$0xff]
    %v3689 = vld [vmem:[#allocation8 + $0x138] sm:$0xff]
    %v3690 = vld [vmem:[#allocation8 + $0x140] sm:$0xff]
    %v3691 = vld [vmem:[#allocation8 + $0x148] sm:$0xff]
    %v3692 = vld [vmem:[#allocation8 + $0x150] sm:$0xff]
    %v3693 = vld [vmem:[#allocation8 + $0x158] sm:$0xff]
    %v3694 = vld [vmem:[#allocation8 + $0x160] sm:$0xff]
    %v3695 = vld [vmem:[#allocation8 + $0x168] sm:$0xff]
    %v3696 = vld [vmem:[#allocation8 + $0x170] sm:$0xff]
    %v3697 = vld [vmem:[#allocation8 + $0x178] sm:$0xff]
    %v3698 = vld [vmem:[#allocation8 + $0x180] sm:$0xff]
    %v3699 = vld [vmem:[#allocation8 + $0x188] sm:$0xff]
    %v3700 = vld [vmem:[#allocation8 + $0x190] sm:$0xff]
    %v3701 = vld [vmem:[#allocation8 + $0x198] sm:$0xff]
    %v3702 = vld [vmem:[#allocation8 + $0x1a0] sm:$0xff]
    %v3703 = vld [vmem:[#allocation8 + $0x1a8] sm:$0xff]
    %v3704 = vld [vmem:[#allocation8 + $0x1b0] sm:$0xff]
    %v3705 = vld [vmem:[#allocation8 + $0x1b8] sm:$0xff]
    %v3706 = vld [vmem:[#allocation8 + $0x1c0] sm:$0xff]
    %v3707 = vld [vmem:[#allocation8 + $0x1c8] sm:$0xff]
    %v3708 = vld [vmem:[#allocation8 + $0x1d0] sm:$0xff]
    %v3709 = vld [vmem:[#allocation8 + $0x1d8] sm:$0xff]
    %v3710 = vld [vmem:[#allocation8 + $0x1e0] sm:$0xff]
    %v3711 = vld [vmem:[#allocation8 + $0x1e8] sm:$0xff]
    %v3712 = vld [vmem:[#allocation8 + $0x1f0] sm:$0xff]
    %v3713 = vld [vmem:[#allocation8 + $0x1f8] sm:$0xff]
    %v3714 = vld [vmem:[#allocation8 + $0x200] sm:$0xff]
    %v3715 = vld [vmem:[#allocation8 + $0x208] sm:$0xff]
    %v3716 = vld [vmem:[#allocation8 + $0x210] sm:$0xff]
    %v3717 = vld [vmem:[#allocation8 + $0x218] sm:$0xff]
    %v3718 = vld [vmem:[#allocation8 + $0x220] sm:$0xff]
    %v3719 = vld [vmem:[#allocation8 + $0x228] sm:$0xff]
    %v3720 = vld [vmem:[#allocation8 + $0x230] sm:$0xff]
    %v3721 = vld [vmem:[#allocation8 + $0x238] sm:$0xff]
    %v3722 = vld [vmem:[#allocation8 + $0x240] sm:$0xff]
    %v3723 = vld [vmem:[#allocation8 + $0x248] sm:$0xff]
    %v3724 = vld [vmem:[#allocation8 + $0x250] sm:$0xff]
    %v3725 = vld [vmem:[#allocation8 + $0x258] sm:$0xff]
    %v3726 = vld [vmem:[#allocation8 + $0x260] sm:$0xff]
    %v3727 = vld [vmem:[#allocation8 + $0x268] sm:$0xff]
    %v3728 = vld [vmem:[#allocation8 + $0x270] sm:$0xff]
    %v3729 = vld [vmem:[#allocation8 + $0x278] sm:$0xff]
    %v3730 = vld [vmem:[#allocation8 + $0x280] sm:$0xff]
    %v3731 = vld [vmem:[#allocation8 + $0x288] sm:$0xff]
    %v3732 = vld [vmem:[#allocation8 + $0x290] sm:$0xff]
    %v3733 = vld [vmem:[#allocation8 + $0x298] sm:$0xff]
    %v3734 = vld [vmem:[#allocation8 + $0x2a0] sm:$0xff]
    %v3735 = vld [vmem:[#allocation8 + $0x2a8] sm:$0xff]
    %v3736 = vld [vmem:[#allocation8 + $0x2b0] sm:$0xff]
    %v3737 = vld [vmem:[#allocation8 + $0x2b8] sm:$0xff]
    %v3738 = vld [vmem:[#allocation8 + $0x2c0] sm:$0xff]
    %v3739 = vld [vmem:[#allocation8 + $0x2c8] sm:$0xff]
    %v3740 = vld [vmem:[#allocation8 + $0x2d0] sm:$0xff]
    %v3741 = vld [vmem:[#allocation8 + $0x2d8] sm:$0xff]
    %v3742 = vld [vmem:[#allocation8 + $0x2e0] sm:$0xff]
    %v3743 = vld [vmem:[#allocation8 + $0x2e8] sm:$0xff]
    %v3744 = vld [vmem:[#allocation8 + $0x2f0] sm:$0xff]
    %v3745 = vld [vmem:[#allocation8 + $0x2f8] sm:$0xff]
    %v3746 = vld [vmem:[#allocation8 + $0x300] sm:$0xff]
    %v3747 = vld [vmem:[#allocation8 + $0x308] sm:$0xff]
    %v3748 = vld [vmem:[#allocation8 + $0x310] sm:$0xff]
    %v3749 = vld [vmem:[#allocation8 + $0x318] sm:$0xff]
    %v3750 = vld [vmem:[#allocation8 + $0x320] sm:$0xff]
    %v3751 = vld [vmem:[#allocation8 + $0x328] sm:$0xff]
    %v3752 = vld [vmem:[#allocation8 + $0x330] sm:$0xff]
    %v3753 = vld [vmem:[#allocation8 + $0x338] sm:$0xff]
    %v3754 = vld [vmem:[#allocation8 + $0x340] sm:$0xff]
    %v3755 = vld [vmem:[#allocation8 + $0x348] sm:$0xff]
    %v3756 = vld [vmem:[#allocation8 + $0x350] sm:$0xff]
    %v3757 = vld [vmem:[#allocation8 + $0x358] sm:$0xff]
    %v3758 = vld [vmem:[#allocation8 + $0x360] sm:$0xff]
    %v3759 = vld [vmem:[#allocation8 + $0x368] sm:$0xff]
    %v3760 = vld [vmem:[#allocation8 + $0x370] sm:$0xff]
    %v3761 = vld [vmem:[#allocation8 + $0x378] sm:$0xff]
    %v3762 = vld [vmem:[#allocation8 + $0x380] sm:$0xff]
    %v3763 = vld [vmem:[#allocation8 + $0x388] sm:$0xff]
    %v3764 = vld [vmem:[#allocation8 + $0x390] sm:$0xff]
    %v3765 = vld [vmem:[#allocation8 + $0x398] sm:$0xff]
    %v3766 = vld [vmem:[#allocation8 + $0x3a0] sm:$0xff]
    %v3767 = vld [vmem:[#allocation8 + $0x3a8] sm:$0xff]
    %v3768 = vld [vmem:[#allocation8 + $0x3b0] sm:$0xff]
    %v3769 = vld [vmem:[#allocation8 + $0x3b8] sm:$0xff]
    %v3770 = vld [vmem:[#allocation8 + $0x3c0] sm:$0xff]
    %v3771 = vld [vmem:[#allocation8 + $0x3c8] sm:$0xff]
    %v3772 = vld [vmem:[#allocation8 + $0x3d0] sm:$0xff]
    %v3773 = vld [vmem:[#allocation8 + $0x3d8] sm:$0xff]
    %v3774 = vld [vmem:[#allocation8 + $0x3e0] sm:$0xff]
    %v3775 = vld [vmem:[#allocation8 + $0x3e8] sm:$0xff]
    %v3776 = vld [vmem:[#allocation8 + $0x3f0] sm:$0xff]
    %v3777 = vld [vmem:[#allocation8 + $0x3f8] sm:$0xff]
    %v3778 = vld [vmem:[#allocation8 + $0x400] sm:$0xff]
    %v3779 = vld [vmem:[#allocation8 + $0x408] sm:$0xff]
    %v3780 = vld [vmem:[#allocation8 + $0x410] sm:$0xff]
    %v3781 = vld [vmem:[#allocation8 + $0x418] sm:$0xff]
    %v3782 = vld [vmem:[#allocation8 + $0x420] sm:$0xff]
    %v3783 = vld [vmem:[#allocation8 + $0x428] sm:$0xff]
    %v3784 = vld [vmem:[#allocation8 + $0x430] sm:$0xff]
    %v3785 = vld [vmem:[#allocation8 + $0x438] sm:$0xff]
    %v3786 = vld [vmem:[#allocation8 + $0x440] sm:$0xff]
    %v3787 = vld [vmem:[#allocation8 + $0x448] sm:$0xff]
    %v3788 = vld [vmem:[#allocation8 + $0x450] sm:$0xff]
    %v3789 = vld [vmem:[#allocation8 + $0x458] sm:$0xff]
    %v3790 = vld [vmem:[#allocation8 + $0x460] sm:$0xff]
    %v3791 = vld [vmem:[#allocation8 + $0x468] sm:$0xff]
    %v3792 = vld [vmem:[#allocation8 + $0x470] sm:$0xff]
    %v3793 = vld [vmem:[#allocation8 + $0x478] sm:$0xff]
    %v3794 = vld [vmem:[#allocation8 + $0x480] sm:$0xff]
    %v3795 = vld [vmem:[#allocation8 + $0x488] sm:$0xff]
    %v3796 = vld [vmem:[#allocation8 + $0x490] sm:$0xff]
    %v3797 = vld [vmem:[#allocation8 + $0x498] sm:$0xff]
    %v3798 = vld [vmem:[#allocation8 + $0x4a0] sm:$0xff]
    %v3799 = vld [vmem:[#allocation8 + $0x4a8] sm:$0xff]
    %v3800 = vld [vmem:[#allocation8 + $0x4b0] sm:$0xff]
    %v3801 = vld [vmem:[#allocation8 + $0x4b8] sm:$0xff]
    %v3802 = vld [vmem:[#allocation8 + $0x4c0] sm:$0xff]
    %v3803 = vld [vmem:[#allocation8 + $0x4c8] sm:$0xff]
    %v3804 = vld [vmem:[#allocation8 + $0x4d0] sm:$0xff]
    %v3805 = vld [vmem:[#allocation8 + $0x4d8] sm:$0xff]
    %v3806 = vld [vmem:[#allocation8 + $0x4e0] sm:$0xff]
    %v3807 = vld [vmem:[#allocation8 + $0x4e8] sm:$0xff]
    %v3808 = vld [vmem:[#allocation8 + $0x4f0] sm:$0xff]
    %v3809 = vld [vmem:[#allocation8 + $0x4f8] sm:$0xff]
    %v3810 = vld [vmem:[#allocation8 + $0x500] sm:$0xff]
    %v3811 = vld [vmem:[#allocation8 + $0x508] sm:$0xff]
    %v3812 = vld [vmem:[#allocation8 + $0x510] sm:$0xff]
    %v3813 = vld [vmem:[#allocation8 + $0x518] sm:$0xff]
    %v3814 = vld [vmem:[#allocation8 + $0x520] sm:$0xff]
    %v3815 = vld [vmem:[#allocation8 + $0x528] sm:$0xff]
    %v3816 = vld [vmem:[#allocation8 + $0x530] sm:$0xff]
    %v3817 = vld [vmem:[#allocation8 + $0x538] sm:$0xff]
    %v3818 = vld [vmem:[#allocation8 + $0x540] sm:$0xff]
    %v3819 = vld [vmem:[#allocation8 + $0x548] sm:$0xff]
    %v3820 = vld [vmem:[#allocation8 + $0x550] sm:$0xff]
    %v3821 = vld [vmem:[#allocation8 + $0x558] sm:$0xff]
    %v3822 = vld [vmem:[#allocation8 + $0x560] sm:$0xff]
    %v3823 = vld [vmem:[#allocation8 + $0x568] sm:$0xff]
    %v3824 = vld [vmem:[#allocation8 + $0x570] sm:$0xff]
    %v3825 = vld [vmem:[#allocation8 + $0x578] sm:$0xff]
    %v3826 = vld [vmem:[#allocation8 + $0x580] sm:$0xff]
    %v3827 = vld [vmem:[#allocation8 + $0x588] sm:$0xff]
    %v3828 = vld [vmem:[#allocation8 + $0x590] sm:$0xff]
    %v3829 = vld [vmem:[#allocation8 + $0x598] sm:$0xff]
    %v3830 = vld [vmem:[#allocation8 + $0x5a0] sm:$0xff]
    %v3831 = vld [vmem:[#allocation8 + $0x5a8] sm:$0xff]
    %v3832 = vld [vmem:[#allocation8 + $0x5b0] sm:$0xff]
    %v3833 = vld [vmem:[#allocation8 + $0x5b8] sm:$0xff]
    %v3834 = vld [vmem:[#allocation8 + $0x5c0] sm:$0xff]
    %v3835 = vld [vmem:[#allocation8 + $0x5c8] sm:$0xff]
    %v3836 = vld [vmem:[#allocation8 + $0x5d0] sm:$0xff]
    %v3837 = vld [vmem:[#allocation8 + $0x5d8] sm:$0xff]
    %v3838 = vld [vmem:[#allocation8 + $0x5e0] sm:$0xff]
    %v3839 = vld [vmem:[#allocation8 + $0x5e8] sm:$0xff]
    %v3840 = vld [vmem:[#allocation8 + $0x5f0] sm:$0xff]
    %v3841 = vld [vmem:[#allocation8 + $0x5f8] sm:$0xff]
    %v3842 = vld [vmem:[#allocation8 + $0x600] sm:$0xff]
    %v3843 = vld [vmem:[#allocation8 + $0x608] sm:$0xff]
    %v3844 = vld [vmem:[#allocation8 + $0x610] sm:$0xff]
    %v3845 = vld [vmem:[#allocation8 + $0x618] sm:$0xff]
    %v3846 = vld [vmem:[#allocation8 + $0x620] sm:$0xff]
    %v3847 = vld [vmem:[#allocation8 + $0x628] sm:$0xff]
    %v3848 = vld [vmem:[#allocation8 + $0x630] sm:$0xff]
    %v3849 = vld [vmem:[#allocation8 + $0x638] sm:$0xff]
    %v3850 = vld [vmem:[#allocation8 + $0x640] sm:$0xff]
    %v3851 = vld [vmem:[#allocation8 + $0x648] sm:$0xff]
    %v3852 = vld [vmem:[#allocation8 + $0x650] sm:$0xff]
    %v3853 = vld [vmem:[#allocation8 + $0x658] sm:$0xff]
    %v3854 = vld [vmem:[#allocation8 + $0x660] sm:$0xff]
    %v3855 = vld [vmem:[#allocation8 + $0x668] sm:$0xff]
    %v3856 = vld [vmem:[#allocation8 + $0x670] sm:$0xff]
    %v3857 = vld [vmem:[#allocation8 + $0x678] sm:$0xff]
    %v3858 = vld [vmem:[#allocation8 + $0x680] sm:$0xff]
    %v3859 = vld [vmem:[#allocation8 + $0x688] sm:$0xff]
    %v3860 = vld [vmem:[#allocation8 + $0x690] sm:$0xff]
    %v3861 = vld [vmem:[#allocation8 + $0x698] sm:$0xff]
    %v3862 = vld [vmem:[#allocation8 + $0x6a0] sm:$0xff]
    %v3863 = vld [vmem:[#allocation8 + $0x6a8] sm:$0xff]
    %v3864 = vld [vmem:[#allocation8 + $0x6b0] sm:$0xff]
    %v3865 = vld [vmem:[#allocation8 + $0x6b8] sm:$0xff]
    %v3866 = vld [vmem:[#allocation8 + $0x6c0] sm:$0xff]
    %v3867 = vld [vmem:[#allocation8 + $0x6c8] sm:$0xff]
    %v3868 = vld [vmem:[#allocation8 + $0x6d0] sm:$0xff]
    %v3869 = vld [vmem:[#allocation8 + $0x6d8] sm:$0xff]
    %v3870 = vld [vmem:[#allocation8 + $0x6e0] sm:$0xff]
    %v3871 = vld [vmem:[#allocation8 + $0x6e8] sm:$0xff]
    %v3872 = vld [vmem:[#allocation8 + $0x6f0] sm:$0xff]
    %v3873 = vld [vmem:[#allocation8 + $0x6f8] sm:$0xff]
    %v3874 = vld [vmem:[#allocation8 + $0x700] sm:$0xff]
    %v3875 = vld [vmem:[#allocation8 + $0x708] sm:$0xff]
    %v3876 = vld [vmem:[#allocation8 + $0x710] sm:$0xff]
    %v3877 = vld [vmem:[#allocation8 + $0x718] sm:$0xff]
    %v3878 = vld [vmem:[#allocation8 + $0x720] sm:$0xff]
    %v3879 = vld [vmem:[#allocation8 + $0x728] sm:$0xff]
    %v3880 = vld [vmem:[#allocation8 + $0x730] sm:$0xff]
    %v3881 = vld [vmem:[#allocation8 + $0x738] sm:$0xff]
    %v3882 = vld [vmem:[#allocation8 + $0x740] sm:$0xff]
    %v3883 = vld [vmem:[#allocation8 + $0x748] sm:$0xff]
    %v3884 = vld [vmem:[#allocation8 + $0x750] sm:$0xff]
    %v3885 = vld [vmem:[#allocation8 + $0x758] sm:$0xff]
    %v3886 = vld [vmem:[#allocation8 + $0x760] sm:$0xff]
    %v3887 = vld [vmem:[#allocation8 + $0x768] sm:$0xff]
    %v3888 = vld [vmem:[#allocation8 + $0x770] sm:$0xff]
    %v3889 = vld [vmem:[#allocation8 + $0x778] sm:$0xff]
    %v3890 = vld [vmem:[#allocation8 + $0x780] sm:$0xff]
    %v3891 = vld [vmem:[#allocation8 + $0x788] sm:$0xff]
    %v3892 = vld [vmem:[#allocation8 + $0x790] sm:$0xff]
    %v3893 = vld [vmem:[#allocation8 + $0x798] sm:$0xff]
    %v3894 = vld [vmem:[#allocation8 + $0x7a0] sm:$0xff]
    %v3895 = vld [vmem:[#allocation8 + $0x7a8] sm:$0xff]
    %v3896 = vld [vmem:[#allocation8 + $0x7b0] sm:$0xff]
    %v3897 = vld [vmem:[#allocation8 + $0x7b8] sm:$0xff]
    %v3898 = vld [vmem:[#allocation8 + $0x7c0] sm:$0xff]
    %v3899 = vld [vmem:[#allocation8 + $0x7c8] sm:$0xff]
    %v3900 = vld [vmem:[#allocation8 + $0x7d0] sm:$0xff]
    %v3901 = vld [vmem:[#allocation8 + $0x7d8] sm:$0xff]
    %v3902 = vld [vmem:[#allocation8 + $0x7e0] sm:$0xff]
    %v3903 = vld [vmem:[#allocation8 + $0x7e8] sm:$0xff]
    %v3904 = vld [vmem:[#allocation8 + $0x7f0] sm:$0xff]
    %v3905 = vld [vmem:[#allocation8 + $0x7f8] sm:$0xff]
    %v3906 = vld [vmem:[#allocation10] sm:$0xf]
    %v3908 = vlaneseq
    %v3909 = vshrl.u32 %v3908, 7
    %v3910 = vsub.s32 0, %v3909
    %v3911 = vrot.slane %v3906, %v3910
    %v3912 = vlaneseq
    %v3913 = vshrl.u32 %v3912, 7
    %v3914 = vsub.s32 1, %v3913
    %v3915 = vrot.slane %v3906, %v3914
    %v3916 = vlaneseq
    %v3917 = vshrl.u32 %v3916, 7
    %v3918 = vsub.s32 2, %v3917
    %v3919 = vrot.slane %v3906, %v3918
    %v3920 = vlaneseq
    %v3921 = vshrl.u32 %v3920, 7
    %v3922 = vsub.s32 3, %v3921
    %v3923 = vrot.slane %v3906, %v3922
    %v4184 = vunpack.c.l.b16 %v3650
    %v4185 = vunpack.c.h.b16 %v3650
    %v4186 = vunpack.c.l.b16 %v3651
    %v4187 = vunpack.c.h.b16 %v3651
    %v4188 = vunpack.c.l.b16 %v3652
    %v4189 = vunpack.c.h.b16 %v3652
    %v4190 = vunpack.c.l.b16 %v3653
    %v4191 = vunpack.c.h.b16 %v3653
    %v4192 = vunpack.c.l.b16 %v3654
    %v4193 = vunpack.c.h.b16 %v3654
    %v4194 = vunpack.c.l.b16 %v3655
    %v4195 = vunpack.c.h.b16 %v3655
    %v4196 = vunpack.c.l.b16 %v3656
    %v4197 = vunpack.c.h.b16 %v3656
    %v4198 = vunpack.c.l.b16 %v3657
    %v4199 = vunpack.c.h.b16 %v3657
    %v4200 = vunpack.c.l.b16 %v3658
    %v4201 = vunpack.c.h.b16 %v3658
    %v4202 = vunpack.c.l.b16 %v3659
    %v4203 = vunpack.c.h.b16 %v3659
    %v4204 = vunpack.c.l.b16 %v3660
    %v4205 = vunpack.c.h.b16 %v3660
    %v4206 = vunpack.c.l.b16 %v3661
    %v4207 = vunpack.c.h.b16 %v3661
    %v4208 = vunpack.c.l.b16 %v3662
    %v4209 = vunpack.c.h.b16 %v3662
    %v4210 = vunpack.c.l.b16 %v3663
    %v4211 = vunpack.c.h.b16 %v3663
    %v4212 = vunpack.c.l.b16 %v3664
    %v4213 = vunpack.c.h.b16 %v3664
    %v4214 = vunpack.c.l.b16 %v3665
    %v4215 = vunpack.c.h.b16 %v3665
    %v4216 = vunpack.c.l.b16 %v3666
    %v4217 = vunpack.c.h.b16 %v3666
    %v4218 = vunpack.c.l.b16 %v3667
    %v4219 = vunpack.c.h.b16 %v3667
    %v4220 = vunpack.c.l.b16 %v3668
    %v4221 = vunpack.c.h.b16 %v3668
    %v4222 = vunpack.c.l.b16 %v3669
    %v4223 = vunpack.c.h.b16 %v3669
    %v4224 = vunpack.c.l.b16 %v3670
    %v4225 = vunpack.c.h.b16 %v3670
    %v4226 = vunpack.c.l.b16 %v3671
    %v4227 = vunpack.c.h.b16 %v3671
    %v4228 = vunpack.c.l.b16 %v3672
    %v4229 = vunpack.c.h.b16 %v3672
    %v4230 = vunpack.c.l.b16 %v3673
    %v4231 = vunpack.c.h.b16 %v3673
    %v4232 = vunpack.c.l.b16 %v3674
    %v4233 = vunpack.c.h.b16 %v3674
    %v4234 = vunpack.c.l.b16 %v3675
    %v4235 = vunpack.c.h.b16 %v3675
    %v4236 = vunpack.c.l.b16 %v3676
    %v4237 = vunpack.c.h.b16 %v3676
    %v4238 = vunpack.c.l.b16 %v3677
    %v4239 = vunpack.c.h.b16 %v3677
    %v4240 = vunpack.c.l.b16 %v3678
    %v4241 = vunpack.c.h.b16 %v3678
    %v4242 = vunpack.c.l.b16 %v3679
    %v4243 = vunpack.c.h.b16 %v3679
    %v4244 = vunpack.c.l.b16 %v3680
    %v4245 = vunpack.c.h.b16 %v3680
    %v4246 = vunpack.c.l.b16 %v3681
    %v4247 = vunpack.c.h.b16 %v3681
    %v4248 = vunpack.c.l.b16 %v3682
    %v4249 = vunpack.c.h.b16 %v3682
    %v4250 = vunpack.c.l.b16 %v3683
    %v4251 = vunpack.c.h.b16 %v3683
    %v4252 = vunpack.c.l.b16 %v3684
    %v4253 = vunpack.c.h.b16 %v3684
    %v4254 = vunpack.c.l.b16 %v3685
    %v4255 = vunpack.c.h.b16 %v3685
    %v4256 = vunpack.c.l.b16 %v3686
    %v4257 = vunpack.c.h.b16 %v3686
    %v4258 = vunpack.c.l.b16 %v3687
    %v4259 = vunpack.c.h.b16 %v3687
    %v4260 = vunpack.c.l.b16 %v3688
    %v4261 = vunpack.c.h.b16 %v3688
    %v4262 = vunpack.c.l.b16 %v3689
    %v4263 = vunpack.c.h.b16 %v3689
    %v4264 = vunpack.c.l.b16 %v3690
    %v4265 = vunpack.c.h.b16 %v3690
    %v4266 = vunpack.c.l.b16 %v3691
    %v4267 = vunpack.c.h.b16 %v3691
    %v4268 = vunpack.c.l.b16 %v3692
    %v4269 = vunpack.c.h.b16 %v3692
    %v4270 = vunpack.c.l.b16 %v3693
    %v4271 = vunpack.c.h.b16 %v3693
    %v4272 = vunpack.c.l.b16 %v3694
    %v4273 = vunpack.c.h.b16 %v3694
    %v4274 = vunpack.c.l.b16 %v3695
    %v4275 = vunpack.c.h.b16 %v3695
    %v4276 = vunpack.c.l.b16 %v3696
    %v4277 = vunpack.c.h.b16 %v3696
    %v4278 = vunpack.c.l.b16 %v3697
    %v4279 = vunpack.c.h.b16 %v3697
    %v4280 = vunpack.c.l.b16 %v3698
    %v4281 = vunpack.c.h.b16 %v3698
    %v4282 = vunpack.c.l.b16 %v3699
    %v4283 = vunpack.c.h.b16 %v3699
    %v4284 = vunpack.c.l.b16 %v3700
    %v4285 = vunpack.c.h.b16 %v3700
    %v4286 = vunpack.c.l.b16 %v3701
    %v4287 = vunpack.c.h.b16 %v3701
    %v4288 = vunpack.c.l.b16 %v3702
    %v4289 = vunpack.c.h.b16 %v3702
    %v4290 = vunpack.c.l.b16 %v3703
    %v4291 = vunpack.c.h.b16 %v3703
    %v4292 = vunpack.c.l.b16 %v3704
    %v4293 = vunpack.c.h.b16 %v3704
    %v4294 = vunpack.c.l.b16 %v3705
    %v4295 = vunpack.c.h.b16 %v3705
    %v4296 = vunpack.c.l.b16 %v3706
    %v4297 = vunpack.c.h.b16 %v3706
    %v4298 = vunpack.c.l.b16 %v3707
    %v4299 = vunpack.c.h.b16 %v3707
    %v4300 = vunpack.c.l.b16 %v3708
    %v4301 = vunpack.c.h.b16 %v3708
    %v4302 = vunpack.c.l.b16 %v3709
    %v4303 = vunpack.c.h.b16 %v3709
    %v4304 = vunpack.c.l.b16 %v3710
    %v4305 = vunpack.c.h.b16 %v3710
    %v4306 = vunpack.c.l.b16 %v3711
    %v4307 = vunpack.c.h.b16 %v3711
    %v4308 = vunpack.c.l.b16 %v3712
    %v4309 = vunpack.c.h.b16 %v3712
    %v4310 = vunpack.c.l.b16 %v3713
    %v4311 = vunpack.c.h.b16 %v3713
    %v4312 = vunpack.c.l.b16 %v3714
    %v4313 = vunpack.c.h.b16 %v3714
    %v4314 = vunpack.c.l.b16 %v3715
    %v4315 = vunpack.c.h.b16 %v3715
    %v4316 = vunpack.c.l.b16 %v3716
    %v4317 = vunpack.c.h.b16 %v3716
    %v4318 = vunpack.c.l.b16 %v3717
    %v4319 = vunpack.c.h.b16 %v3717
    %v4320 = vunpack.c.l.b16 %v3718
    %v4321 = vunpack.c.h.b16 %v3718
    %v4322 = vunpack.c.l.b16 %v3719
    %v4323 = vunpack.c.h.b16 %v3719
    %v4324 = vunpack.c.l.b16 %v3720
    %v4325 = vunpack.c.h.b16 %v3720
    %v4326 = vunpack.c.l.b16 %v3721
    %v4327 = vunpack.c.h.b16 %v3721
    %v4328 = vunpack.c.l.b16 %v3722
    %v4329 = vunpack.c.h.b16 %v3722
    %v4330 = vunpack.c.l.b16 %v3723
    %v4331 = vunpack.c.h.b16 %v3723
    %v4332 = vunpack.c.l.b16 %v3724
    %v4333 = vunpack.c.h.b16 %v3724
    %v4334 = vunpack.c.l.b16 %v3725
    %v4335 = vunpack.c.h.b16 %v3725
    %v4336 = vunpack.c.l.b16 %v3726
    %v4337 = vunpack.c.h.b16 %v3726
    %v4338 = vunpack.c.l.b16 %v3727
    %v4339 = vunpack.c.h.b16 %v3727
    %v4340 = vunpack.c.l.b16 %v3728
    %v4341 = vunpack.c.h.b16 %v3728
    %v4342 = vunpack.c.l.b16 %v3729
    %v4343 = vunpack.c.h.b16 %v3729
    %v4344 = vunpack.c.l.b16 %v3730
    %v4345 = vunpack.c.h.b16 %v3730
    %v4346 = vunpack.c.l.b16 %v3731
    %v4347 = vunpack.c.h.b16 %v3731
    %v4348 = vunpack.c.l.b16 %v3732
    %v4349 = vunpack.c.h.b16 %v3732
    %v4350 = vunpack.c.l.b16 %v3733
    %v4351 = vunpack.c.h.b16 %v3733
    %v4352 = vunpack.c.l.b16 %v3734
    %v4353 = vunpack.c.h.b16 %v3734
    %v4354 = vunpack.c.l.b16 %v3735
    %v4355 = vunpack.c.h.b16 %v3735
    %v4356 = vunpack.c.l.b16 %v3736
    %v4357 = vunpack.c.h.b16 %v3736
    %v4358 = vunpack.c.l.b16 %v3737
    %v4359 = vunpack.c.h.b16 %v3737
    %v4360 = vunpack.c.l.b16 %v3738
    %v4361 = vunpack.c.h.b16 %v3738
    %v4362 = vunpack.c.l.b16 %v3739
    %v4363 = vunpack.c.h.b16 %v3739
    %v4364 = vunpack.c.l.b16 %v3740
    %v4365 = vunpack.c.h.b16 %v3740
    %v4366 = vunpack.c.l.b16 %v3741
    %v4367 = vunpack.c.h.b16 %v3741
    %v4368 = vunpack.c.l.b16 %v3742
    %v4369 = vunpack.c.h.b16 %v3742
    %v4370 = vunpack.c.l.b16 %v3743
    %v4371 = vunpack.c.h.b16 %v3743
    %v4372 = vunpack.c.l.b16 %v3744
    %v4373 = vunpack.c.h.b16 %v3744
    %v4374 = vunpack.c.l.b16 %v3745
    %v4375 = vunpack.c.h.b16 %v3745
    %v4376 = vunpack.c.l.b16 %v3746
    %v4377 = vunpack.c.h.b16 %v3746
    %v4378 = vunpack.c.l.b16 %v3747
    %v4379 = vunpack.c.h.b16 %v3747
    %v4380 = vunpack.c.l.b16 %v3748
    %v4381 = vunpack.c.h.b16 %v3748
    %v4382 = vunpack.c.l.b16 %v3749
    %v4383 = vunpack.c.h.b16 %v3749
    %v4384 = vunpack.c.l.b16 %v3750
    %v4385 = vunpack.c.h.b16 %v3750
    %v4386 = vunpack.c.l.b16 %v3751
    %v4387 = vunpack.c.h.b16 %v3751
    %v4388 = vunpack.c.l.b16 %v3752
    %v4389 = vunpack.c.h.b16 %v3752
    %v4390 = vunpack.c.l.b16 %v3753
    %v4391 = vunpack.c.h.b16 %v3753
    %v4392 = vunpack.c.l.b16 %v3754
    %v4393 = vunpack.c.h.b16 %v3754
    %v4394 = vunpack.c.l.b16 %v3755
    %v4395 = vunpack.c.h.b16 %v3755
    %v4396 = vunpack.c.l.b16 %v3756
    %v4397 = vunpack.c.h.b16 %v3756
    %v4398 = vunpack.c.l.b16 %v3757
    %v4399 = vunpack.c.h.b16 %v3757
    %v4400 = vunpack.c.l.b16 %v3758
    %v4401 = vunpack.c.h.b16 %v3758
    %v4402 = vunpack.c.l.b16 %v3759
    %v4403 = vunpack.c.h.b16 %v3759
    %v4404 = vunpack.c.l.b16 %v3760
    %v4405 = vunpack.c.h.b16 %v3760
    %v4406 = vunpack.c.l.b16 %v3761
    %v4407 = vunpack.c.h.b16 %v3761
    %v4408 = vunpack.c.l.b16 %v3762
    %v4409 = vunpack.c.h.b16 %v3762
    %v4410 = vunpack.c.l.b16 %v3763
    %v4411 = vunpack.c.h.b16 %v3763
    %v4412 = vunpack.c.l.b16 %v3764
    %v4413 = vunpack.c.h.b16 %v3764
    %v4414 = vunpack.c.l.b16 %v3765
    %v4415 = vunpack.c.h.b16 %v3765
    %v4416 = vunpack.c.l.b16 %v3766
    %v4417 = vunpack.c.h.b16 %v3766
    %v4418 = vunpack.c.l.b16 %v3767
    %v4419 = vunpack.c.h.b16 %v3767
    %v4420 = vunpack.c.l.b16 %v3768
    %v4421 = vunpack.c.h.b16 %v3768
    %v4422 = vunpack.c.l.b16 %v3769
    %v4423 = vunpack.c.h.b16 %v3769
    %v4424 = vunpack.c.l.b16 %v3770
    %v4425 = vunpack.c.h.b16 %v3770
    %v4426 = vunpack.c.l.b16 %v3771
    %v4427 = vunpack.c.h.b16 %v3771
    %v4428 = vunpack.c.l.b16 %v3772
    %v4429 = vunpack.c.h.b16 %v3772
    %v4430 = vunpack.c.l.b16 %v3773
    %v4431 = vunpack.c.h.b16 %v3773
    %v4432 = vunpack.c.l.b16 %v3774
    %v4433 = vunpack.c.h.b16 %v3774
    %v4434 = vunpack.c.l.b16 %v3775
    %v4435 = vunpack.c.h.b16 %v3775
    %v4436 = vunpack.c.l.b16 %v3776
    %v4437 = vunpack.c.h.b16 %v3776
    %v4438 = vunpack.c.l.b16 %v3777
    %v4439 = vunpack.c.h.b16 %v3777
    %v4440 = vunpack.c.l.b16 %v3778
    %v4441 = vunpack.c.h.b16 %v3778
    %v4442 = vunpack.c.l.b16 %v3779
    %v4443 = vunpack.c.h.b16 %v3779
    %v4444 = vunpack.c.l.b16 %v3780
    %v4445 = vunpack.c.h.b16 %v3780
    %v4446 = vunpack.c.l.b16 %v3781
    %v4447 = vunpack.c.h.b16 %v3781
    %v4448 = vunpack.c.l.b16 %v3782
    %v4449 = vunpack.c.h.b16 %v3782
    %v4450 = vunpack.c.l.b16 %v3783
    %v4451 = vunpack.c.h.b16 %v3783
    %v4452 = vunpack.c.l.b16 %v3784
    %v4453 = vunpack.c.h.b16 %v3784
    %v4454 = vunpack.c.l.b16 %v3785
    %v4455 = vunpack.c.h.b16 %v3785
    %v4456 = vunpack.c.l.b16 %v3786
    %v4457 = vunpack.c.h.b16 %v3786
    %v4458 = vunpack.c.l.b16 %v3787
    %v4459 = vunpack.c.h.b16 %v3787
    %v4460 = vunpack.c.l.b16 %v3788
    %v4461 = vunpack.c.h.b16 %v3788
    %v4462 = vunpack.c.l.b16 %v3789
    %v4463 = vunpack.c.h.b16 %v3789
    %v4464 = vunpack.c.l.b16 %v3790
    %v4465 = vunpack.c.h.b16 %v3790
    %v4466 = vunpack.c.l.b16 %v3791
    %v4467 = vunpack.c.h.b16 %v3791
    %v4468 = vunpack.c.l.b16 %v3792
    %v4469 = vunpack.c.h.b16 %v3792
    %v4470 = vunpack.c.l.b16 %v3793
    %v4471 = vunpack.c.h.b16 %v3793
    %v4472 = vunpack.c.l.b16 %v3794
    %v4473 = vunpack.c.h.b16 %v3794
    %v4474 = vunpack.c.l.b16 %v3795
    %v4475 = vunpack.c.h.b16 %v3795
    %v4476 = vunpack.c.l.b16 %v3796
    %v4477 = vunpack.c.h.b16 %v3796
    %v4478 = vunpack.c.l.b16 %v3797
    %v4479 = vunpack.c.h.b16 %v3797
    %v4480 = vunpack.c.l.b16 %v3798
    %v4481 = vunpack.c.h.b16 %v3798
    %v4482 = vunpack.c.l.b16 %v3799
    %v4483 = vunpack.c.h.b16 %v3799
    %v4484 = vunpack.c.l.b16 %v3800
    %v4485 = vunpack.c.h.b16 %v3800
    %v4486 = vunpack.c.l.b16 %v3801
    %v4487 = vunpack.c.h.b16 %v3801
    %v4488 = vunpack.c.l.b16 %v3802
    %v4489 = vunpack.c.h.b16 %v3802
    %v4490 = vunpack.c.l.b16 %v3803
    %v4491 = vunpack.c.h.b16 %v3803
    %v4492 = vunpack.c.l.b16 %v3804
    %v4493 = vunpack.c.h.b16 %v3804
    %v4494 = vunpack.c.l.b16 %v3805
    %v4495 = vunpack.c.h.b16 %v3805
    %v4496 = vunpack.c.l.b16 %v3806
    %v4497 = vunpack.c.h.b16 %v3806
    %v4498 = vunpack.c.l.b16 %v3807
    %v4499 = vunpack.c.h.b16 %v3807
    %v4500 = vunpack.c.l.b16 %v3808
    %v4501 = vunpack.c.h.b16 %v3808
    %v4502 = vunpack.c.l.b16 %v3809
    %v4503 = vunpack.c.h.b16 %v3809
    %v4504 = vunpack.c.l.b16 %v3810
    %v4505 = vunpack.c.h.b16 %v3810
    %v4506 = vunpack.c.l.b16 %v3811
    %v4507 = vunpack.c.h.b16 %v3811
    %v4508 = vunpack.c.l.b16 %v3812
    %v4509 = vunpack.c.h.b16 %v3812
    %v4510 = vunpack.c.l.b16 %v3813
    %v4511 = vunpack.c.h.b16 %v3813
    %v4512 = vunpack.c.l.b16 %v3814
    %v4513 = vunpack.c.h.b16 %v3814
    %v4514 = vunpack.c.l.b16 %v3815
    %v4515 = vunpack.c.h.b16 %v3815
    %v4516 = vunpack.c.l.b16 %v3816
    %v4517 = vunpack.c.h.b16 %v3816
    %v4518 = vunpack.c.l.b16 %v3817
    %v4519 = vunpack.c.h.b16 %v3817
    %v4520 = vunpack.c.l.b16 %v3818
    %v4521 = vunpack.c.h.b16 %v3818
    %v4522 = vunpack.c.l.b16 %v3819
    %v4523 = vunpack.c.h.b16 %v3819
    %v4524 = vunpack.c.l.b16 %v3820
    %v4525 = vunpack.c.h.b16 %v3820
    %v4526 = vunpack.c.l.b16 %v3821
    %v4527 = vunpack.c.h.b16 %v3821
    %v4528 = vunpack.c.l.b16 %v3822
    %v4529 = vunpack.c.h.b16 %v3822
    %v4530 = vunpack.c.l.b16 %v3823
    %v4531 = vunpack.c.h.b16 %v3823
    %v4532 = vunpack.c.l.b16 %v3824
    %v4533 = vunpack.c.h.b16 %v3824
    %v4534 = vunpack.c.l.b16 %v3825
    %v4535 = vunpack.c.h.b16 %v3825
    %v4536 = vunpack.c.l.b16 %v3826
    %v4537 = vunpack.c.h.b16 %v3826
    %v4538 = vunpack.c.l.b16 %v3827
    %v4539 = vunpack.c.h.b16 %v3827
    %v4540 = vunpack.c.l.b16 %v3828
    %v4541 = vunpack.c.h.b16 %v3828
    %v4542 = vunpack.c.l.b16 %v3829
    %v4543 = vunpack.c.h.b16 %v3829
    %v4544 = vunpack.c.l.b16 %v3830
    %v4545 = vunpack.c.h.b16 %v3830
    %v4546 = vunpack.c.l.b16 %v3831
    %v4547 = vunpack.c.h.b16 %v3831
    %v4548 = vunpack.c.l.b16 %v3832
    %v4549 = vunpack.c.h.b16 %v3832
    %v4550 = vunpack.c.l.b16 %v3833
    %v4551 = vunpack.c.h.b16 %v3833
    %v4552 = vunpack.c.l.b16 %v3834
    %v4553 = vunpack.c.h.b16 %v3834
    %v4554 = vunpack.c.l.b16 %v3835
    %v4555 = vunpack.c.h.b16 %v3835
    %v4556 = vunpack.c.l.b16 %v3836
    %v4557 = vunpack.c.h.b16 %v3836
    %v4558 = vunpack.c.l.b16 %v3837
    %v4559 = vunpack.c.h.b16 %v3837
    %v4560 = vunpack.c.l.b16 %v3838
    %v4561 = vunpack.c.h.b16 %v3838
    %v4562 = vunpack.c.l.b16 %v3839
    %v4563 = vunpack.c.h.b16 %v3839
    %v4564 = vunpack.c.l.b16 %v3840
    %v4565 = vunpack.c.h.b16 %v3840
    %v4566 = vunpack.c.l.b16 %v3841
    %v4567 = vunpack.c.h.b16 %v3841
    %v4568 = vunpack.c.l.b16 %v3842
    %v4569 = vunpack.c.h.b16 %v3842
    %v4570 = vunpack.c.l.b16 %v3843
    %v4571 = vunpack.c.h.b16 %v3843
    %v4572 = vunpack.c.l.b16 %v3844
    %v4573 = vunpack.c.h.b16 %v3844
    %v4574 = vunpack.c.l.b16 %v3845
    %v4575 = vunpack.c.h.b16 %v3845
    %v4576 = vunpack.c.l.b16 %v3846
    %v4577 = vunpack.c.h.b16 %v3846
    %v4578 = vunpack.c.l.b16 %v3847
    %v4579 = vunpack.c.h.b16 %v3847
    %v4580 = vunpack.c.l.b16 %v3848
    %v4581 = vunpack.c.h.b16 %v3848
    %v4582 = vunpack.c.l.b16 %v3849
    %v4583 = vunpack.c.h.b16 %v3849
    %v4584 = vunpack.c.l.b16 %v3850
    %v4585 = vunpack.c.h.b16 %v3850
    %v4586 = vunpack.c.l.b16 %v3851
    %v4587 = vunpack.c.h.b16 %v3851
    %v4588 = vunpack.c.l.b16 %v3852
    %v4589 = vunpack.c.h.b16 %v3852
    %v4590 = vunpack.c.l.b16 %v3853
    %v4591 = vunpack.c.h.b16 %v3853
    %v4592 = vunpack.c.l.b16 %v3854
    %v4593 = vunpack.c.h.b16 %v3854
    %v4594 = vunpack.c.l.b16 %v3855
    %v4595 = vunpack.c.h.b16 %v3855
    %v4596 = vunpack.c.l.b16 %v3856
    %v4597 = vunpack.c.h.b16 %v3856
    %v4598 = vunpack.c.l.b16 %v3857
    %v4599 = vunpack.c.h.b16 %v3857
    %v4600 = vunpack.c.l.b16 %v3858
    %v4601 = vunpack.c.h.b16 %v3858
    %v4602 = vunpack.c.l.b16 %v3859
    %v4603 = vunpack.c.h.b16 %v3859
    %v4604 = vunpack.c.l.b16 %v3860
    %v4605 = vunpack.c.h.b16 %v3860
    %v4606 = vunpack.c.l.b16 %v3861
    %v4607 = vunpack.c.h.b16 %v3861
    %v4608 = vunpack.c.l.b16 %v3862
    %v4609 = vunpack.c.h.b16 %v3862
    %v4610 = vunpack.c.l.b16 %v3863
    %v4611 = vunpack.c.h.b16 %v3863
    %v4612 = vunpack.c.l.b16 %v3864
    %v4613 = vunpack.c.h.b16 %v3864
    %v4614 = vunpack.c.l.b16 %v3865
    %v4615 = vunpack.c.h.b16 %v3865
    %v4616 = vunpack.c.l.b16 %v3866
    %v4617 = vunpack.c.h.b16 %v3866
    %v4618 = vunpack.c.l.b16 %v3867
    %v4619 = vunpack.c.h.b16 %v3867
    %v4620 = vunpack.c.l.b16 %v3868
    %v4621 = vunpack.c.h.b16 %v3868
    %v4622 = vunpack.c.l.b16 %v3869
    %v4623 = vunpack.c.h.b16 %v3869
    %v4624 = vunpack.c.l.b16 %v3870
    %v4625 = vunpack.c.h.b16 %v3870
    %v4626 = vunpack.c.l.b16 %v3871
    %v4627 = vunpack.c.h.b16 %v3871
    %v4628 = vunpack.c.l.b16 %v3872
    %v4629 = vunpack.c.h.b16 %v3872
    %v4630 = vunpack.c.l.b16 %v3873
    %v4631 = vunpack.c.h.b16 %v3873
    %v4632 = vunpack.c.l.b16 %v3874
    %v4633 = vunpack.c.h.b16 %v3874
    %v4634 = vunpack.c.l.b16 %v3875
    %v4635 = vunpack.c.h.b16 %v3875
    %v4636 = vunpack.c.l.b16 %v3876
    %v4637 = vunpack.c.h.b16 %v3876
    %v4638 = vunpack.c.l.b16 %v3877
    %v4639 = vunpack.c.h.b16 %v3877
    %v4640 = vunpack.c.l.b16 %v3878
    %v4641 = vunpack.c.h.b16 %v3878
    %v4642 = vunpack.c.l.b16 %v3879
    %v4643 = vunpack.c.h.b16 %v3879
    %v4644 = vunpack.c.l.b16 %v3880
    %v4645 = vunpack.c.h.b16 %v3880
    %v4646 = vunpack.c.l.b16 %v3881
    %v4647 = vunpack.c.h.b16 %v3881
    %v4648 = vunpack.c.l.b16 %v3882
    %v4649 = vunpack.c.h.b16 %v3882
    %v4650 = vunpack.c.l.b16 %v3883
    %v4651 = vunpack.c.h.b16 %v3883
    %v4652 = vunpack.c.l.b16 %v3884
    %v4653 = vunpack.c.h.b16 %v3884
    %v4654 = vunpack.c.l.b16 %v3885
    %v4655 = vunpack.c.h.b16 %v3885
    %v4656 = vunpack.c.l.b16 %v3886
    %v4657 = vunpack.c.h.b16 %v3886
    %v4658 = vunpack.c.l.b16 %v3887
    %v4659 = vunpack.c.h.b16 %v3887
    %v4660 = vunpack.c.l.b16 %v3888
    %v4661 = vunpack.c.h.b16 %v3888
    %v4662 = vunpack.c.l.b16 %v3889
    %v4663 = vunpack.c.h.b16 %v3889
    %v4664 = vunpack.c.l.b16 %v3890
    %v4665 = vunpack.c.h.b16 %v3890
    %v4666 = vunpack.c.l.b16 %v3891
    %v4667 = vunpack.c.h.b16 %v3891
    %v4668 = vunpack.c.l.b16 %v3892
    %v4669 = vunpack.c.h.b16 %v3892
    %v4670 = vunpack.c.l.b16 %v3893
    %v4671 = vunpack.c.h.b16 %v3893
    %v4672 = vunpack.c.l.b16 %v3894
    %v4673 = vunpack.c.h.b16 %v3894
    %v4674 = vunpack.c.l.b16 %v3895
    %v4675 = vunpack.c.h.b16 %v3895
    %v4676 = vunpack.c.l.b16 %v3896
    %v4677 = vunpack.c.h.b16 %v3896
    %v4678 = vunpack.c.l.b16 %v3897
    %v4679 = vunpack.c.h.b16 %v3897
    %v4680 = vunpack.c.l.b16 %v3898
    %v4681 = vunpack.c.h.b16 %v3898
    %v4682 = vunpack.c.l.b16 %v3899
    %v4683 = vunpack.c.h.b16 %v3899
    %v4684 = vunpack.c.l.b16 %v3900
    %v4685 = vunpack.c.h.b16 %v3900
    %v4686 = vunpack.c.l.b16 %v3901
    %v4687 = vunpack.c.h.b16 %v3901
    %v4688 = vunpack.c.l.b16 %v3902
    %v4689 = vunpack.c.h.b16 %v3902
    %v4690 = vunpack.c.l.b16 %v3903
    %v4691 = vunpack.c.h.b16 %v3903
    %v4692 = vunpack.c.l.b16 %v3904
    %v4693 = vunpack.c.h.b16 %v3904
    %v4694 = vunpack.c.l.b16 %v3905
    %v4695 = vunpack.c.h.b16 %v3905
    %v4696 = vpack.c.b16 %v4188, %v4184
    %v4697 = vpack.c.b16 %v4189, %v4185
    %v4698 = vpack.c.b16 %v4190, %v4186
    %v4699 = vpack.c.b16 %v4191, %v4187
    %v4700 = vpack.c.b16 %v4196, %v4192
    %v4701 = vpack.c.b16 %v4197, %v4193
    %v4702 = vpack.c.b16 %v4198, %v4194
    %v4703 = vpack.c.b16 %v4199, %v4195
    %v4704 = vpack.c.b16 %v4204, %v4200
    %v4705 = vpack.c.b16 %v4205, %v4201
    %v4706 = vpack.c.b16 %v4206, %v4202
    %v4707 = vpack.c.b16 %v4207, %v4203
    %v4708 = vpack.c.b16 %v4212, %v4208
    %v4709 = vpack.c.b16 %v4213, %v4209
    %v4710 = vpack.c.b16 %v4214, %v4210
    %v4711 = vpack.c.b16 %v4215, %v4211
    %v4712 = vpack.c.b16 %v4220, %v4216
    %v4713 = vpack.c.b16 %v4221, %v4217
    %v4714 = vpack.c.b16 %v4222, %v4218
    %v4715 = vpack.c.b16 %v4223, %v4219
    %v4716 = vpack.c.b16 %v4228, %v4224
    %v4717 = vpack.c.b16 %v4229, %v4225
    %v4718 = vpack.c.b16 %v4230, %v4226
    %v4719 = vpack.c.b16 %v4231, %v4227
    %v4720 = vpack.c.b16 %v4236, %v4232
    %v4721 = vpack.c.b16 %v4237, %v4233
    %v4722 = vpack.c.b16 %v4238, %v4234
    %v4723 = vpack.c.b16 %v4239, %v4235
    %v4724 = vpack.c.b16 %v4244, %v4240
    %v4725 = vpack.c.b16 %v4245, %v4241
    %v4726 = vpack.c.b16 %v4246, %v4242
    %v4727 = vpack.c.b16 %v4247, %v4243
    %v4728 = vpack.c.b16 %v4252, %v4248
    %v4729 = vpack.c.b16 %v4253, %v4249
    %v4730 = vpack.c.b16 %v4254, %v4250
    %v4731 = vpack.c.b16 %v4255, %v4251
    %v4732 = vpack.c.b16 %v4260, %v4256
    %v4733 = vpack.c.b16 %v4261, %v4257
    %v4734 = vpack.c.b16 %v4262, %v4258
    %v4735 = vpack.c.b16 %v4263, %v4259
    %v4736 = vpack.c.b16 %v4268, %v4264
    %v4737 = vpack.c.b16 %v4269, %v4265
    %v4738 = vpack.c.b16 %v4270, %v4266
    %v4739 = vpack.c.b16 %v4271, %v4267
    %v4740 = vpack.c.b16 %v4276, %v4272
    %v4741 = vpack.c.b16 %v4277, %v4273
    %v4742 = vpack.c.b16 %v4278, %v4274
    %v4743 = vpack.c.b16 %v4279, %v4275
    %v4744 = vpack.c.b16 %v4284, %v4280
    %v4745 = vpack.c.b16 %v4285, %v4281
    %v4746 = vpack.c.b16 %v4286, %v4282
    %v4747 = vpack.c.b16 %v4287, %v4283
    %v4748 = vpack.c.b16 %v4292, %v4288
    %v4749 = vpack.c.b16 %v4293, %v4289
    %v4750 = vpack.c.b16 %v4294, %v4290
    %v4751 = vpack.c.b16 %v4295, %v4291
    %v4752 = vpack.c.b16 %v4300, %v4296
    %v4753 = vpack.c.b16 %v4301, %v4297
    %v4754 = vpack.c.b16 %v4302, %v4298
    %v4755 = vpack.c.b16 %v4303, %v4299
    %v4756 = vpack.c.b16 %v4308, %v4304
    %v4757 = vpack.c.b16 %v4309, %v4305
    %v4758 = vpack.c.b16 %v4310, %v4306
    %v4759 = vpack.c.b16 %v4311, %v4307
    %v4760 = vpack.c.b16 %v4316, %v4312
    %v4761 = vpack.c.b16 %v4317, %v4313
    %v4762 = vpack.c.b16 %v4318, %v4314
    %v4763 = vpack.c.b16 %v4319, %v4315
    %v4764 = vpack.c.b16 %v4324, %v4320
    %v4765 = vpack.c.b16 %v4325, %v4321
    %v4766 = vpack.c.b16 %v4326, %v4322
    %v4767 = vpack.c.b16 %v4327, %v4323
    %v4768 = vpack.c.b16 %v4332, %v4328
    %v4769 = vpack.c.b16 %v4333, %v4329
    %v4770 = vpack.c.b16 %v4334, %v4330
    %v4771 = vpack.c.b16 %v4335, %v4331
    %v4772 = vpack.c.b16 %v4340, %v4336
    %v4773 = vpack.c.b16 %v4341, %v4337
    %v4774 = vpack.c.b16 %v4342, %v4338
    %v4775 = vpack.c.b16 %v4343, %v4339
    %v4776 = vpack.c.b16 %v4348, %v4344
    %v4777 = vpack.c.b16 %v4349, %v4345
    %v4778 = vpack.c.b16 %v4350, %v4346
    %v4779 = vpack.c.b16 %v4351, %v4347
    %v4780 = vpack.c.b16 %v4356, %v4352
    %v4781 = vpack.c.b16 %v4357, %v4353
    %v4782 = vpack.c.b16 %v4358, %v4354
    %v4783 = vpack.c.b16 %v4359, %v4355
    %v4784 = vpack.c.b16 %v4364, %v4360
    %v4785 = vpack.c.b16 %v4365, %v4361
    %v4786 = vpack.c.b16 %v4366, %v4362
    %v4787 = vpack.c.b16 %v4367, %v4363
    %v4788 = vpack.c.b16 %v4372, %v4368
    %v4789 = vpack.c.b16 %v4373, %v4369
    %v4790 = vpack.c.b16 %v4374, %v4370
    %v4791 = vpack.c.b16 %v4375, %v4371
    %v4792 = vpack.c.b16 %v4380, %v4376
    %v4793 = vpack.c.b16 %v4381, %v4377
    %v4794 = vpack.c.b16 %v4382, %v4378
    %v4795 = vpack.c.b16 %v4383, %v4379
    %v4796 = vpack.c.b16 %v4388, %v4384
    %v4797 = vpack.c.b16 %v4389, %v4385
    %v4798 = vpack.c.b16 %v4390, %v4386
    %v4799 = vpack.c.b16 %v4391, %v4387
    %v4800 = vpack.c.b16 %v4396, %v4392
    %v4801 = vpack.c.b16 %v4397, %v4393
    %v4802 = vpack.c.b16 %v4398, %v4394
    %v4803 = vpack.c.b16 %v4399, %v4395
    %v4804 = vpack.c.b16 %v4404, %v4400
    %v4805 = vpack.c.b16 %v4405, %v4401
    %v4806 = vpack.c.b16 %v4406, %v4402
    %v4807 = vpack.c.b16 %v4407, %v4403
    %v4808 = vpack.c.b16 %v4412, %v4408
    %v4809 = vpack.c.b16 %v4413, %v4409
    %v4810 = vpack.c.b16 %v4414, %v4410
    %v4811 = vpack.c.b16 %v4415, %v4411
    %v4812 = vpack.c.b16 %v4420, %v4416
    %v4813 = vpack.c.b16 %v4421, %v4417
    %v4814 = vpack.c.b16 %v4422, %v4418
    %v4815 = vpack.c.b16 %v4423, %v4419
    %v4816 = vpack.c.b16 %v4428, %v4424
    %v4817 = vpack.c.b16 %v4429, %v4425
    %v4818 = vpack.c.b16 %v4430, %v4426
    %v4819 = vpack.c.b16 %v4431, %v4427
    %v4820 = vpack.c.b16 %v4436, %v4432
    %v4821 = vpack.c.b16 %v4437, %v4433
    %v4822 = vpack.c.b16 %v4438, %v4434
    %v4823 = vpack.c.b16 %v4439, %v4435
    %v4824 = vpack.c.b16 %v4444, %v4440
    %v4825 = vpack.c.b16 %v4445, %v4441
    %v4826 = vpack.c.b16 %v4446, %v4442
    %v4827 = vpack.c.b16 %v4447, %v4443
    %v4828 = vpack.c.b16 %v4452, %v4448
    %v4829 = vpack.c.b16 %v4453, %v4449
    %v4830 = vpack.c.b16 %v4454, %v4450
    %v4831 = vpack.c.b16 %v4455, %v4451
    %v4832 = vpack.c.b16 %v4460, %v4456
    %v4833 = vpack.c.b16 %v4461, %v4457
    %v4834 = vpack.c.b16 %v4462, %v4458
    %v4835 = vpack.c.b16 %v4463, %v4459
    %v4836 = vpack.c.b16 %v4468, %v4464
    %v4837 = vpack.c.b16 %v4469, %v4465
    %v4838 = vpack.c.b16 %v4470, %v4466
    %v4839 = vpack.c.b16 %v4471, %v4467
    %v4840 = vpack.c.b16 %v4476, %v4472
    %v4841 = vpack.c.b16 %v4477, %v4473
    %v4842 = vpack.c.b16 %v4478, %v4474
    %v4843 = vpack.c.b16 %v4479, %v4475
    %v4844 = vpack.c.b16 %v4484, %v4480
    %v4845 = vpack.c.b16 %v4485, %v4481
    %v4846 = vpack.c.b16 %v4486, %v4482
    %v4847 = vpack.c.b16 %v4487, %v4483
    %v4848 = vpack.c.b16 %v4492, %v4488
    %v4849 = vpack.c.b16 %v4493, %v4489
    %v4850 = vpack.c.b16 %v4494, %v4490
    %v4851 = vpack.c.b16 %v4495, %v4491
    %v4852 = vpack.c.b16 %v4500, %v4496
    %v4853 = vpack.c.b16 %v4501, %v4497
    %v4854 = vpack.c.b16 %v4502, %v4498
    %v4855 = vpack.c.b16 %v4503, %v4499
    %v4856 = vpack.c.b16 %v4508, %v4504
    %v4857 = vpack.c.b16 %v4509, %v4505
    %v4858 = vpack.c.b16 %v4510, %v4506
    %v4859 = vpack.c.b16 %v4511, %v4507
    %v4860 = vpack.c.b16 %v4516, %v4512
    %v4861 = vpack.c.b16 %v4517, %v4513
    %v4862 = vpack.c.b16 %v4518, %v4514
    %v4863 = vpack.c.b16 %v4519, %v4515
    %v4864 = vpack.c.b16 %v4524, %v4520
    %v4865 = vpack.c.b16 %v4525, %v4521
    %v4866 = vpack.c.b16 %v4526, %v4522
    %v4867 = vpack.c.b16 %v4527, %v4523
    %v4868 = vpack.c.b16 %v4532, %v4528
    %v4869 = vpack.c.b16 %v4533, %v4529
    %v4870 = vpack.c.b16 %v4534, %v4530
    %v4871 = vpack.c.b16 %v4535, %v4531
    %v4872 = vpack.c.b16 %v4540, %v4536
    %v4873 = vpack.c.b16 %v4541, %v4537
    %v4874 = vpack.c.b16 %v4542, %v4538
    %v4875 = vpack.c.b16 %v4543, %v4539
    %v4876 = vpack.c.b16 %v4548, %v4544
    %v4877 = vpack.c.b16 %v4549, %v4545
    %v4878 = vpack.c.b16 %v4550, %v4546
    %v4879 = vpack.c.b16 %v4551, %v4547
    %v4880 = vpack.c.b16 %v4556, %v4552
    %v4881 = vpack.c.b16 %v4557, %v4553
    %v4882 = vpack.c.b16 %v4558, %v4554
    %v4883 = vpack.c.b16 %v4559, %v4555
    %v4884 = vpack.c.b16 %v4564, %v4560
    %v4885 = vpack.c.b16 %v4565, %v4561
    %v4886 = vpack.c.b16 %v4566, %v4562
    %v4887 = vpack.c.b16 %v4567, %v4563
    %v4888 = vpack.c.b16 %v4572, %v4568
    %v4889 = vpack.c.b16 %v4573, %v4569
    %v4890 = vpack.c.b16 %v4574, %v4570
    %v4891 = vpack.c.b16 %v4575, %v4571
    %v4892 = vpack.c.b16 %v4580, %v4576
    %v4893 = vpack.c.b16 %v4581, %v4577
    %v4894 = vpack.c.b16 %v4582, %v4578
    %v4895 = vpack.c.b16 %v4583, %v4579
    %v4896 = vpack.c.b16 %v4588, %v4584
    %v4897 = vpack.c.b16 %v4589, %v4585
    %v4898 = vpack.c.b16 %v4590, %v4586
    %v4899 = vpack.c.b16 %v4591, %v4587
    %v4900 = vpack.c.b16 %v4596, %v4592
    %v4901 = vpack.c.b16 %v4597, %v4593
    %v4902 = vpack.c.b16 %v4598, %v4594
    %v4903 = vpack.c.b16 %v4599, %v4595
    %v4904 = vpack.c.b16 %v4604, %v4600
    %v4905 = vpack.c.b16 %v4605, %v4601
    %v4906 = vpack.c.b16 %v4606, %v4602
    %v4907 = vpack.c.b16 %v4607, %v4603
    %v4908 = vpack.c.b16 %v4612, %v4608
    %v4909 = vpack.c.b16 %v4613, %v4609
    %v4910 = vpack.c.b16 %v4614, %v4610
    %v4911 = vpack.c.b16 %v4615, %v4611
    %v4912 = vpack.c.b16 %v4620, %v4616
    %v4913 = vpack.c.b16 %v4621, %v4617
    %v4914 = vpack.c.b16 %v4622, %v4618
    %v4915 = vpack.c.b16 %v4623, %v4619
    %v4916 = vpack.c.b16 %v4628, %v4624
    %v4917 = vpack.c.b16 %v4629, %v4625
    %v4918 = vpack.c.b16 %v4630, %v4626
    %v4919 = vpack.c.b16 %v4631, %v4627
    %v4920 = vpack.c.b16 %v4636, %v4632
    %v4921 = vpack.c.b16 %v4637, %v4633
    %v4922 = vpack.c.b16 %v4638, %v4634
    %v4923 = vpack.c.b16 %v4639, %v4635
    %v4924 = vpack.c.b16 %v4644, %v4640
    %v4925 = vpack.c.b16 %v4645, %v4641
    %v4926 = vpack.c.b16 %v4646, %v4642
    %v4927 = vpack.c.b16 %v4647, %v4643
    %v4928 = vpack.c.b16 %v4652, %v4648
    %v4929 = vpack.c.b16 %v4653, %v4649
    %v4930 = vpack.c.b16 %v4654, %v4650
    %v4931 = vpack.c.b16 %v4655, %v4651
    %v4932 = vpack.c.b16 %v4660, %v4656
    %v4933 = vpack.c.b16 %v4661, %v4657
    %v4934 = vpack.c.b16 %v4662, %v4658
    %v4935 = vpack.c.b16 %v4663, %v4659
    %v4936 = vpack.c.b16 %v4668, %v4664
    %v4937 = vpack.c.b16 %v4669, %v4665
    %v4938 = vpack.c.b16 %v4670, %v4666
    %v4939 = vpack.c.b16 %v4671, %v4667
    %v4940 = vpack.c.b16 %v4676, %v4672
    %v4941 = vpack.c.b16 %v4677, %v4673
    %v4942 = vpack.c.b16 %v4678, %v4674
    %v4943 = vpack.c.b16 %v4679, %v4675
    %v4944 = vpack.c.b16 %v4684, %v4680
    %v4945 = vpack.c.b16 %v4685, %v4681
    %v4946 = vpack.c.b16 %v4686, %v4682
    %v4947 = vpack.c.b16 %v4687, %v4683
    %v4948 = vpack.c.b16 %v4692, %v4688
    %v4949 = vpack.c.b16 %v4693, %v4689
    %v4950 = vpack.c.b16 %v4694, %v4690
    %v4951 = vpack.c.b16 %v4695, %v4691
    %5208 = vmatprep.subr.bf16.mxu0 %v4697
    %5209 = vmatpush1.bf16.msra.mxu0 %v4696
    %5210 = vmatprep.subr.bf16.mxu0 %v4701
    %5211 = vmatpush1.bf16.msra.mxu0 %v4700
    %5212 = vmatprep.subr.bf16.mxu0 %v4705
    %5213 = vmatpush1.bf16.msra.mxu0 %v4704
    %5214 = vmatprep.subr.bf16.mxu0 %v4709
    %5215 = vmatpush1.bf16.msra.mxu0 %v4708
    %5216 = vmatprep.subr.bf16.mxu0 %v4713
    %5217 = vmatpush1.bf16.msra.mxu0 %v4712
    %5218 = vmatprep.subr.bf16.mxu0 %v4717
    %5219 = vmatpush1.bf16.msra.mxu0 %v4716
    %5220 = vmatprep.subr.bf16.mxu0 %v4721
    %5221 = vmatpush1.bf16.msra.mxu0 %v4720
    %5222 = vmatprep.subr.bf16.mxu0 %v4725
    %5223 = vmatpush1.bf16.msra.mxu0 %v4724
    %5224 = vmatprep.subr.bf16.mxu0 %v4729
    %5225 = vmatpush1.bf16.msra.mxu0 %v4728
    %5226 = vmatprep.subr.bf16.mxu0 %v4733
    %5227 = vmatpush1.bf16.msra.mxu0 %v4732
    %5228 = vmatprep.subr.bf16.mxu0 %v4737
    %5229 = vmatpush1.bf16.msra.mxu0 %v4736
    %5230 = vmatprep.subr.bf16.mxu0 %v4741
    %5231 = vmatpush1.bf16.msra.mxu0 %v4740
    %5232 = vmatprep.subr.bf16.mxu0 %v4745
    %5233 = vmatpush1.bf16.msra.mxu0 %v4744
    %5234 = vmatprep.subr.bf16.mxu0 %v4749
    %5235 = vmatpush1.bf16.msra.mxu0 %v4748
    %5236 = vmatprep.subr.bf16.mxu0 %v4753
    %5237 = vmatpush1.bf16.msra.mxu0 %v4752
    %5238 = vmatprep.subr.bf16.mxu0 %v4757
    %5239 = vmatpush1.bf16.msra.mxu0 %v4756
    %5240 = vmatprep.mubr.bf16.mxu0 %v3643
    %5241 = vmatmul.mubr.bf16.gmra.mrb[0].mxu0 %v3642
    %v5242 = vpop.f32.mrb[0].mxu0
    %v5243 = vadd.f32 %v3911, %v5242
    %v5244 = vpop.f32.mrb[0].mxu0
    %v5245 = vadd.f32 %v3915, %v5244
    %v5246 = vpop.f32.mrb[0].mxu0
    %v5247 = vadd.f32 %v3911, %v5246
    %v5248 = vpop.f32.mrb[0].mxu0
    %v5249 = vadd.f32 %v3915, %v5248
    %5250 = vdwg.mxu0
    %5251 = vmatprep.subr.bf16.mxu0 %v4761
    %5252 = vmatpush1.bf16.msra.mxu0 %v4760
    %5253 = vmatprep.subr.bf16.mxu0 %v4765
    %5254 = vmatpush1.bf16.msra.mxu0 %v4764
    %5255 = vmatprep.subr.bf16.mxu0 %v4769
    %5256 = vmatpush1.bf16.msra.mxu0 %v4768
    %5257 = vmatprep.subr.bf16.mxu0 %v4773
    %5258 = vmatpush1.bf16.msra.mxu0 %v4772
    %5259 = vmatprep.subr.bf16.mxu0 %v4777
    %5260 = vmatpush1.bf16.msra.mxu0 %v4776
    %5261 = vmatprep.subr.bf16.mxu0 %v4781
    %5262 = vmatpush1.bf16.msra.mxu0 %v4780
    %5263 = vmatprep.subr.bf16.mxu0 %v4785
    %5264 = vmatpush1.bf16.msra.mxu0 %v4784
    %5265 = vmatprep.subr.bf16.mxu0 %v4789
    %5266 = vmatpush1.bf16.msra.mxu0 %v4788
    %5267 = vmatprep.subr.bf16.mxu0 %v4793
    %5268 = vmatpush1.bf16.msra.mxu0 %v4792
    %5269 = vmatprep.subr.bf16.mxu0 %v4797
    %5270 = vmatpush1.bf16.msra.mxu0 %v4796
    %5271 = vmatprep.subr.bf16.mxu0 %v4801
    %5272 = vmatpush1.bf16.msra.mxu0 %v4800
    %5273 = vmatprep.subr.bf16.mxu0 %v4805
    %5274 = vmatpush1.bf16.msra.mxu0 %v4804
    %5275 = vmatprep.subr.bf16.mxu0 %v4809
    %5276 = vmatpush1.bf16.msra.mxu0 %v4808
    %5277 = vmatprep.subr.bf16.mxu0 %v4813
    %5278 = vmatpush1.bf16.msra.mxu0 %v4812
    %5279 = vmatprep.subr.bf16.mxu0 %v4817
    %5280 = vmatpush1.bf16.msra.mxu0 %v4816
    %5281 = vmatprep.subr.bf16.mxu0 %v4821
    %5282 = vmatpush1.bf16.msra.mxu0 %v4820
    %5283 = vmatprep.mubr.bf16.mxu0 %v3645
    %5284 = vmatmul.mubr.bf16.gmra.mrb[0].mxu0 %v3644
    %v5285 = vpop.f32.mrb[0].mxu0
    %v5286 = vadd.f32 %v5243, %v5285
    %v5287 = vpop.f32.mrb[0].mxu0
    %v5288 = vadd.f32 %v5245, %v5287
    %v5289 = vpop.f32.mrb[0].mxu0
    %v5290 = vadd.f32 %v5247, %v5289
    %v5291 = vpop.f32.mrb[0].mxu0
    %v5292 = vadd.f32 %v5249, %v5291
    %5293 = vdwg.mxu0
    %5294 = vmatprep.subr.bf16.mxu0 %v4825
    %5295 = vmatpush1.bf16.msra.mxu0 %v4824
    %5296 = vmatprep.subr.bf16.mxu0 %v4829
    %5297 = vmatpush1.bf16.msra.mxu0 %v4828
    %5298 = vmatprep.subr.bf16.mxu0 %v4833
    %5299 = vmatpush1.bf16.msra.mxu0 %v4832
    %5300 = vmatprep.subr.bf16.mxu0 %v4837
    %5301 = vmatpush1.bf16.msra.mxu0 %v4836
    %5302 = vmatprep.subr.bf16.mxu0 %v4841
    %5303 = vmatpush1.bf16.msra.mxu0 %v4840
    %5304 = vmatprep.subr.bf16.mxu0 %v4845
    %5305 = vmatpush1.bf16.msra.mxu0 %v4844
    %5306 = vmatprep.subr.bf16.mxu0 %v4849
    %5307 = vmatpush1.bf16.msra.mxu0 %v4848
    %5308 = vmatprep.subr.bf16.mxu0 %v4853
    %5309 = vmatpush1.bf16.msra.mxu0 %v4852
    %5310 = vmatprep.subr.bf16.mxu0 %v4857
    %5311 = vmatpush1.bf16.msra.mxu0 %v4856
    %5312 = vmatprep.subr.bf16.mxu0 %v4861
    %5313 = vmatpush1.bf16.msra.mxu0 %v4860
    %5314 = vmatprep.subr.bf16.mxu0 %v4865
    %5315 = vmatpush1.bf16.msra.mxu0 %v4864
    %5316 = vmatprep.subr.bf16.mxu0 %v4869
    %5317 = vmatpush1.bf16.msra.mxu0 %v4868
    %5318 = vmatprep.subr.bf16.mxu0 %v4873
    %5319 = vmatpush1.bf16.msra.mxu0 %v4872
    %5320 = vmatprep.subr.bf16.mxu0 %v4877
    %5321 = vmatpush1.bf16.msra.mxu0 %v4876
    %5322 = vmatprep.subr.bf16.mxu0 %v4881
    %5323 = vmatpush1.bf16.msra.mxu0 %v4880
    %5324 = vmatprep.subr.bf16.mxu0 %v4885
    %5325 = vmatpush1.bf16.msra.mxu0 %v4884
    %5326 = vmatprep.mubr.bf16.mxu0 %v3647
    %5327 = vmatmul.mubr.bf16.gmra.mrb[0].mxu0 %v3646
    %v5328 = vpop.f32.mrb[0].mxu0
    %v5329 = vadd.f32 %v5286, %v5328
    %v5330 = vpop.f32.mrb[0].mxu0
    %v5331 = vadd.f32 %v5288, %v5330
    %v5332 = vpop.f32.mrb[0].mxu0
    %v5333 = vadd.f32 %v5290, %v5332
    %v5334 = vpop.f32.mrb[0].mxu0
    %v5335 = vadd.f32 %v5292, %v5334
    %5336 = vdwg.mxu0
    %5337 = vmatprep.subr.bf16.mxu0 %v4889
    %5338 = vmatpush1.bf16.msra.mxu0 %v4888
    %5339 = vmatprep.subr.bf16.mxu0 %v4893
    %5340 = vmatpush1.bf16.msra.mxu0 %v4892
    %5341 = vmatprep.subr.bf16.mxu0 %v4897
    %5342 = vmatpush1.bf16.msra.mxu0 %v4896
    %5343 = vmatprep.subr.bf16.mxu0 %v4901
    %5344 = vmatpush1.bf16.msra.mxu0 %v4900
    %5345 = vmatprep.subr.bf16.mxu0 %v4905
    %5346 = vmatpush1.bf16.msra.mxu0 %v4904
    %5347 = vmatprep.subr.bf16.mxu0 %v4909
    %5348 = vmatpush1.bf16.msra.mxu0 %v4908
    %5349 = vmatprep.subr.bf16.mxu0 %v4913
    %5350 = vmatpush1.bf16.msra.mxu0 %v4912
    %5351 = vmatprep.subr.bf16.mxu0 %v4917
    %5352 = vmatpush1.bf16.msra.mxu0 %v4916
    %5353 = vmatprep.subr.bf16.mxu0 %v4921
    %5354 = vmatpush1.bf16.msra.mxu0 %v4920
    %5355 = vmatprep.subr.bf16.mxu0 %v4925
    %5356 = vmatpush1.bf16.msra.mxu0 %v4924
    %5357 = vmatprep.subr.bf16.mxu0 %v4929
    %5358 = vmatpush1.bf16.msra.mxu0 %v4928
    %5359 = vmatprep.subr.bf16.mxu0 %v4933
    %5360 = vmatpush1.bf16.msra.mxu0 %v4932
    %5361 = vmatprep.subr.bf16.mxu0 %v4937
    %5362 = vmatpush1.bf16.msra.mxu0 %v4936
    %5363 = vmatprep.subr.bf16.mxu0 %v4941
    %5364 = vmatpush1.bf16.msra.mxu0 %v4940
    %5365 = vmatprep.subr.bf16.mxu0 %v4945
    %5366 = vmatpush1.bf16.msra.mxu0 %v4944
    %5367 = vmatprep.subr.bf16.mxu0 %v4949
    %5368 = vmatpush1.bf16.msra.mxu0 %v4948
    %5369 = vmatprep.mubr.bf16.mxu0 %v3649
    %5370 = vmatmul.mubr.bf16.gmra.mrb[0].mxu0 %v3648
    %v5371 = vpop.f32.mrb[0].mxu0
    %v5372 = vadd.f32 %v5329, %v5371
    %v5373 = vpop.f32.mrb[0].mxu0
    %v5374 = vadd.f32 %v5331, %v5373
    %v5375 = vpop.f32.mrb[0].mxu0
    %v5376 = vadd.f32 %v5333, %v5375
    %v5377 = vpop.f32.mrb[0].mxu0
    %v5378 = vadd.f32 %v5335, %v5377
    %5379 = vdwg.mxu0
    %5380 = vmatprep.subr.bf16.mxu0 %v4699
    %5381 = vmatpush1.bf16.msra.mxu0 %v4698
    %5382 = vmatprep.subr.bf16.mxu0 %v4703
    %5383 = vmatpush1.bf16.msra.mxu0 %v4702
    %5384 = vmatprep.subr.bf16.mxu0 %v4707
    %5385 = vmatpush1.bf16.msra.mxu0 %v4706
    %5386 = vmatprep.subr.bf16.mxu0 %v4711
    %5387 = vmatpush1.bf16.msra.mxu0 %v4710
    %5388 = vmatprep.subr.bf16.mxu0 %v4715
    %5389 = vmatpush1.bf16.msra.mxu0 %v4714
    %5390 = vmatprep.subr.bf16.mxu0 %v4719
    %5391 = vmatpush1.bf16.msra.mxu0 %v4718
    %5392 = vmatprep.subr.bf16.mxu0 %v4723
    %5393 = vmatpush1.bf16.msra.mxu0 %v4722
    %5394 = vmatprep.subr.bf16.mxu0 %v4727
    %5395 = vmatpush1.bf16.msra.mxu0 %v4726
    %5396 = vmatprep.subr.bf16.mxu0 %v4731
    %5397 = vmatpush1.bf16.msra.mxu0 %v4730
    %5398 = vmatprep.subr.bf16.mxu0 %v4735
    %5399 = vmatpush1.bf16.msra.mxu0 %v4734
    %5400 = vmatprep.subr.bf16.mxu0 %v4739
    %5401 = vmatpush1.bf16.msra.mxu0 %v4738
    %5402 = vmatprep.subr.bf16.mxu0 %v4743
    %5403 = vmatpush1.bf16.msra.mxu0 %v4742
    %5404 = vmatprep.subr.bf16.mxu0 %v4747
    %5405 = vmatpush1.bf16.msra.mxu0 %v4746
    %5406 = vmatprep.subr.bf16.mxu0 %v4751
    %5407 = vmatpush1.bf16.msra.mxu0 %v4750
    %5408 = vmatprep.subr.bf16.mxu0 %v4755
    %5409 = vmatpush1.bf16.msra.mxu0 %v4754
    %5410 = vmatprep.subr.bf16.mxu0 %v4759
    %5411 = vmatpush1.bf16.msra.mxu0 %v4758
    %5412 = vmatprep.mubr.bf16.mxu0 %v3643
    %5413 = vmatmul.mubr.bf16.gmra.mrb[0].mxu0 %v3642
    %v5414 = vpop.f32.mrb[0].mxu0
    %v5415 = vadd.f32 %v3919, %v5414
    %v5416 = vpop.f32.mrb[0].mxu0
    %v5417 = vadd.f32 %v3923, %v5416
    %v5418 = vpop.f32.mrb[0].mxu0
    %v5419 = vadd.f32 %v3919, %v5418
    %v5420 = vpop.f32.mrb[0].mxu0
    %v5421 = vadd.f32 %v3923, %v5420
    %5422 = vdwg.mxu0
    %5423 = vmatprep.subr.bf16.mxu0 %v4763
    %5424 = vmatpush1.bf16.msra.mxu0 %v4762
    %5425 = vmatprep.subr.bf16.mxu0 %v4767
    %5426 = vmatpush1.bf16.msra.mxu0 %v4766
    %5427 = vmatprep.subr.bf16.mxu0 %v4771
    %5428 = vmatpush1.bf16.msra.mxu0 %v4770
    %5429 = vmatprep.subr.bf16.mxu0 %v4775
    %5430 = vmatpush1.bf16.msra.mxu0 %v4774
    %5431 = vmatprep.subr.bf16.mxu0 %v4779
    %5432 = vmatpush1.bf16.msra.mxu0 %v4778
    %5433 = vmatprep.subr.bf16.mxu0 %v4783
    %5434 = vmatpush1.bf16.msra.mxu0 %v4782
    %5435 = vmatprep.subr.bf16.mxu0 %v4787
    %5436 = vmatpush1.bf16.msra.mxu0 %v4786
    %5437 = vmatprep.subr.bf16.mxu0 %v4791
    %5438 = vmatpush1.bf16.msra.mxu0 %v4790
    %5439 = vmatprep.subr.bf16.mxu0 %v4795
    %5440 = vmatpush1.bf16.msra.mxu0 %v4794
    %5441 = vmatprep.subr.bf16.mxu0 %v4799
    %5442 = vmatpush1.bf16.msra.mxu0 %v4798
    %5443 = vmatprep.subr.bf16.mxu0 %v4803
    %5444 = vmatpush1.bf16.msra.mxu0 %v4802
    %5445 = vmatprep.subr.bf16.mxu0 %v4807
    %5446 = vmatpush1.bf16.msra.mxu0 %v4806
    %5447 = vmatprep.subr.bf16.mxu0 %v4811
    %5448 = vmatpush1.bf16.msra.mxu0 %v4810
    %5449 = vmatprep.subr.bf16.mxu0 %v4815
    %5450 = vmatpush1.bf16.msra.mxu0 %v4814
    %5451 = vmatprep.subr.bf16.mxu0 %v4819
    %5452 = vmatpush1.bf16.msra.mxu0 %v4818
    %5453 = vmatprep.subr.bf16.mxu0 %v4823
    %5454 = vmatpush1.bf16.msra.mxu0 %v4822
    %5455 = vmatprep.mubr.bf16.mxu0 %v3645
    %5456 = vmatmul.mubr.bf16.gmra.mrb[0].mxu0 %v3644
    %v5457 = vpop.f32.mrb[0].mxu0
    %v5458 = vadd.f32 %v5415, %v5457
    %v5459 = vpop.f32.mrb[0].mxu0
    %v5460 = vadd.f32 %v5417, %v5459
    %v5461 = vpop.f32.mrb[0].mxu0
    %v5462 = vadd.f32 %v5419, %v5461
    %v5463 = vpop.f32.mrb[0].mxu0
    %v5464 = vadd.f32 %v5421, %v5463
    %5465 = vdwg.mxu0
    %5466 = vmatprep.subr.bf16.mxu0 %v4827
    %5467 = vmatpush1.bf16.msra.mxu0 %v4826
    %5468 = vmatprep.subr.bf16.mxu0 %v4831
    %5469 = vmatpush1.bf16.msra.mxu0 %v4830
    %5470 = vmatprep.subr.bf16.mxu0 %v4835
    %5471 = vmatpush1.bf16.msra.mxu0 %v4834
    %5472 = vmatprep.subr.bf16.mxu0 %v4839
    %5473 = vmatpush1.bf16.msra.mxu0 %v4838
    %5474 = vmatprep.subr.bf16.mxu0 %v4843
    %5475 = vmatpush1.bf16.msra.mxu0 %v4842
    %5476 = vmatprep.subr.bf16.mxu0 %v4847
    %5477 = vmatpush1.bf16.msra.mxu0 %v4846
    %5478 = vmatprep.subr.bf16.mxu0 %v4851
    %5479 = vmatpush1.bf16.msra.mxu0 %v4850
    %5480 = vmatprep.subr.bf16.mxu0 %v4855
    %5481 = vmatpush1.bf16.msra.mxu0 %v4854
    %5482 = vmatprep.subr.bf16.mxu0 %v4859
    %5483 = vmatpush1.bf16.msra.mxu0 %v4858
    %5484 = vmatprep.subr.bf16.mxu0 %v4863
    %5485 = vmatpush1.bf16.msra.mxu0 %v4862
    %5486 = vmatprep.subr.bf16.mxu0 %v4867
    %5487 = vmatpush1.bf16.msra.mxu0 %v4866
    %5488 = vmatprep.subr.bf16.mxu0 %v4871
    %5489 = vmatpush1.bf16.msra.mxu0 %v4870
    %5490 = vmatprep.subr.bf16.mxu0 %v4875
    %5491 = vmatpush1.bf16.msra.mxu0 %v4874
    %5492 = vmatprep.subr.bf16.mxu0 %v4879
    %5493 = vmatpush1.bf16.msra.mxu0 %v4878
    %5494 = vmatprep.subr.bf16.mxu0 %v4883
    %5495 = vmatpush1.bf16.msra.mxu0 %v4882
    %5496 = vmatprep.subr.bf16.mxu0 %v4887
    %5497 = vmatpush1.bf16.msra.mxu0 %v4886
    %5498 = vmatprep.mubr.bf16.mxu0 %v3647
    %5499 = vmatmul.mubr.bf16.gmra.mrb[0].mxu0 %v3646
    %v5500 = vpop.f32.mrb[0].mxu0
    %v5501 = vadd.f32 %v5458, %v5500
    %v5502 = vpop.f32.mrb[0].mxu0
    %v5503 = vadd.f32 %v5460, %v5502
    %v5504 = vpop.f32.mrb[0].mxu0
    %v5505 = vadd.f32 %v5462, %v5504
    %v5506 = vpop.f32.mrb[0].mxu0
    %v5507 = vadd.f32 %v5464, %v5506
    %5508 = vdwg.mxu0
    %5509 = vmatprep.subr.bf16.mxu0 %v4891
    %5510 = vmatpush1.bf16.msra.mxu0 %v4890
    %5511 = vmatprep.subr.bf16.mxu0 %v4895
    %5512 = vmatpush1.bf16.msra.mxu0 %v4894
    %5513 = vmatprep.subr.bf16.mxu0 %v4899
    %5514 = vmatpush1.bf16.msra.mxu0 %v4898
    %5515 = vmatprep.subr.bf16.mxu0 %v4903
    %5516 = vmatpush1.bf16.msra.mxu0 %v4902
    %5517 = vmatprep.subr.bf16.mxu0 %v4907
    %5518 = vmatpush1.bf16.msra.mxu0 %v4906
    %5519 = vmatprep.subr.bf16.mxu0 %v4911
    %5520 = vmatpush1.bf16.msra.mxu0 %v4910
    %5521 = vmatprep.subr.bf16.mxu0 %v4915
    %5522 = vmatpush1.bf16.msra.mxu0 %v4914
    %5523 = vmatprep.subr.bf16.mxu0 %v4919
    %5524 = vmatpush1.bf16.msra.mxu0 %v4918
    %5525 = vmatprep.subr.bf16.mxu0 %v4923
    %5526 = vmatpush1.bf16.msra.mxu0 %v4922
    %5527 = vmatprep.subr.bf16.mxu0 %v4927
    %5528 = vmatpush1.bf16.msra.mxu0 %v4926
    %5529 = vmatprep.subr.bf16.mxu0 %v4931
    %5530 = vmatpush1.bf16.msra.mxu0 %v4930
    %5531 = vmatprep.subr.bf16.mxu0 %v4935
    %5532 = vmatpush1.bf16.msra.mxu0 %v4934
    %5533 = vmatprep.subr.bf16.mxu0 %v4939
    %5534 = vmatpush1.bf16.msra.mxu0 %v4938
    %5535 = vmatprep.subr.bf16.mxu0 %v4943
    %5536 = vmatpush1.bf16.msra.mxu0 %v4942
    %5537 = vmatprep.subr.bf16.mxu0 %v4947
    %5538 = vmatpush1.bf16.msra.mxu0 %v4946
    %5539 = vmatprep.subr.bf16.mxu0 %v4951
    %5540 = vmatpush1.bf16.msra.mxu0 %v4950
    %5541 = vmatprep.mubr.bf16.mxu0 %v3649
    %5542 = vmatmul.mubr.bf16.gmra.mrb[0].mxu0 %v3648
    %v5543 = vpop.f32.mrb[0].mxu0
    %v5544 = vadd.f32 %v5501, %v5543
    %v5545 = vpop.f32.mrb[0].mxu0
    %v5546 = vadd.f32 %v5503, %v5545
    %v5547 = vpop.f32.mrb[0].mxu0
    %v5548 = vadd.f32 %v5505, %v5547
    %v5549 = vpop.f32.mrb[0].mxu0
    %v5550 = vadd.f32 %v5507, %v5549
    %5551 = vdwg.mxu0
    %v5552 = vmul.f32 %v5372, 0.2
    %v5553 = vmul.f32 %v5374, 0.2
    %v5554 = vmul.f32 %v5544, 0.2
    %v5555 = vmul.f32 %v5546, 0.2
    %v5556 = vmul.f32 %v5376, 0.2
    %v5557 = vmul.f32 %v5378, 0.2
    %v5558 = vmul.f32 %v5548, 0.2
    %v5559 = vmul.f32 %v5550, 0.2
    %v5560 = vmax.f32 %v5372, %v5552
    %v5561 = vmax.f32 %v5374, %v5553
    %v5562 = vmax.f32 %v5544, %v5554
    %v5563 = vmax.f32 %v5546, %v5555
    %v5564 = vmax.f32 %v5376, %v5556
    %v5565 = vmax.f32 %v5378, %v5557
    %v5566 = vmax.f32 %v5548, %v5558
    %v5567 = vmax.f32 %v5550, %v5559
    %v5568 = vpack.c.bf16 %v5564, %v5560
    %v5569 = vpack.c.bf16 %v5565, %v5561
    %v5570 = vpack.c.bf16 %v5566, %v5562
    %v5571 = vpack.c.bf16 %v5567, %v5563
    %v5572 = vld [vmem:[#allocation11] sm:$0xff]
    %v5573 = vld [vmem:[#allocation11 + $0x8] sm:$0xff]
    %v5574 = vld [vmem:[#allocation11 + $0x10] sm:$0xff]
    %v5575 = vld [vmem:[#allocation11 + $0x18] sm:$0xff]
    %v5576 = vld [vmem:[#allocation11 + $0x20] sm:$0xff]
    %v5577 = vld [vmem:[#allocation11 + $0x28] sm:$0xff]
    %v5578 = vld [vmem:[#allocation11 + $0x30] sm:$0xff]
    %v5579 = vld [vmem:[#allocation11 + $0x38] sm:$0xff]
    %v5580 = vld [vmem:[#allocation11 + $0x40] sm:$0xff]
    %v5581 = vld [vmem:[#allocation11 + $0x48] sm:$0xff]
    %v5582 = vld [vmem:[#allocation11 + $0x50] sm:$0xff]
    %v5583 = vld [vmem:[#allocation11 + $0x58] sm:$0xff]
    %v5584 = vld [vmem:[#allocation11 + $0x60] sm:$0xff]
    %v5585 = vld [vmem:[#allocation11 + $0x68] sm:$0xff]
    %v5586 = vld [vmem:[#allocation11 + $0x70] sm:$0xff]
    %v5587 = vld [vmem:[#allocation11 + $0x78] sm:$0xff]
    %v5588 = vld [vmem:[#allocation11 + $0x80] sm:$0xff]
    %v5589 = vld [vmem:[#allocation11 + $0x88] sm:$0xff]
    %v5590 = vld [vmem:[#allocation11 + $0x90] sm:$0xff]
    %v5591 = vld [vmem:[#allocation11 + $0x98] sm:$0xff]
    %v5592 = vld [vmem:[#allocation11 + $0xa0] sm:$0xff]
    %v5593 = vld [vmem:[#allocation11 + $0xa8] sm:$0xff]
    %v5594 = vld [vmem:[#allocation11 + $0xb0] sm:$0xff]
    %v5595 = vld [vmem:[#allocation11 + $0xb8] sm:$0xff]
    %v5596 = vld [vmem:[#allocation11 + $0xc0] sm:$0xff]
    %v5597 = vld [vmem:[#allocation11 + $0xc8] sm:$0xff]
    %v5598 = vld [vmem:[#allocation11 + $0xd0] sm:$0xff]
    %v5599 = vld [vmem:[#allocation11 + $0xd8] sm:$0xff]
    %v5600 = vld [vmem:[#allocation11 + $0xe0] sm:$0xff]
    %v5601 = vld [vmem:[#allocation11 + $0xe8] sm:$0xff]
    %v5602 = vld [vmem:[#allocation11 + $0xf0] sm:$0xff]
    %v5603 = vld [vmem:[#allocation11 + $0xf8] sm:$0xff]
    %v5604 = vld [vmem:[#allocation11 + $0x100] sm:$0xff]
    %v5605 = vld [vmem:[#allocation11 + $0x108] sm:$0xff]
    %v5606 = vld [vmem:[#allocation11 + $0x110] sm:$0xff]
    %v5607 = vld [vmem:[#allocation11 + $0x118] sm:$0xff]
    %v5608 = vld [vmem:[#allocation11 + $0x120] sm:$0xff]
    %v5609 = vld [vmem:[#allocation11 + $0x128] sm:$0xff]
    %v5610 = vld [vmem:[#allocation11 + $0x130] sm:$0xff]
    %v5611 = vld [vmem:[#allocation11 + $0x138] sm:$0xff]
    %v5612 = vld [vmem:[#allocation11 + $0x140] sm:$0xff]
    %v5613 = vld [vmem:[#allocation11 + $0x148] sm:$0xff]
    %v5614 = vld [vmem:[#allocation11 + $0x150] sm:$0xff]
    %v5615 = vld [vmem:[#allocation11 + $0x158] sm:$0xff]
    %v5616 = vld [vmem:[#allocation11 + $0x160] sm:$0xff]
    %v5617 = vld [vmem:[#allocation11 + $0x168] sm:$0xff]
    %v5618 = vld [vmem:[#allocation11 + $0x170] sm:$0xff]
    %v5619 = vld [vmem:[#allocation11 + $0x178] sm:$0xff]
    %v5620 = vld [vmem:[#allocation11 + $0x180] sm:$0xff]
    %v5621 = vld [vmem:[#allocation11 + $0x188] sm:$0xff]
    %v5622 = vld [vmem:[#allocation11 + $0x190] sm:$0xff]
    %v5623 = vld [vmem:[#allocation11 + $0x198] sm:$0xff]
    %v5624 = vld [vmem:[#allocation11 + $0x1a0] sm:$0xff]
    %v5625 = vld [vmem:[#allocation11 + $0x1a8] sm:$0xff]
    %v5626 = vld [vmem:[#allocation11 + $0x1b0] sm:$0xff]
    %v5627 = vld [vmem:[#allocation11 + $0x1b8] sm:$0xff]
    %v5628 = vld [vmem:[#allocation11 + $0x1c0] sm:$0xff]
    %v5629 = vld [vmem:[#allocation11 + $0x1c8] sm:$0xff]
    %v5630 = vld [vmem:[#allocation11 + $0x1d0] sm:$0xff]
    %v5631 = vld [vmem:[#allocation11 + $0x1d8] sm:$0xff]
    %v5632 = vld [vmem:[#allocation11 + $0x1e0] sm:$0xff]
    %v5633 = vld [vmem:[#allocation11 + $0x1e8] sm:$0xff]
    %v5634 = vld [vmem:[#allocation11 + $0x1f0] sm:$0xff]
    %v5635 = vld [vmem:[#allocation11 + $0x1f8] sm:$0xff]
    %v5636 = vld [vmem:[#allocation13] sm:$0x3]
    %v5638 = vlaneseq
    %v5639 = vshrl.u32 %v5638, 7
    %v5640 = vsub.s32 0, %v5639
    %v5641 = vrot.slane %v5636, %v5640
    %v5642 = vlaneseq
    %v5643 = vshrl.u32 %v5642, 7
    %v5644 = vsub.s32 1, %v5643
    %v5645 = vrot.slane %v5636, %v5644
    %v5712 = vunpack.c.l.b16 %v5572
    %v5713 = vunpack.c.h.b16 %v5572
    %v5714 = vunpack.c.l.b16 %v5573
    %v5715 = vunpack.c.h.b16 %v5573
    %v5716 = vunpack.c.l.b16 %v5574
    %v5717 = vunpack.c.h.b16 %v5574
    %v5718 = vunpack.c.l.b16 %v5575
    %v5719 = vunpack.c.h.b16 %v5575
    %v5720 = vunpack.c.l.b16 %v5576
    %v5721 = vunpack.c.h.b16 %v5576
    %v5722 = vunpack.c.l.b16 %v5577
    %v5723 = vunpack.c.h.b16 %v5577
    %v5724 = vunpack.c.l.b16 %v5578
    %v5725 = vunpack.c.h.b16 %v5578
    %v5726 = vunpack.c.l.b16 %v5579
    %v5727 = vunpack.c.h.b16 %v5579
    %v5728 = vunpack.c.l.b16 %v5580
    %v5729 = vunpack.c.h.b16 %v5580
    %v5730 = vunpack.c.l.b16 %v5581
    %v5731 = vunpack.c.h.b16 %v5581
    %v5732 = vunpack.c.l.b16 %v5582
    %v5733 = vunpack.c.h.b16 %v5582
    %v5734 = vunpack.c.l.b16 %v5583
    %v5735 = vunpack.c.h.b16 %v5583
    %v5736 = vunpack.c.l.b16 %v5584
    %v5737 = vunpack.c.h.b16 %v5584
    %v5738 = vunpack.c.l.b16 %v5585
    %v5739 = vunpack.c.h.b16 %v5585
    %v5740 = vunpack.c.l.b16 %v5586
    %v5741 = vunpack.c.h.b16 %v5586
    %v5742 = vunpack.c.l.b16 %v5587
    %v5743 = vunpack.c.h.b16 %v5587
    %v5744 = vunpack.c.l.b16 %v5588
    %v5745 = vunpack.c.h.b16 %v5588
    %v5746 = vunpack.c.l.b16 %v5589
    %v5747 = vunpack.c.h.b16 %v5589
    %v5748 = vunpack.c.l.b16 %v5590
    %v5749 = vunpack.c.h.b16 %v5590
    %v5750 = vunpack.c.l.b16 %v5591
    %v5751 = vunpack.c.h.b16 %v5591
    %v5752 = vunpack.c.l.b16 %v5592
    %v5753 = vunpack.c.h.b16 %v5592
    %v5754 = vunpack.c.l.b16 %v5593
    %v5755 = vunpack.c.h.b16 %v5593
    %v5756 = vunpack.c.l.b16 %v5594
    %v5757 = vunpack.c.h.b16 %v5594
    %v5758 = vunpack.c.l.b16 %v5595
    %v5759 = vunpack.c.h.b16 %v5595
    %v5760 = vunpack.c.l.b16 %v5596
    %v5761 = vunpack.c.h.b16 %v5596
    %v5762 = vunpack.c.l.b16 %v5597
    %v5763 = vunpack.c.h.b16 %v5597
    %v5764 = vunpack.c.l.b16 %v5598
    %v5765 = vunpack.c.h.b16 %v5598
    %v5766 = vunpack.c.l.b16 %v5599
    %v5767 = vunpack.c.h.b16 %v5599
    %v5768 = vunpack.c.l.b16 %v5600
    %v5769 = vunpack.c.h.b16 %v5600
    %v5770 = vunpack.c.l.b16 %v5601
    %v5771 = vunpack.c.h.b16 %v5601
    %v5772 = vunpack.c.l.b16 %v5602
    %v5773 = vunpack.c.h.b16 %v5602
    %v5774 = vunpack.c.l.b16 %v5603
    %v5775 = vunpack.c.h.b16 %v5603
    %v5776 = vunpack.c.l.b16 %v5604
    %v5777 = vunpack.c.h.b16 %v5604
    %v5778 = vunpack.c.l.b16 %v5605
    %v5779 = vunpack.c.h.b16 %v5605
    %v5780 = vunpack.c.l.b16 %v5606
    %v5781 = vunpack.c.h.b16 %v5606
    %v5782 = vunpack.c.l.b16 %v5607
    %v5783 = vunpack.c.h.b16 %v5607
    %v5784 = vunpack.c.l.b16 %v5608
    %v5785 = vunpack.c.h.b16 %v5608
    %v5786 = vunpack.c.l.b16 %v5609
    %v5787 = vunpack.c.h.b16 %v5609
    %v5788 = vunpack.c.l.b16 %v5610
    %v5789 = vunpack.c.h.b16 %v5610
    %v5790 = vunpack.c.l.b16 %v5611
    %v5791 = vunpack.c.h.b16 %v5611
    %v5792 = vunpack.c.l.b16 %v5612
    %v5793 = vunpack.c.h.b16 %v5612
    %v5794 = vunpack.c.l.b16 %v5613
    %v5795 = vunpack.c.h.b16 %v5613
    %v5796 = vunpack.c.l.b16 %v5614
    %v5797 = vunpack.c.h.b16 %v5614
    %v5798 = vunpack.c.l.b16 %v5615
    %v5799 = vunpack.c.h.b16 %v5615
    %v5800 = vunpack.c.l.b16 %v5616
    %v5801 = vunpack.c.h.b16 %v5616
    %v5802 = vunpack.c.l.b16 %v5617
    %v5803 = vunpack.c.h.b16 %v5617
    %v5804 = vunpack.c.l.b16 %v5618
    %v5805 = vunpack.c.h.b16 %v5618
    %v5806 = vunpack.c.l.b16 %v5619
    %v5807 = vunpack.c.h.b16 %v5619
    %v5808 = vunpack.c.l.b16 %v5620
    %v5809 = vunpack.c.h.b16 %v5620
    %v5810 = vunpack.c.l.b16 %v5621
    %v5811 = vunpack.c.h.b16 %v5621
    %v5812 = vunpack.c.l.b16 %v5622
    %v5813 = vunpack.c.h.b16 %v5622
    %v5814 = vunpack.c.l.b16 %v5623
    %v5815 = vunpack.c.h.b16 %v5623
    %v5816 = vunpack.c.l.b16 %v5624
    %v5817 = vunpack.c.h.b16 %v5624
    %v5818 = vunpack.c.l.b16 %v5625
    %v5819 = vunpack.c.h.b16 %v5625
    %v5820 = vunpack.c.l.b16 %v5626
    %v5821 = vunpack.c.h.b16 %v5626
    %v5822 = vunpack.c.l.b16 %v5627
    %v5823 = vunpack.c.h.b16 %v5627
    %v5824 = vunpack.c.l.b16 %v5628
    %v5825 = vunpack.c.h.b16 %v5628
    %v5826 = vunpack.c.l.b16 %v5629
    %v5827 = vunpack.c.h.b16 %v5629
    %v5828 = vunpack.c.l.b16 %v5630
    %v5829 = vunpack.c.h.b16 %v5630
    %v5830 = vunpack.c.l.b16 %v5631
    %v5831 = vunpack.c.h.b16 %v5631
    %v5832 = vunpack.c.l.b16 %v5632
    %v5833 = vunpack.c.h.b16 %v5632
    %v5834 = vunpack.c.l.b16 %v5633
    %v5835 = vunpack.c.h.b16 %v5633
    %v5836 = vunpack.c.l.b16 %v5634
    %v5837 = vunpack.c.h.b16 %v5634
    %v5838 = vunpack.c.l.b16 %v5635
    %v5839 = vunpack.c.h.b16 %v5635
    %v5840 = vpack.c.b16 %v5714, %v5712
    %v5841 = vpack.c.b16 %v5715, %v5713
    %v5842 = vpack.c.b16 %v5718, %v5716
    %v5843 = vpack.c.b16 %v5719, %v5717
    %v5844 = vpack.c.b16 %v5722, %v5720
    %v5845 = vpack.c.b16 %v5723, %v5721
    %v5846 = vpack.c.b16 %v5726, %v5724
    %v5847 = vpack.c.b16 %v5727, %v5725
    %v5848 = vpack.c.b16 %v5730, %v5728
    %v5849 = vpack.c.b16 %v5731, %v5729
    %v5850 = vpack.c.b16 %v5734, %v5732
    %v5851 = vpack.c.b16 %v5735, %v5733
    %v5852 = vpack.c.b16 %v5738, %v5736
    %v5853 = vpack.c.b16 %v5739, %v5737
    %v5854 = vpack.c.b16 %v5742, %v5740
    %v5855 = vpack.c.b16 %v5743, %v5741
    %v5856 = vpack.c.b16 %v5746, %v5744
    %v5857 = vpack.c.b16 %v5747, %v5745
    %v5858 = vpack.c.b16 %v5750, %v5748
    %v5859 = vpack.c.b16 %v5751, %v5749
    %v5860 = vpack.c.b16 %v5754, %v5752
    %v5861 = vpack.c.b16 %v5755, %v5753
    %v5862 = vpack.c.b16 %v5758, %v5756
    %v5863 = vpack.c.b16 %v5759, %v5757
    %v5864 = vpack.c.b16 %v5762, %v5760
    %v5865 = vpack.c.b16 %v5763, %v5761
    %v5866 = vpack.c.b16 %v5766, %v5764
    %v5867 = vpack.c.b16 %v5767, %v5765
    %v5868 = vpack.c.b16 %v5770, %v5768
    %v5869 = vpack.c.b16 %v5771, %v5769
    %v5870 = vpack.c.b16 %v5774, %v5772
    %v5871 = vpack.c.b16 %v5775, %v5773
    %v5872 = vpack.c.b16 %v5778, %v5776
    %v5873 = vpack.c.b16 %v5779, %v5777
    %v5874 = vpack.c.b16 %v5782, %v5780
    %v5875 = vpack.c.b16 %v5783, %v5781
    %v5876 = vpack.c.b16 %v5786, %v5784
    %v5877 = vpack.c.b16 %v5787, %v5785
    %v5878 = vpack.c.b16 %v5790, %v5788
    %v5879 = vpack.c.b16 %v5791, %v5789
    %v5880 = vpack.c.b16 %v5794, %v5792
    %v5881 = vpack.c.b16 %v5795, %v5793
    %v5882 = vpack.c.b16 %v5798, %v5796
    %v5883 = vpack.c.b16 %v5799, %v5797
    %v5884 = vpack.c.b16 %v5802, %v5800
    %v5885 = vpack.c.b16 %v5803, %v5801
    %v5886 = vpack.c.b16 %v5806, %v5804
    %v5887 = vpack.c.b16 %v5807, %v5805
    %v5888 = vpack.c.b16 %v5810, %v5808
    %v5889 = vpack.c.b16 %v5811, %v5809
    %v5890 = vpack.c.b16 %v5814, %v5812
    %v5891 = vpack.c.b16 %v5815, %v5813
    %v5892 = vpack.c.b16 %v5818, %v5816
    %v5893 = vpack.c.b16 %v5819, %v5817
    %v5894 = vpack.c.b16 %v5822, %v5820
    %v5895 = vpack.c.b16 %v5823, %v5821
    %v5896 = vpack.c.b16 %v5826, %v5824
    %v5897 = vpack.c.b16 %v5827, %v5825
    %v5898 = vpack.c.b16 %v5830, %v5828
    %v5899 = vpack.c.b16 %v5831, %v5829
    %v5900 = vpack.c.b16 %v5834, %v5832
    %v5901 = vpack.c.b16 %v5835, %v5833
    %v5902 = vpack.c.b16 %v5838, %v5836
    %v5903 = vpack.c.b16 %v5839, %v5837
    %5968 = vmatprep.subr.bf16.mxu0 %v5841
    %5969 = vmatpush1.bf16.msra.mxu0 %v5840
    %5970 = vmatprep.subr.bf16.mxu0 %v5843
    %5971 = vmatpush1.bf16.msra.mxu0 %v5842
    %5972 = vmatprep.subr.bf16.mxu0 %v5845
    %5973 = vmatpush1.bf16.msra.mxu0 %v5844
    %5974 = vmatprep.subr.bf16.mxu0 %v5847
    %5975 = vmatpush1.bf16.msra.mxu0 %v5846
    %5976 = vmatprep.subr.bf16.mxu0 %v5849
    %5977 = vmatpush1.bf16.msra.mxu0 %v5848
    %5978 = vmatprep.subr.bf16.mxu0 %v5851
    %5979 = vmatpush1.bf16.msra.mxu0 %v5850
    %5980 = vmatprep.subr.bf16.mxu0 %v5853
    %5981 = vmatpush1.bf16.msra.mxu0 %v5852
    %5982 = vmatprep.subr.bf16.mxu0 %v5855
    %5983 = vmatpush1.bf16.msra.mxu0 %v5854
    %5984 = vmatprep.subr.bf16.mxu0 %v5857
    %5985 = vmatpush1.bf16.msra.mxu0 %v5856
    %5986 = vmatprep.subr.bf16.mxu0 %v5859
    %5987 = vmatpush1.bf16.msra.mxu0 %v5858
    %5988 = vmatprep.subr.bf16.mxu0 %v5861
    %5989 = vmatpush1.bf16.msra.mxu0 %v5860
    %5990 = vmatprep.subr.bf16.mxu0 %v5863
    %5991 = vmatpush1.bf16.msra.mxu0 %v5862
    %5992 = vmatprep.subr.bf16.mxu0 %v5865
    %5993 = vmatpush1.bf16.msra.mxu0 %v5864
    %5994 = vmatprep.subr.bf16.mxu0 %v5867
    %5995 = vmatpush1.bf16.msra.mxu0 %v5866
    %5996 = vmatprep.subr.bf16.mxu0 %v5869
    %5997 = vmatpush1.bf16.msra.mxu0 %v5868
    %5998 = vmatprep.subr.bf16.mxu0 %v5871
    %5999 = vmatpush1.bf16.msra.mxu0 %v5870
    %6000 = vmatprep.mubr.bf16.mxu0 %v5569
    %6001 = vmatmul.mubr.bf16.gmra.mrb[0].mxu0 %v5568
    %v6002 = vpop.f32.mrb[0].mxu0
    %v6003 = vadd.f32 %v5641, %v6002
    %v6004 = vpop.f32.mrb[0].mxu0
    %v6005 = vadd.f32 %v5645, %v6004
    %v6006 = vpop.f32.mrb[0].mxu0
    %v6007 = vadd.f32 %v5641, %v6006
    %v6008 = vpop.f32.mrb[0].mxu0
    %v6009 = vadd.f32 %v5645, %v6008
    %6010 = vdwg.mxu0
    %6011 = vmatprep.subr.bf16.mxu0 %v5873
    %6012 = vmatpush1.bf16.msra.mxu0 %v5872
    %6013 = vmatprep.subr.bf16.mxu0 %v5875
    %6014 = vmatpush1.bf16.msra.mxu0 %v5874
    %6015 = vmatprep.subr.bf16.mxu0 %v5877
    %6016 = vmatpush1.bf16.msra.mxu0 %v5876
    %6017 = vmatprep.subr.bf16.mxu0 %v5879
    %6018 = vmatpush1.bf16.msra.mxu0 %v5878
    %6019 = vmatprep.subr.bf16.mxu0 %v5881
    %6020 = vmatpush1.bf16.msra.mxu0 %v5880
    %6021 = vmatprep.subr.bf16.mxu0 %v5883
    %6022 = vmatpush1.bf16.msra.mxu0 %v5882
    %6023 = vmatprep.subr.bf16.mxu0 %v5885
    %6024 = vmatpush1.bf16.msra.mxu0 %v5884
    %6025 = vmatprep.subr.bf16.mxu0 %v5887
    %6026 = vmatpush1.bf16.msra.mxu0 %v5886
    %6027 = vmatprep.subr.bf16.mxu0 %v5889
    %6028 = vmatpush1.bf16.msra.mxu0 %v5888
    %6029 = vmatprep.subr.bf16.mxu0 %v5891
    %6030 = vmatpush1.bf16.msra.mxu0 %v5890
    %6031 = vmatprep.subr.bf16.mxu0 %v5893
    %6032 = vmatpush1.bf16.msra.mxu0 %v5892
    %6033 = vmatprep.subr.bf16.mxu0 %v5895
    %6034 = vmatpush1.bf16.msra.mxu0 %v5894
    %6035 = vmatprep.subr.bf16.mxu0 %v5897
    %6036 = vmatpush1.bf16.msra.mxu0 %v5896
    %6037 = vmatprep.subr.bf16.mxu0 %v5899
    %6038 = vmatpush1.bf16.msra.mxu0 %v5898
    %6039 = vmatprep.subr.bf16.mxu0 %v5901
    %6040 = vmatpush1.bf16.msra.mxu0 %v5900
    %6041 = vmatprep.subr.bf16.mxu0 %v5903
    %6042 = vmatpush1.bf16.msra.mxu0 %v5902
    %6043 = vmatprep.mubr.bf16.mxu0 %v5571
    %6044 = vmatmul.mubr.bf16.gmra.mrb[0].mxu0 %v5570
    %v6045 = vpop.f32.mrb[0].mxu0
    %v6046 = vadd.f32 %v6003, %v6045
    %v6047 = vpop.f32.mrb[0].mxu0
    %v6048 = vadd.f32 %v6005, %v6047
    %v6049 = vpop.f32.mrb[0].mxu0
    %v6050 = vadd.f32 %v6007, %v6049
    %v6051 = vpop.f32.mrb[0].mxu0
    %v6052 = vadd.f32 %v6009, %v6051
    %6053 = vdwg.mxu0
    %v6054 = vmul.f32 %v6046, 0.2
    %v6055 = vmul.f32 %v6048, 0.2
    %v6056 = vmul.f32 %v6050, 0.2
    %v6057 = vmul.f32 %v6052, 0.2
    %v6058 = vmax.f32 %v6046, %v6054
    %v6059 = vmax.f32 %v6048, %v6055
    %v6060 = vmax.f32 %v6050, %v6056
    %v6061 = vmax.f32 %v6052, %v6057
    %v6062 = vpack.c.bf16 %v6060, %v6058
    %v6063 = vpack.c.bf16 %v6061, %v6059
    %v6064 = vld [vmem:[#allocation14] sm:$0xf]
    %v6065 = vld [vmem:[#allocation14 + $0x4] sm:$0xf]
    %v6066 = vld [vmem:[#allocation14 + $0x8] sm:$0xf]
    %v6067 = vld [vmem:[#allocation14 + $0xc] sm:$0xf]
    %v6068 = vld [vmem:[#allocation14 + $0x10] sm:$0xf]
    %v6069 = vld [vmem:[#allocation14 + $0x14] sm:$0xf]
    %v6070 = vld [vmem:[#allocation14 + $0x18] sm:$0xf]
    %v6071 = vld [vmem:[#allocation14 + $0x1c] sm:$0xf]
    %v6072 = vld [vmem:[#allocation14 + $0x20] sm:$0xf]
    %v6073 = vld [vmem:[#allocation14 + $0x24] sm:$0xf]
    %v6074 = vld [vmem:[#allocation14 + $0x28] sm:$0xf]
    %v6075 = vld [vmem:[#allocation14 + $0x2c] sm:$0xf]
    %v6076 = vld [vmem:[#allocation14 + $0x30] sm:$0xf]
    %v6077 = vld [vmem:[#allocation14 + $0x34] sm:$0xf]
    %v6078 = vld [vmem:[#allocation14 + $0x38] sm:$0xf]
    %v6079 = vld [vmem:[#allocation14 + $0x3c] sm:$0xf]
    %v6080 = vld [vmem:[#allocation14 + $0x40] sm:$0xf]
    %v6081 = vld [vmem:[#allocation14 + $0x44] sm:$0xf]
    %v6082 = vld [vmem:[#allocation14 + $0x48] sm:$0xf]
    %v6083 = vld [vmem:[#allocation14 + $0x4c] sm:$0xf]
    %v6084 = vld [vmem:[#allocation14 + $0x50] sm:$0xf]
    %v6085 = vld [vmem:[#allocation14 + $0x54] sm:$0xf]
    %v6086 = vld [vmem:[#allocation14 + $0x58] sm:$0xf]
    %v6087 = vld [vmem:[#allocation14 + $0x5c] sm:$0xf]
    %v6088 = vld [vmem:[#allocation14 + $0x60] sm:$0xf]
    %v6089 = vld [vmem:[#allocation14 + $0x64] sm:$0xf]
    %v6090 = vld [vmem:[#allocation14 + $0x68] sm:$0xf]
    %v6091 = vld [vmem:[#allocation14 + $0x6c] sm:$0xf]
    %v6092 = vld [vmem:[#allocation14 + $0x70] sm:$0xf]
    %v6093 = vld [vmem:[#allocation14 + $0x74] sm:$0xf]
    %v6094 = vld [vmem:[#allocation14 + $0x78] sm:$0xf]
    %v6095 = vld [vmem:[#allocation14 + $0x7c] sm:$0xf]
    %v6096 = vld [vmem:[#allocation16] sm:$0x1]
    %v6098 = vlaneseq
    %v6099 = vshrl.u32 %v6098, 7
    %v6100 = vsub.s32 0, %v6099
    %v6101 = vrot.slane %v6096, %v6100
    %v6135 = vunpack.c.l.b16 %v6064
    %v6136 = vunpack.c.l.b16 %v6065
    %v6137 = vunpack.c.l.b16 %v6066
    %v6138 = vunpack.c.l.b16 %v6067
    %v6139 = vunpack.c.l.b16 %v6068
    %v6140 = vunpack.c.l.b16 %v6069
    %v6141 = vunpack.c.l.b16 %v6070
    %v6142 = vunpack.c.l.b16 %v6071
    %v6143 = vunpack.c.l.b16 %v6072
    %v6144 = vunpack.c.l.b16 %v6073
    %v6145 = vunpack.c.l.b16 %v6074
    %v6146 = vunpack.c.l.b16 %v6075
    %v6147 = vunpack.c.l.b16 %v6076
    %v6148 = vunpack.c.l.b16 %v6077
    %v6149 = vunpack.c.l.b16 %v6078
    %v6150 = vunpack.c.l.b16 %v6079
    %v6151 = vunpack.c.l.b16 %v6080
    %v6152 = vunpack.c.l.b16 %v6081
    %v6153 = vunpack.c.l.b16 %v6082
    %v6154 = vunpack.c.l.b16 %v6083
    %v6155 = vunpack.c.l.b16 %v6084
    %v6156 = vunpack.c.l.b16 %v6085
    %v6157 = vunpack.c.l.b16 %v6086
    %v6158 = vunpack.c.l.b16 %v6087
    %v6159 = vunpack.c.l.b16 %v6088
    %v6160 = vunpack.c.l.b16 %v6089
    %v6161 = vunpack.c.l.b16 %v6090
    %v6162 = vunpack.c.l.b16 %v6091
    %v6163 = vunpack.c.l.b16 %v6092
    %v6164 = vunpack.c.l.b16 %v6093
    %v6165 = vunpack.c.l.b16 %v6094
    %v6166 = vunpack.c.l.b16 %v6095
    %v6167 = vpack.c.b16 %v6136, %v6135
    %v6168 = vpack.c.b16 %v6138, %v6137
    %v6169 = vpack.c.b16 %v6140, %v6139
    %v6170 = vpack.c.b16 %v6142, %v6141
    %v6171 = vpack.c.b16 %v6144, %v6143
    %v6172 = vpack.c.b16 %v6146, %v6145
    %v6173 = vpack.c.b16 %v6148, %v6147
    %v6174 = vpack.c.b16 %v6150, %v6149
    %v6175 = vpack.c.b16 %v6152, %v6151
    %v6176 = vpack.c.b16 %v6154, %v6153
    %v6177 = vpack.c.b16 %v6156, %v6155
    %v6178 = vpack.c.b16 %v6158, %v6157
    %v6179 = vpack.c.b16 %v6160, %v6159
    %v6180 = vpack.c.b16 %v6162, %v6161
    %v6181 = vpack.c.b16 %v6164, %v6163
    %v6182 = vpack.c.b16 %v6166, %v6165
    %6199 = vmatprep.subr.bf16.mxu0 0
    %6200 = vmatpush1.bf16.msra.mxu0 %v6167
    %6201 = vmatprep.subr.bf16.mxu0 0
    %6202 = vmatpush1.bf16.msra.mxu0 %v6168
    %6203 = vmatprep.subr.bf16.mxu0 0
    %6204 = vmatpush1.bf16.msra.mxu0 %v6169
    %6205 = vmatprep.subr.bf16.mxu0 0
    %6206 = vmatpush1.bf16.msra.mxu0 %v6170
    %6207 = vmatprep.subr.bf16.mxu0 0
    %6208 = vmatpush1.bf16.msra.mxu0 %v6171
    %6209 = vmatprep.subr.bf16.mxu0 0
    %6210 = vmatpush1.bf16.msra.mxu0 %v6172
    %6211 = vmatprep.subr.bf16.mxu0 0
    %6212 = vmatpush1.bf16.msra.mxu0 %v6173
    %6213 = vmatprep.subr.bf16.mxu0 0
    %6214 = vmatpush1.bf16.msra.mxu0 %v6174
    %6215 = vmatprep.subr.bf16.mxu0 0
    %6216 = vmatpush1.bf16.msra.mxu0 %v6175
    %6217 = vmatprep.subr.bf16.mxu0 0
    %6218 = vmatpush1.bf16.msra.mxu0 %v6176
    %6219 = vmatprep.subr.bf16.mxu0 0
    %6220 = vmatpush1.bf16.msra.mxu0 %v6177
    %6221 = vmatprep.subr.bf16.mxu0 0
    %6222 = vmatpush1.bf16.msra.mxu0 %v6178
    %6223 = vmatprep.subr.bf16.mxu0 0
    %6224 = vmatpush1.bf16.msra.mxu0 %v6179
    %6225 = vmatprep.subr.bf16.mxu0 0
    %6226 = vmatpush1.bf16.msra.mxu0 %v6180
    %6227 = vmatprep.subr.bf16.mxu0 0
    %6228 = vmatpush1.bf16.msra.mxu0 %v6181
    %6229 = vmatprep.subr.bf16.mxu0 0
    %6230 = vmatpush1.bf16.msra.mxu0 %v6182
    %6231 = vmatprep.mubr.bf16.mxu0 %v6063
    %6232 = vmatmul.mubr.bf16.gmra.mrb[0].mxu0 %v6062
    %v6233 = vpop.f32.mrb[0].mxu0
    %v6234 = vadd.f32 %v6101, %v6233
    %v6235 = vpop.f32.mrb[0].mxu0
    %v6236 = vpop.f32.mrb[0].mxu0
    %v6237 = vadd.f32 %v6101, %v6236
    %v6238 = vpop.f32.mrb[0].mxu0
    %6239 = vdwg.mxu0
    %v6240 = vpack.c.bf16 %v6237, %v6234
    %v6242 = vunpack.c.l.b16 %v6240
    %v6243 = vunpack.c.h.b16 %v6240
    %v6244 = vpack.c.b16 %v6242, %v6242
    %v6245 = vpack.c.b16 %v6243, %v6243
    %6248 = vst [vmem:[#allocation17] sm:$0xf] %v6244
    %6249 = vst [vmem:[#allocation17 + $0x4] sm:$0xf] %v6245
    // Predicated region
    $region74: #{tpu_custom_call.1} parent=1 // pred_check
      _
    $region75: #{tpu_custom_call.1} parent=1 // pred_check_branch
      %6251 = sbr.rel (0) target = $region77
    $region76: #{tpu_custom_call.1} parent=1 // pred_region
      %s6253 = ssub.s32 128, 128
      %6254 = vsyncadd [#allocation4], %s6253
      %s6255 = sshll.u32 [#allocation17], 4
      %s6256 = int_to_ptr.vmem [resolvable:$true] %s6255
      %6261 = dma.vmem_to_hbm [thread:$0]  %s6256, 128, %s9, [#allocation4], 64, 64, 4
    $region77: #{tpu_custom_call.1} parent=1 // pred_fallthru
      _
    // Predicated region
    $region78: #{tpu_custom_call.1} parent=1 // pred_check
      _
    $region79: #{tpu_custom_call.1} parent=1 // pred_check_branch
      %6263 = sbr.rel (0) target = $region81
    $region80: #{tpu_custom_call.1} parent=1 // pred_region
      %6264 = dma.done [#allocation4], 128
    $region81: #{tpu_custom_call.1} parent=1 // pred_fallthru
      _
    %6265 = vsyncpa [#allocation3], 1
    %6266 = vsyncpa [#allocation6], 1
    %6267 = vsyncpa [#allocation9], 1
    %6268 = vsyncpa [#allocation12], 1
    %6269 = vsyncpa [#allocation15], 1
    %6270 = vsyncpa [#allocation4], 1

</llo_original>
